<compile_context>
chip_gen: v7x
topology: tpu7x:2x2x1
jax: 0.10.0
libtpu: 0.0.40
codegen_flags: <defaults>
</compile_context>

<pallas_src>
import functools

import jax
import jax.numpy as jnp
import numpy as np
from jax.experimental import pallas as pl
from jax.experimental.pallas import tpu as pltpu


def _round_up(x: int, m: int) -> int:
    return ((x + m - 1) // m) * m


def _semi_hard_kernel(labels_smem_ref,   # (Bp,)   int32 SMEM (scalar prefetch)
                      labels_col_ref,    # (Bp,1)  int32  labels of candidates k
                      labels_row_ref,    # (1,TA)  int32  labels of tile anchors a
                      sq_col_ref,        # (Bp,1)  f32    ||e_k||^2
                      sq_row_ref,        # (1,TA)  f32    ||e_a||^2 (tile)
                      emb_ref,           # (Bp,Dp) f32    full batch, resident
                      loss_ref,          # (1,1,TA) f32 out: per-anchor summed loss
                      pos_ref,           # (1,1,TA) f32 out: per-anchor positive count
                      pd_ref,            # (Bp,TA) f32 scratch: pdist[k, a] (unmasked)
                      pdm_ref,           # (Bp,TA) f32 scratch: pdist masked with -inf
                      *, margin: float, n_real: int, tile_a: int, p_chunk: int):
    i = pl.program_id(0)                 # anchor tile index
    j = pl.program_id(1)                 # positive-chunk index
    n_pad = emb_ref.shape[0]
    a_start = pl.multiple_of(i * tile_a, tile_a)

    # global ids / validity (padding exclusion)
    k_ids = jax.lax.broadcasted_iota(jnp.int32, (n_pad, 1), 0)               # (Bp,1)
    a_ids = a_start + jax.lax.broadcasted_iota(jnp.int32, (1, tile_a), 1)    # (1,TA)
    valid_k = k_ids < n_real                                                 # (Bp,1) bool
    valid_a = a_ids < n_real                                                 # (1,TA) bool

    # ---- pairwise euclidean distances for this anchor tile (transposed):
    #      pd_t[k, a] = || e_k - e_{a_start + a} ||
    emb_full = emb_ref[...]                                                  # (Bp,Dp)
    emb_tile = emb_ref[pl.ds(a_start, tile_a), :]                            # (TA,Dp)
    dot_t = jax.lax.dot_general(emb_full, emb_tile,
                                (((1,), (1,)), ((), ())),
                                preferred_element_type=jnp.float32)          # (Bp,TA)
    dist = jnp.maximum(sq_col_ref[...] - 2.0 * dot_t + sq_row_ref[...], 0.0)
    # self-distances are exactly zero (matches the reference, where the diag of
    # dist cancels exactly); avoids fp-noise sqrt on the diagonal.
    dist = jnp.where(k_ids == a_ids, 0.0, dist)
    zero_f = (dist == 0.0).astype(jnp.float32)
    pd_t = (1.0 - zero_f) * jnp.sqrt(dist + zero_f * 1e-16)                  # (Bp,TA)
    pd_ref[...] = pd_t                                                       # unmasked

    # ---- fold adjacency + candidate-row validity into the scratch (sentinel -inf),
    #      so the mining loop needs only ONE big array and ONE compare per p.
    lab_a = labels_row_ref[...]                                              # (1,TA)
    lab_k = labels_col_ref[...]                                              # (Bp,1)
    adjn = jnp.logical_and(lab_k != lab_a, valid_k)                          # (Bp,TA)
    neg_inf = jnp.float32(-jnp.inf)
    pos_inf = jnp.float32(jnp.inf)
    pdm = jnp.where(adjn, pd_t, neg_inf)                                     # (Bp,TA)
    pdm_ref[...] = pdm

    # negatives_inside: masked max over different-label candidates; clamping at 0
    # reproduces the reference masked_maximum fill (axis_min of a pdist row is 0).
    neg_in = jnp.maximum(jnp.max(pdm, axis=0, keepdims=True), 0.0)           # (1,TA)

    p_base = j * p_chunk

    # ---- semi-hard mining: loop over positive index p, 2-D working set only.
    def body(p_local, carry):
        p = p_base + p_local
        lab_p = labels_smem_ref[p]                                           # scalar
        mask_pos = (jnp.logical_and(jnp.logical_and(lab_a == lab_p, a_ids != p),
                                    valid_a)).astype(jnp.float32)            # (1,TA)
        # skip the whole O(Bp*TA) body if this tile has no positive anchors for p
        run = jnp.logical_and(p < n_real, jnp.sum(mask_pos) > 0.0)

        def compute(c):
            loss_acc, pos_acc = c
            pd_ap = pd_ref[pl.ds(p, 1), :]                    # (1,TA) pdist[a, p]
            pdm_v = pdm_ref[...]                              # (Bp,TA) masked pdist
            # candidates: different label (masked rows are -inf -> never selected)
            # and strictly farther than the positive; +inf fill for the min.
            neg_out = jnp.min(jnp.where(pdm_v > pd_ap, pdm_v, pos_inf),
                              axis=0, keepdims=True)          # (1,TA)
            semi_hard = jnp.where(neg_out < pos_inf, neg_out, neg_in)
            loss_row = jnp.maximum((pd_ap - semi_hard + margin) * mask_pos, 0.0)
            return loss_acc + loss_row, pos_acc + mask_pos

        return jax.lax.cond(run, compute, lambda c: c, carry)

    zero_row = jnp.zeros((1, tile_a), jnp.float32)
    loss_acc, pos_acc = jax.lax.fori_loop(0, p_chunk, body,
                                          (zero_row, zero_row), unroll=4)

    loss_ref[0] = loss_acc
    pos_ref[0] = pos_acc


def batch_semi_hard_triplet_loss(embeddings: jax.Array, labels: jax.Array,
                                 margin: float = 5.0, tile_a: int = 128) -> jax.Array:
    """Pallas TPU implementation of BatchSemiHardTripletLoss.batch_semi_hard_triplet_loss.

    Note: tile_a=256 is a good choice on v6e/v7x when VMEM allows (wider MXU tiles).
    """
    B, D = embeddings.shape
    n_pad = _round_up(B, tile_a)      # lane-dense batch (anchors & candidates)
    d_pad = _round_up(D, 128)         # lane-dense contraction dim

    emb = jnp.zeros((n_pad, d_pad), jnp.float32).at[:B, :D].set(
        embeddings.astype(jnp.float32))
    labels_pad = jnp.full((n_pad,), -1, jnp.int32).at[:B].set(labels.astype(jnp.int32))
    labels_col = labels_pad.reshape(n_pad, 1)
    labels_row = labels_pad.reshape(1, n_pad)
    sq = jnp.sum(emb * emb, axis=1)   # squared norms computed directly (O(B*D))
    sq_col = sq.reshape(n_pad, 1)
    sq_row = sq.reshape(1, n_pad)

    num_tiles = n_pad // tile_a
    # With a single anchor tile, split the positive range over a second
    # "parallel" grid axis so both TensorCores are used on megacore parts.
    p_splits = 2 if num_tiles == 1 else 1
    p_chunk = -(-B // p_splits)       # ceil(B / p_splits)

    kernel = functools.partial(_semi_hard_kernel, margin=float(margin),
                               n_real=B, tile_a=tile_a, p_chunk=p_chunk)

    # Explicit VMEM budget from the real footprint: emb block (worst case double
    # buffered, in case of the Buffered(1) fallback), both pdist scratches,
    # small row/col blocks, plus working-set headroom.
    vmem_bytes = (2 * n_pad * d_pad * 4        # emb block
                  + 2 * n_pad * tile_a * 4     # pd + pdm scratches
                  + 8 * n_pad * 4              # label/sq column blocks
                  + (4 << 20))                 # rows, outputs, working set headroom
    vmem_bytes = min(int(vmem_bytes), 100 << 20)

    def build_and_run(single_buffer_consts: bool):
        def const_spec(shape):
            # Constant-index blocks never change across grid steps; single-buffer
            # them to halve their VMEM footprint (emb is the largest allocation).
            if single_buffer_consts:
                return pl.BlockSpec(shape, lambda i, j, lab: (0, 0),
                                    pipeline_mode=pl.Buffered(1))
            return pl.BlockSpec(shape, lambda i, j, lab: (0, 0))

        grid_spec = pltpu.PrefetchScalarGridSpec(
            num_scalar_prefetch=1,        # labels -> SMEM for per-p scalar reads
            grid=(num_tiles, p_splits),
            in_specs=[
                const_spec((n_pad, 1)),                               # labels_col
                pl.BlockSpec((1, tile_a), lambda i, j, lab: (0, i)),  # labels_row
                const_spec((n_pad, 1)),                               # sq_col
                pl.BlockSpec((1, tile_a), lambda i, j, lab: (0, i)),  # sq_row
                const_spec((n_pad, d_pad)),                           # emb (resident)
            ],
            out_specs=[
                pl.BlockSpec((1, 1, tile_a), lambda i, j, lab: (j, 0, i)),  # loss rows
                pl.BlockSpec((1, 1, tile_a), lambda i, j, lab: (j, 0, i)),  # pos rows
            ],
            scratch_shapes=[pltpu.VMEM((n_pad, tile_a), jnp.float32),   # pd (unmasked)
                            pltpu.VMEM((n_pad, tile_a), jnp.float32)],  # pd (masked)
        )
        return pl.pallas_call(
            kernel,
            out_shape=[jax.ShapeDtypeStruct((p_splits, 1, n_pad), jnp.float32),
                       jax.ShapeDtypeStruct((p_splits, 1, n_pad), jnp.float32)],
            grid_spec=grid_spec,
            compiler_params=pltpu.CompilerParams(
                dimension_semantics=("parallel", "parallel"),
                vmem_limit_bytes=vmem_bytes),
        )(labels_pad, labels_col, labels_row, sq_col, sq_row, emb)

    try:
        loss_rows, pos_rows = build_and_run(True)
    except Exception:
        # pipeline_mode=pl.Buffered(1) not accepted by this jax/libtpu version;
        # fall back to default double-buffered constant blocks.
        loss_rows, pos_rows = build_and_run(False)

    # O(B) final reduce + divide kept in plain JAX (megacore-safe).
    # NOTE: division is unguarded when there are no positive pairs — matches
    # the reference / torch behavior.
    return jnp.sum(loss_rows) / jnp.sum(pos_rows)


# ---------------- pure-JAX reference (mirrors the torch code) ----------------
def _reference_loss(embeddings, labels, margin=5.0):
    labels = labels.reshape(-1, 1)
    dot = embeddings @ embeddings.T
    sq = jnp.diag(dot)
    dist = sq[None, :] - 2.0 * dot + sq[:, None]
    dist = jnp.maximum(dist, 0.0)
    zmask = (dist == 0.0).astype(jnp.float32)
    pdist = (1.0 - zmask) * jnp.sqrt(dist + zmask * 1e-16)

    adjacency = labels == labels.T
    adjacency_not = ~adjacency
    B = labels.size
    pdist_tile = jnp.tile(pdist, (B, 1))
    mask = jnp.tile(adjacency_not, (B, 1)) & (pdist_tile > pdist.T.reshape(-1, 1))
    mask_f = mask.astype(jnp.float32)

    def masked_minimum(data, m):
        ax_max = data.max(1, keepdims=True)
        return ((data - ax_max) * m).min(1, keepdims=True) + ax_max

    def masked_maximum(data, m):
        ax_min = data.min(1, keepdims=True)
        return ((data - ax_min) * m).max(1, keepdims=True) + ax_min

    mask_final = (jnp.sum(mask_f, 1, keepdims=True) > 0.0).reshape(B, B).T
    neg_out = masked_minimum(pdist_tile, mask_f).reshape(B, B).T
    neg_in = jnp.tile(masked_maximum(pdist, adjacency_not.astype(jnp.float32)), (1, B))
    semi_hard = jnp.where(mask_final, neg_out, neg_in)
    loss_mat = pdist - semi_hard + margin
    mask_pos = adjacency.astype(jnp.float32) - jnp.eye(B)
    return jnp.sum(jnp.maximum(loss_mat * mask_pos, 0.0)) / jnp.sum(mask_pos)


if __name__ == "__main__":
    MARGIN = 5.0
    key = jax.random.PRNGKey(0)
    k1, k2 = jax.random.split(key)

    # Case 1: small single-tile batch (exercises the 2-way positive-chunk grid axis).
    B, D = 8, 32
    embeddings = jax.random.normal(k1, (B, D), dtype=jnp.float32)
    labels = jnp.array([0, 0, 1, 1, 2, 2, 3, 3], dtype=jnp.int32)  # >=2 per class
    loss = jax.block_until_ready(batch_semi_hard_triplet_loss(embeddings, labels, MARGIN))
    ref = jax.block_until_ready(_reference_loss(embeddings, labels, MARGIN))
    assert np.allclose(np.asarray(loss), np.asarray(ref), rtol=1e-5, atol=1e-5), (loss, ref)

    # Case 2: multi-tile batch with a partially padded last tile (exercises the
    # tile loop + per-p cond guard). Looser tolerance: the strict-inequality
    # semi-hard candidate selection can legitimately flip on floating-point
    # near-ties between the kernel and the reference at larger batch sizes.
    B2, D2 = 140, 16
    emb2 = jax.random.normal(k2, (B2, D2), dtype=jnp.float32)
    labels2 = jnp.arange(B2, dtype=jnp.int32) % 7                   # 20 per class
    loss2 = jax.block_until_ready(batch_semi_hard_triplet_loss(emb2, labels2, MARGIN))
    ref2 = jax.block_until_ready(_reference_loss(emb2, labels2, MARGIN))
    assert np.allclose(np.asarray(loss2), np.asarray(ref2), rtol=1e-3, atol=1e-3), (loss2, ref2)

    print("KERNEL_OK")
</pallas_src>

<mosaic_0001>
module attributes {stable_mosaic.version = 11 : i64} {
  func.func @_semi_hard_kernel(%arg0: i32, %arg1: i32, %arg2: memref<128xi32, #tpu.memory_space<smem>>, %arg3: memref<128x1xi32, #tpu.memory_space<vmem>>, %arg4: memref<1x128xi32, #tpu.memory_space<vmem>>, %arg5: memref<128x1xf32, #tpu.memory_space<vmem>>, %arg6: memref<1x128xf32, #tpu.memory_space<vmem>>, %arg7: memref<128x128xf32, #tpu.memory_space<vmem>>, %arg8: memref<1x1x128xf32, #tpu.memory_space<vmem>>, %arg9: memref<1x1x128xf32, #tpu.memory_space<vmem>>, %arg10: memref<128x128xf32, #tpu.memory_space<vmem>>, %arg11: memref<128x128xf32, #tpu.memory_space<vmem>>) attributes {dimension_semantics = [#tpu.dimension_semantics<parallel>, #tpu.dimension_semantics<parallel>], iteration_bounds = array<i64: 1, 2>, scalar_prefetch = 1 : i64, scratch_operands = 2 : i64, tpu.core_type = #tpu.core_type<tc>, window_params = [{pipeline_mode = #tpu.pipeline_mode<synchronous>, transform_indices = @transform_0, window_bounds = array<i64: 128, 1>}, {transform_indices = @transform_1, window_bounds = array<i64: 1, 128>}, {pipeline_mode = #tpu.pipeline_mode<synchronous>, transform_indices = @transform_2, window_bounds = array<i64: 128, 1>}, {transform_indices = @transform_3, window_bounds = array<i64: 1, 128>}, {pipeline_mode = #tpu.pipeline_mode<synchronous>, transform_indices = @transform_4, window_bounds = array<i64: 128, 128>}, {transform_indices = @transform_5, window_bounds = array<i64: 1, 1, 128>}, {transform_indices = @transform_6, window_bounds = array<i64: 1, 1, 128>}]} {
    %c128_i32 = arith.constant 128 : i32
    %0 = arith.muli %arg0, %c128_i32 : i32
    %1 = tpu.assume_multiple %0, 128 : i32
    %2 = tpu.iota {dimensions = array<i32: 0>} : vector<128x1xi32>
    %3 = tpu.iota {dimensions = array<i32: 1>} : vector<1x128xi32>
    %4 = vector.broadcast %1 : i32 to vector<1x128xi32>
    %5 = arith.addi %4, %3 : vector<1x128xi32>
    %c8_i32 = arith.constant 8 : i32
    %6 = vector.broadcast %c8_i32 : i32 to vector<128x1xi32>
    %7 = arith.cmpi slt, %2, %6 : vector<128x1xi32>
    %c8_i32_0 = arith.constant 8 : i32
    %8 = vector.broadcast %c8_i32_0 : i32 to vector<1x128xi32>
    %9 = arith.cmpi slt, %5, %8 : vector<1x128xi32>
    %c0 = arith.constant 0 : index
    %c0_1 = arith.constant 0 : index
    %10 = vector.load %arg7[%c0, %c0_1] : memref<128x128xf32, #tpu.memory_space<vmem>>, vector<128x128xf32>
    %11 = arith.index_cast %1 : i32 to index
    %c0_2 = arith.constant 0 : index
    %12 = vector.load %arg7[%11, %c0_2] : memref<128x128xf32, #tpu.memory_space<vmem>>, vector<128x128xf32>
    %cst = arith.constant dense<0.000000e+00> : vector<128x128xf32>
    %13 = tpu.matmul %10, %12, %cst {dimension_numbers = #tpu.dot_dimension_numbers<[1], [1], [0], [0], [0, 0, 1, 0], [], []>} : vector<128x128xf32>, vector<128x128xf32>, vector<128x128xf32> -> vector<128x128xf32>
    %c0_3 = arith.constant 0 : index
    %c0_4 = arith.constant 0 : index
    %14 = vector.load %arg5[%c0_3, %c0_4] : memref<128x1xf32, #tpu.memory_space<vmem>>, vector<128x1xf32>
    %cst_5 = arith.constant 2.000000e+00 : f32
    %15 = vector.broadcast %cst_5 : f32 to vector<128x128xf32>
    %16 = arith.mulf %15, %13 : vector<128x128xf32>
    %17 = vector.broadcast %14 : vector<128x1xf32> to vector<128x128xf32>
    %18 = arith.subf %17, %16 : vector<128x128xf32>
    %c0_6 = arith.constant 0 : index
    %c0_7 = arith.constant 0 : index
    %19 = vector.load %arg6[%c0_6, %c0_7] : memref<1x128xf32, #tpu.memory_space<vmem>>, vector<1x128xf32>
    %20 = vector.broadcast %19 : vector<1x128xf32> to vector<128x128xf32>
    %21 = arith.addf %18, %20 : vector<128x128xf32>
    %cst_8 = arith.constant 0.000000e+00 : f32
    %22 = vector.broadcast %cst_8 : f32 to vector<128x128xf32>
    %23 = arith.maximumf %21, %22 : vector<128x128xf32>
    %24 = vector.broadcast %2 : vector<128x1xi32> to vector<128x128xi32>
    %25 = vector.broadcast %5 : vector<1x128xi32> to vector<128x128xi32>
    %26 = arith.cmpi eq, %24, %25 : vector<128x128xi32>
    %cst_9 = arith.constant 0.000000e+00 : f32
    %27 = vector.broadcast %cst_9 : f32 to vector<128x128xf32>
    %28 = arith.select %26, %27, %23 : vector<128x128xi1>, vector<128x128xf32>
    %cst_10 = arith.constant 0.000000e+00 : f32
    %29 = vector.broadcast %cst_10 : f32 to vector<128x128xf32>
    %30 = arith.cmpf oeq, %28, %29 : vector<128x128xf32>
    %31 = arith.extui %30 : vector<128x128xi1> to vector<128x128xi32>
    %32 = arith.sitofp %31 : vector<128x128xi32> to vector<128x128xf32>
    %cst_11 = arith.constant 1.000000e+00 : f32
    %33 = vector.broadcast %cst_11 : f32 to vector<128x128xf32>
    %34 = arith.subf %33, %32 : vector<128x128xf32>
    %cst_12 = arith.constant 1.000000e-16 : f32
    %35 = vector.broadcast %cst_12 : f32 to vector<128x128xf32>
    %36 = arith.mulf %32, %35 : vector<128x128xf32>
    %37 = arith.addf %28, %36 : vector<128x128xf32>
    %38 = math.sqrt %37 : vector<128x128xf32>
    %39 = arith.mulf %34, %38 : vector<128x128xf32>
    %c0_13 = arith.constant 0 : index
    %c0_14 = arith.constant 0 : index
    %40 = vector.load %arg10[%c0_13, %c0_14] : memref<128x128xf32, #tpu.memory_space<vmem>>, vector<128x128xf32>
    tpu.vector_store %arg10[%c0_13, %c0_14], %39 {strides = array<i32>} : memref<128x128xf32, #tpu.memory_space<vmem>>, vector<128x128xf32>,
    %c0_15 = arith.constant 0 : index
    %c0_16 = arith.constant 0 : index
    %41 = vector.load %arg4[%c0_15, %c0_16] : memref<1x128xi32, #tpu.memory_space<vmem>>, vector<1x128xi32>
    %c0_17 = arith.constant 0 : index
    %c0_18 = arith.constant 0 : index
    %42 = vector.load %arg3[%c0_17, %c0_18] : memref<128x1xi32, #tpu.memory_space<vmem>>, vector<128x1xi32>
    %43 = vector.broadcast %42 : vector<128x1xi32> to vector<128x128xi32>
    %44 = vector.broadcast %41 : vector<1x128xi32> to vector<128x128xi32>
    %45 = arith.cmpi ne, %43, %44 : vector<128x128xi32>
    %46 = vector.broadcast %7 : vector<128x1xi1> to vector<128x128xi1>
    %47 = arith.andi %45, %46 : vector<128x128xi1>
    %cst_19 = arith.constant 0xFF800000 : f32
    %48 = vector.broadcast %cst_19 : f32 to vector<128x128xf32>
    %49 = arith.select %47, %39, %48 : vector<128x128xi1>, vector<128x128xf32>
    %c0_20 = arith.constant 0 : index
    %c0_21 = arith.constant 0 : index
    %50 = vector.load %arg11[%c0_20, %c0_21] : memref<128x128xf32, #tpu.memory_space<vmem>>, vector<128x128xf32>
    tpu.vector_store %arg11[%c0_20, %c0_21], %49 {strides = array<i32>} : memref<128x128xf32, #tpu.memory_space<vmem>>, vector<128x128xf32>,
    %cst_22 = arith.constant dense<0xFF800000> : vector<128xf32>
    %51 = vector.multi_reduction <maximumf>, %49, %cst_22 [0] : vector<128x128xf32> to vector<128xf32>
    %52 = vector.shape_cast %51 : vector<128xf32> to vector<1x128xf32>
    %cst_23 = arith.constant 0.000000e+00 : f32
    %53 = vector.broadcast %cst_23 : f32 to vector<1x128xf32>
    %54 = arith.maximumf %52, %53 : vector<1x128xf32>
    %c4_i32 = arith.constant 4 : i32
    %55 = arith.muli %arg1, %c4_i32 : i32
    %cst_24 = arith.constant 0.000000e+00 : f32
    %56 = vector.broadcast %cst_24 : f32 to vector<1x128xf32>
    %cst_25 = arith.constant 0x7F800000 : f32
    %c0_i32 = arith.constant 0 : i32
    %57 = arith.addi %55, %c0_i32 : i32
    %58 = arith.index_cast %57 : i32 to index
    %59 = memref.load %arg2[%58] : memref<128xi32, #tpu.memory_space<smem>>
    %60 = vector.broadcast %59 : i32 to vector<1x128xi32>
    %61 = arith.cmpi eq, %41, %60 : vector<1x128xi32>
    %62 = vector.broadcast %57 : i32 to vector<1x128xi32>
    %63 = arith.cmpi ne, %5, %62 : vector<1x128xi32>
    %64 = arith.andi %61, %63 : vector<1x128xi1>
    %65 = arith.andi %64, %9 : vector<1x128xi1>
    %66 = arith.extui %65 : vector<1x128xi1> to vector<1x128xi32>
    %67 = arith.sitofp %66 : vector<1x128xi32> to vector<1x128xf32>
    %c8_i32_26 = arith.constant 8 : i32
    %68 = arith.cmpi slt, %57, %c8_i32_26 : i32
    %69 = vector.shape_cast %67 : vector<1x128xf32> to vector<1x1x128xf32>
    %cst_27 = arith.constant dense<0.000000e+00> : vector<1xf32>
    %70 = vector.multi_reduction <add>, %69, %cst_27 [1, 2] : vector<1x1x128xf32> to vector<1xf32>
    %71 = vector.shape_cast %70 : vector<1xf32> to vector<1x1x1xf32>
    %72 = vector.extract %71[0, 0, 0] : f32 from vector<1x1x1xf32>
    %cst_28 = arith.constant 0.000000e+00 : f32
    %73 = arith.cmpf ogt, %72, %cst_28 : f32
    %74 = arith.andi %68, %73 : i1
    %75 = arith.extui %74 : i1 to i32
    %c0_i32_29 = arith.constant 0 : i32
    %76 = arith.cmpi ne, %75, %c0_i32_29 : i32
    %77:2 = scf.if %76 -> (vector<1x128xf32>, vector<1x128xf32>) {
      %147 = arith.index_cast %57 : i32 to index
      %c0_49 = arith.constant 0 : index
      %148 = vector.load %arg10[%147, %c0_49] : memref<128x128xf32, #tpu.memory_space<vmem>>, vector<1x128xf32>
      %c0_50 = arith.constant 0 : index
      %c0_51 = arith.constant 0 : index
      %149 = vector.load %arg11[%c0_50, %c0_51] : memref<128x128xf32, #tpu.memory_space<vmem>>, vector<128x128xf32>
      %150 = vector.broadcast %148 : vector<1x128xf32> to vector<128x128xf32>
      %151 = arith.cmpf ogt, %149, %150 : vector<128x128xf32>
      %152 = vector.broadcast %cst_25 : f32 to vector<128x128xf32>
      %153 = arith.select %151, %149, %152 : vector<128x128xi1>, vector<128x128xf32>
      %cst_52 = arith.constant dense<0x7F800000> : vector<128xf32>
      %154 = vector.multi_reduction <minimumf>, %153, %cst_52 [0] : vector<128x128xf32> to vector<128xf32>
      %155 = vector.shape_cast %154 : vector<128xf32> to vector<1x128xf32>
      %156 = vector.broadcast %cst_25 : f32 to vector<1x128xf32>
      %157 = arith.cmpf olt, %155, %156 : vector<1x128xf32>
      %158 = arith.select %157, %155, %54 : vector<1x128xi1>, vector<1x128xf32>
      %159 = arith.subf %148, %158 : vector<1x128xf32>
      %cst_53 = arith.constant 5.000000e+00 : f32
      %160 = vector.broadcast %cst_53 : f32 to vector<1x128xf32>
      %161 = arith.addf %159, %160 : vector<1x128xf32>
      %162 = arith.mulf %161, %67 : vector<1x128xf32>
      %cst_54 = arith.constant 0.000000e+00 : f32
      %163 = vector.broadcast %cst_54 : f32 to vector<1x128xf32>
      %164 = arith.maximumf %162, %163 : vector<1x128xf32>
      %165 = arith.addf %56, %164 : vector<1x128xf32>
      %166 = arith.addf %56, %67 : vector<1x128xf32>
      scf.yield %165, %166 : vector<1x128xf32>, vector<1x128xf32>
    } else {
      scf.yield %56, %56 : vector<1x128xf32>, vector<1x128xf32>
    }
    %c1_i32 = arith.constant 1 : i32
    %78 = arith.addi %55, %c1_i32 : i32
    %79 = arith.index_cast %78 : i32 to index
    %80 = memref.load %arg2[%79] : memref<128xi32, #tpu.memory_space<smem>>
    %81 = vector.broadcast %80 : i32 to vector<1x128xi32>
    %82 = arith.cmpi eq, %41, %81 : vector<1x128xi32>
    %83 = vector.broadcast %78 : i32 to vector<1x128xi32>
    %84 = arith.cmpi ne, %5, %83 : vector<1x128xi32>
    %85 = arith.andi %82, %84 : vector<1x128xi1>
    %86 = arith.andi %85, %9 : vector<1x128xi1>
    %87 = arith.extui %86 : vector<1x128xi1> to vector<1x128xi32>
    %88 = arith.sitofp %87 : vector<1x128xi32> to vector<1x128xf32>
    %c8_i32_30 = arith.constant 8 : i32
    %89 = arith.cmpi slt, %78, %c8_i32_30 : i32
    %90 = vector.shape_cast %88 : vector<1x128xf32> to vector<1x1x128xf32>
    %cst_31 = arith.constant dense<0.000000e+00> : vector<1xf32>
    %91 = vector.multi_reduction <add>, %90, %cst_31 [1, 2] : vector<1x1x128xf32> to vector<1xf32>
    %92 = vector.shape_cast %91 : vector<1xf32> to vector<1x1x1xf32>
    %93 = vector.extract %92[0, 0, 0] : f32 from vector<1x1x1xf32>
    %cst_32 = arith.constant 0.000000e+00 : f32
    %94 = arith.cmpf ogt, %93, %cst_32 : f32
    %95 = arith.andi %89, %94 : i1
    %96 = arith.extui %95 : i1 to i32
    %c0_i32_33 = arith.constant 0 : i32
    %97 = arith.cmpi ne, %96, %c0_i32_33 : i32
    %98:2 = scf.if %97 -> (vector<1x128xf32>, vector<1x128xf32>) {
      %147 = arith.index_cast %78 : i32 to index
      %c0_49 = arith.constant 0 : index
      %148 = vector.load %arg10[%147, %c0_49] : memref<128x128xf32, #tpu.memory_space<vmem>>, vector<1x128xf32>
      %c0_50 = arith.constant 0 : index
      %c0_51 = arith.constant 0 : index
      %149 = vector.load %arg11[%c0_50, %c0_51] : memref<128x128xf32, #tpu.memory_space<vmem>>, vector<128x128xf32>
      %150 = vector.broadcast %148 : vector<1x128xf32> to vector<128x128xf32>
      %151 = arith.cmpf ogt, %149, %150 : vector<128x128xf32>
      %152 = vector.broadcast %cst_25 : f32 to vector<128x128xf32>
      %153 = arith.select %151, %149, %152 : vector<128x128xi1>, vector<128x128xf32>
      %cst_52 = arith.constant dense<0x7F800000> : vector<128xf32>
      %154 = vector.multi_reduction <minimumf>, %153, %cst_52 [0] : vector<128x128xf32> to vector<128xf32>
      %155 = vector.shape_cast %154 : vector<128xf32> to vector<1x128xf32>
      %156 = vector.broadcast %cst_25 : f32 to vector<1x128xf32>
      %157 = arith.cmpf olt, %155, %156 : vector<1x128xf32>
      %158 = arith.select %157, %155, %54 : vector<1x128xi1>, vector<1x128xf32>
      %159 = arith.subf %148, %158 : vector<1x128xf32>
      %cst_53 = arith.constant 5.000000e+00 : f32
      %160 = vector.broadcast %cst_53 : f32 to vector<1x128xf32>
      %161 = arith.addf %159, %160 : vector<1x128xf32>
      %162 = arith.mulf %161, %88 : vector<1x128xf32>
      %cst_54 = arith.constant 0.000000e+00 : f32
      %163 = vector.broadcast %cst_54 : f32 to vector<1x128xf32>
      %164 = arith.maximumf %162, %163 : vector<1x128xf32>
      %165 = arith.addf %77#0, %164 : vector<1x128xf32>
      %166 = arith.addf %77#1, %88 : vector<1x128xf32>
      scf.yield %165, %166 : vector<1x128xf32>, vector<1x128xf32>
    } else {
      scf.yield %77#0, %77#1 : vector<1x128xf32>, vector<1x128xf32>
    }
    %c2_i32 = arith.constant 2 : i32
    %99 = arith.addi %55, %c2_i32 : i32
    %100 = arith.index_cast %99 : i32 to index
    %101 = memref.load %arg2[%100] : memref<128xi32, #tpu.memory_space<smem>>
    %102 = vector.broadcast %101 : i32 to vector<1x128xi32>
    %103 = arith.cmpi eq, %41, %102 : vector<1x128xi32>
    %104 = vector.broadcast %99 : i32 to vector<1x128xi32>
    %105 = arith.cmpi ne, %5, %104 : vector<1x128xi32>
    %106 = arith.andi %103, %105 : vector<1x128xi1>
    %107 = arith.andi %106, %9 : vector<1x128xi1>
    %108 = arith.extui %107 : vector<1x128xi1> to vector<1x128xi32>
    %109 = arith.sitofp %108 : vector<1x128xi32> to vector<1x128xf32>
    %c8_i32_34 = arith.constant 8 : i32
    %110 = arith.cmpi slt, %99, %c8_i32_34 : i32
    %111 = vector.shape_cast %109 : vector<1x128xf32> to vector<1x1x128xf32>
    %cst_35 = arith.constant dense<0.000000e+00> : vector<1xf32>
    %112 = vector.multi_reduction <add>, %111, %cst_35 [1, 2] : vector<1x1x128xf32> to vector<1xf32>
    %113 = vector.shape_cast %112 : vector<1xf32> to vector<1x1x1xf32>
    %114 = vector.extract %113[0, 0, 0] : f32 from vector<1x1x1xf32>
    %cst_36 = arith.constant 0.000000e+00 : f32
    %115 = arith.cmpf ogt, %114, %cst_36 : f32
    %116 = arith.andi %110, %115 : i1
    %117 = arith.extui %116 : i1 to i32
    %c0_i32_37 = arith.constant 0 : i32
    %118 = arith.cmpi ne, %117, %c0_i32_37 : i32
    %119:2 = scf.if %118 -> (vector<1x128xf32>, vector<1x128xf32>) {
      %147 = arith.index_cast %99 : i32 to index
      %c0_49 = arith.constant 0 : index
      %148 = vector.load %arg10[%147, %c0_49] : memref<128x128xf32, #tpu.memory_space<vmem>>, vector<1x128xf32>
      %c0_50 = arith.constant 0 : index
      %c0_51 = arith.constant 0 : index
      %149 = vector.load %arg11[%c0_50, %c0_51] : memref<128x128xf32, #tpu.memory_space<vmem>>, vector<128x128xf32>
      %150 = vector.broadcast %148 : vector<1x128xf32> to vector<128x128xf32>
      %151 = arith.cmpf ogt, %149, %150 : vector<128x128xf32>
      %152 = vector.broadcast %cst_25 : f32 to vector<128x128xf32>
      %153 = arith.select %151, %149, %152 : vector<128x128xi1>, vector<128x128xf32>
      %cst_52 = arith.constant dense<0x7F800000> : vector<128xf32>
      %154 = vector.multi_reduction <minimumf>, %153, %cst_52 [0] : vector<128x128xf32> to vector<128xf32>
      %155 = vector.shape_cast %154 : vector<128xf32> to vector<1x128xf32>
      %156 = vector.broadcast %cst_25 : f32 to vector<1x128xf32>
      %157 = arith.cmpf olt, %155, %156 : vector<1x128xf32>
      %158 = arith.select %157, %155, %54 : vector<1x128xi1>, vector<1x128xf32>
      %159 = arith.subf %148, %158 : vector<1x128xf32>
      %cst_53 = arith.constant 5.000000e+00 : f32
      %160 = vector.broadcast %cst_53 : f32 to vector<1x128xf32>
      %161 = arith.addf %159, %160 : vector<1x128xf32>
      %162 = arith.mulf %161, %109 : vector<1x128xf32>
      %cst_54 = arith.constant 0.000000e+00 : f32
      %163 = vector.broadcast %cst_54 : f32 to vector<1x128xf32>
      %164 = arith.maximumf %162, %163 : vector<1x128xf32>
      %165 = arith.addf %98#0, %164 : vector<1x128xf32>
      %166 = arith.addf %98#1, %109 : vector<1x128xf32>
      scf.yield %165, %166 : vector<1x128xf32>, vector<1x128xf32>
    } else {
      scf.yield %98#0, %98#1 : vector<1x128xf32>, vector<1x128xf32>
    }
    %c3_i32 = arith.constant 3 : i32
    %120 = arith.addi %55, %c3_i32 : i32
    %121 = arith.index_cast %120 : i32 to index
    %122 = memref.load %arg2[%121] : memref<128xi32, #tpu.memory_space<smem>>
    %123 = vector.broadcast %122 : i32 to vector<1x128xi32>
    %124 = arith.cmpi eq, %41, %123 : vector<1x128xi32>
    %125 = vector.broadcast %120 : i32 to vector<1x128xi32>
    %126 = arith.cmpi ne, %5, %125 : vector<1x128xi32>
    %127 = arith.andi %124, %126 : vector<1x128xi1>
    %128 = arith.andi %127, %9 : vector<1x128xi1>
    %129 = arith.extui %128 : vector<1x128xi1> to vector<1x128xi32>
    %130 = arith.sitofp %129 : vector<1x128xi32> to vector<1x128xf32>
    %c8_i32_38 = arith.constant 8 : i32
    %131 = arith.cmpi slt, %120, %c8_i32_38 : i32
    %132 = vector.shape_cast %130 : vector<1x128xf32> to vector<1x1x128xf32>
    %cst_39 = arith.constant dense<0.000000e+00> : vector<1xf32>
    %133 = vector.multi_reduction <add>, %132, %cst_39 [1, 2] : vector<1x1x128xf32> to vector<1xf32>
    %134 = vector.shape_cast %133 : vector<1xf32> to vector<1x1x1xf32>
    %135 = vector.extract %134[0, 0, 0] : f32 from vector<1x1x1xf32>
    %cst_40 = arith.constant 0.000000e+00 : f32
    %136 = arith.cmpf ogt, %135, %cst_40 : f32
    %137 = arith.andi %131, %136 : i1
    %138 = arith.extui %137 : i1 to i32
    %c0_i32_41 = arith.constant 0 : i32
    %139 = arith.cmpi ne, %138, %c0_i32_41 : i32
    %140:2 = scf.if %139 -> (vector<1x128xf32>, vector<1x128xf32>) {
      %147 = arith.index_cast %120 : i32 to index
      %c0_49 = arith.constant 0 : index
      %148 = vector.load %arg10[%147, %c0_49] : memref<128x128xf32, #tpu.memory_space<vmem>>, vector<1x128xf32>
      %c0_50 = arith.constant 0 : index
      %c0_51 = arith.constant 0 : index
      %149 = vector.load %arg11[%c0_50, %c0_51] : memref<128x128xf32, #tpu.memory_space<vmem>>, vector<128x128xf32>
      %150 = vector.broadcast %148 : vector<1x128xf32> to vector<128x128xf32>
      %151 = arith.cmpf ogt, %149, %150 : vector<128x128xf32>
      %152 = vector.broadcast %cst_25 : f32 to vector<128x128xf32>
      %153 = arith.select %151, %149, %152 : vector<128x128xi1>, vector<128x128xf32>
      %cst_52 = arith.constant dense<0x7F800000> : vector<128xf32>
      %154 = vector.multi_reduction <minimumf>, %153, %cst_52 [0] : vector<128x128xf32> to vector<128xf32>
      %155 = vector.shape_cast %154 : vector<128xf32> to vector<1x128xf32>
      %156 = vector.broadcast %cst_25 : f32 to vector<1x128xf32>
      %157 = arith.cmpf olt, %155, %156 : vector<1x128xf32>
      %158 = arith.select %157, %155, %54 : vector<1x128xi1>, vector<1x128xf32>
      %159 = arith.subf %148, %158 : vector<1x128xf32>
      %cst_53 = arith.constant 5.000000e+00 : f32
      %160 = vector.broadcast %cst_53 : f32 to vector<1x128xf32>
      %161 = arith.addf %159, %160 : vector<1x128xf32>
      %162 = arith.mulf %161, %130 : vector<1x128xf32>
      %cst_54 = arith.constant 0.000000e+00 : f32
      %163 = vector.broadcast %cst_54 : f32 to vector<1x128xf32>
      %164 = arith.maximumf %162, %163 : vector<1x128xf32>
      %165 = arith.addf %119#0, %164 : vector<1x128xf32>
      %166 = arith.addf %119#1, %130 : vector<1x128xf32>
      scf.yield %165, %166 : vector<1x128xf32>, vector<1x128xf32>
    } else {
      scf.yield %119#0, %119#1 : vector<1x128xf32>, vector<1x128xf32>
    }
    %c4_i32_42 = arith.constant 4 : i32
    %c0_43 = arith.constant 0 : index
    %c0_44 = arith.constant 0 : index
    %c0_45 = arith.constant 0 : index
    %141 = vector.load %arg8[%c0_43, %c0_44, %c0_45] : memref<1x1x128xf32, #tpu.memory_space<vmem>>, vector<1x1x128xf32>
    %142 = vector.shape_cast %141 : vector<1x1x128xf32> to vector<1x128xf32>
    %143 = vector.shape_cast %140#0 : vector<1x128xf32> to vector<1x1x128xf32>
    tpu.vector_store %arg8[%c0_43, %c0_44, %c0_45], %143 {strides = array<i32>} : memref<1x1x128xf32, #tpu.memory_space<vmem>>, vector<1x1x128xf32>,
    %c0_46 = arith.constant 0 : index
    %c0_47 = arith.constant 0 : index
    %c0_48 = arith.constant 0 : index
    %144 = vector.load %arg9[%c0_46, %c0_47, %c0_48] : memref<1x1x128xf32, #tpu.memory_space<vmem>>, vector<1x1x128xf32>
    %145 = vector.shape_cast %144 : vector<1x1x128xf32> to vector<1x128xf32>
    %146 = vector.shape_cast %140#1 : vector<1x128xf32> to vector<1x1x128xf32>
    tpu.vector_store %arg9[%c0_46, %c0_47, %c0_48], %146 {strides = array<i32>} : memref<1x1x128xf32, #tpu.memory_space<vmem>>, vector<1x1x128xf32>,
    return
  }
  func.func @transform_0(%arg0: i32, %arg1: i32, %arg2: memref<128xi32, #tpu.memory_space<smem>>) -> (i32, i32) {
    %c0_i32 = arith.constant 0 : i32
    %c0_i32_0 = arith.constant 0 : i32
    %c0_i32_1 = arith.constant 0 : i32
    return %c0_i32, %c0_i32_0 : i32, i32
  }
  func.func @transform_1(%arg0: i32, %arg1: i32, %arg2: memref<128xi32, #tpu.memory_space<smem>>) -> (i32, i32) {
    %c0_i32 = arith.constant 0 : i32
    %c0_i32_0 = arith.constant 0 : i32
    return %c0_i32, %arg0 : i32, i32
  }
  func.func @transform_2(%arg0: i32, %arg1: i32, %arg2: memref<128xi32, #tpu.memory_space<smem>>) -> (i32, i32) {
    %c0_i32 = arith.constant 0 : i32
    %c0_i32_0 = arith.constant 0 : i32
    %c0_i32_1 = arith.constant 0 : i32
    return %c0_i32, %c0_i32_0 : i32, i32
  }
  func.func @transform_3(%arg0: i32, %arg1: i32, %arg2: memref<128xi32, #tpu.memory_space<smem>>) -> (i32, i32) {
    %c0_i32 = arith.constant 0 : i32
    %c0_i32_0 = arith.constant 0 : i32
    return %c0_i32, %arg0 : i32, i32
  }
  func.func @transform_4(%arg0: i32, %arg1: i32, %arg2: memref<128xi32, #tpu.memory_space<smem>>) -> (i32, i32) {
    %c0_i32 = arith.constant 0 : i32
    %c0_i32_0 = arith.constant 0 : i32
    %c0_i32_1 = arith.constant 0 : i32
    return %c0_i32, %c0_i32_0 : i32, i32
  }
  func.func @transform_5(%arg0: i32, %arg1: i32, %arg2: memref<128xi32, #tpu.memory_space<smem>>) -> (i32, i32, i32) {
    %c0_i32 = arith.constant 0 : i32
    %c0_i32_0 = arith.constant 0 : i32
    return %arg1, %c0_i32, %arg0 : i32, i32, i32
  }
  func.func @transform_6(%arg0: i32, %arg1: i32, %arg2: memref<128xi32, #tpu.memory_space<smem>>) -> (i32, i32, i32) {
    %c0_i32 = arith.constant 0 : i32
    %c0_i32_0 = arith.constant 0 : i32
    return %arg1, %c0_i32, %arg0 : i32, i32, i32
  }
}

module attributes {stable_mosaic.version = 11 : i64} {
  func.func @_semi_hard_kernel(%arg0: i32, %arg1: i32, %arg2: memref<128xi32, #tpu.memory_space<smem>>, %arg3: memref<128x1xi32, #tpu.memory_space<vmem>>, %arg4: memref<1x128xi32, #tpu.memory_space<vmem>>, %arg5: memref<128x1xf32, #tpu.memory_space<vmem>>, %arg6: memref<1x128xf32, #tpu.memory_space<vmem>>, %arg7: memref<128x128xf32, #tpu.memory_space<vmem>>, %arg8: memref<1x1x128xf32, #tpu.memory_space<vmem>>, %arg9: memref<1x1x128xf32, #tpu.memory_space<vmem>>, %arg10: memref<128x128xf32, #tpu.memory_space<vmem>>, %arg11: memref<128x128xf32, #tpu.memory_space<vmem>>) attributes {dimension_semantics = [#tpu.dimension_semantics<parallel>, #tpu.dimension_semantics<parallel>], iteration_bounds = array<i64: 1, 2>, scalar_prefetch = 1 : i64, scratch_operands = 2 : i64, tpu.core_type = #tpu.core_type<tc>, window_params = [{pipeline_mode = #tpu.pipeline_mode<synchronous>, transform_indices = @transform_0, window_bounds = array<i64: 128, 1>}, {transform_indices = @transform_1, window_bounds = array<i64: 1, 128>}, {pipeline_mode = #tpu.pipeline_mode<synchronous>, transform_indices = @transform_2, window_bounds = array<i64: 128, 1>}, {transform_indices = @transform_3, window_bounds = array<i64: 1, 128>}, {pipeline_mode = #tpu.pipeline_mode<synchronous>, transform_indices = @transform_4, window_bounds = array<i64: 128, 128>}, {transform_indices = @transform_5, window_bounds = array<i64: 1, 1, 128>}, {transform_indices = @transform_6, window_bounds = array<i64: 1, 1, 128>}]} {
    %c128_i32 = arith.constant 128 : i32
    %0 = arith.muli %arg0, %c128_i32 : i32
    %1 = tpu.assume_multiple %0, 128 : i32
    %2 = tpu.iota {dimensions = array<i32: 0>} : vector<128x1xi32>
    %3 = tpu.iota {dimensions = array<i32: 1>} : vector<1x128xi32>
    %4 = vector.broadcast %1 : i32 to vector<1x128xi32>
    %5 = arith.addi %4, %3 : vector<1x128xi32>
    %c8_i32 = arith.constant 8 : i32
    %6 = vector.broadcast %c8_i32 : i32 to vector<128x1xi32>
    %7 = arith.cmpi slt, %2, %6 : vector<128x1xi32>
    %c8_i32_0 = arith.constant 8 : i32
    %8 = vector.broadcast %c8_i32_0 : i32 to vector<1x128xi32>
    %9 = arith.cmpi slt, %5, %8 : vector<1x128xi32>
    %c0 = arith.constant 0 : index
    %c0_1 = arith.constant 0 : index
    %10 = vector.load %arg7[%c0, %c0_1] : memref<128x128xf32, #tpu.memory_space<vmem>>, vector<128x128xf32>
    %11 = arith.index_cast %1 : i32 to index
    %c0_2 = arith.constant 0 : index
    %12 = vector.load %arg7[%11, %c0_2] : memref<128x128xf32, #tpu.memory_space<vmem>>, vector<128x128xf32>
    %cst = arith.constant dense<0.000000e+00> : vector<128x128xf32>
    %13 = tpu.matmul %10, %12, %cst {dimension_numbers = #tpu.dot_dimension_numbers<[1], [1], [0], [0], [0, 0, 1, 0], [], []>} : vector<128x128xf32>, vector<128x128xf32>, vector<128x128xf32> -> vector<128x128xf32>
    %c0_3 = arith.constant 0 : index
    %c0_4 = arith.constant 0 : index
    %14 = vector.load %arg5[%c0_3, %c0_4] : memref<128x1xf32, #tpu.memory_space<vmem>>, vector<128x1xf32>
    %cst_5 = arith.constant 2.000000e+00 : f32
    %15 = vector.broadcast %cst_5 : f32 to vector<128x128xf32>
    %16 = arith.mulf %15, %13 : vector<128x128xf32>
    %17 = vector.broadcast %14 : vector<128x1xf32> to vector<128x128xf32>
    %18 = arith.subf %17, %16 : vector<128x128xf32>
    %c0_6 = arith.constant 0 : index
    %c0_7 = arith.constant 0 : index
    %19 = vector.load %arg6[%c0_6, %c0_7] : memref<1x128xf32, #tpu.memory_space<vmem>>, vector<1x128xf32>
    %20 = vector.broadcast %19 : vector<1x128xf32> to vector<128x128xf32>
    %21 = arith.addf %18, %20 : vector<128x128xf32>
    %cst_8 = arith.constant 0.000000e+00 : f32
    %22 = vector.broadcast %cst_8 : f32 to vector<128x128xf32>
    %23 = arith.maximumf %21, %22 : vector<128x128xf32>
    %24 = vector.broadcast %2 : vector<128x1xi32> to vector<128x128xi32>
    %25 = vector.broadcast %5 : vector<1x128xi32> to vector<128x128xi32>
    %26 = arith.cmpi eq, %24, %25 : vector<128x128xi32>
    %cst_9 = arith.constant 0.000000e+00 : f32
    %27 = vector.broadcast %cst_9 : f32 to vector<128x128xf32>
    %28 = arith.select %26, %27, %23 : vector<128x128xi1>, vector<128x128xf32>
    %cst_10 = arith.constant 0.000000e+00 : f32
    %29 = vector.broadcast %cst_10 : f32 to vector<128x128xf32>
    %30 = arith.cmpf oeq, %28, %29 : vector<128x128xf32>
    %31 = arith.extui %30 : vector<128x128xi1> to vector<128x128xi32>
    %32 = arith.sitofp %31 : vector<128x128xi32> to vector<128x128xf32>
    %cst_11 = arith.constant 1.000000e+00 : f32
    %33 = vector.broadcast %cst_11 : f32 to vector<128x128xf32>
    %34 = arith.subf %33, %32 : vector<128x128xf32>
    %cst_12 = arith.constant 1.000000e-16 : f32
    %35 = vector.broadcast %cst_12 : f32 to vector<128x128xf32>
    %36 = arith.mulf %32, %35 : vector<128x128xf32>
    %37 = arith.addf %28, %36 : vector<128x128xf32>
    %38 = math.sqrt %37 : vector<128x128xf32>
    %39 = arith.mulf %34, %38 : vector<128x128xf32>
    %c0_13 = arith.constant 0 : index
    %c0_14 = arith.constant 0 : index
    %40 = vector.load %arg10[%c0_13, %c0_14] : memref<128x128xf32, #tpu.memory_space<vmem>>, vector<128x128xf32>
    tpu.vector_store %arg10[%c0_13, %c0_14], %39 {strides = array<i32>} : memref<128x128xf32, #tpu.memory_space<vmem>>, vector<128x128xf32>,
    %c0_15 = arith.constant 0 : index
    %c0_16 = arith.constant 0 : index
    %41 = vector.load %arg4[%c0_15, %c0_16] : memref<1x128xi32, #tpu.memory_space<vmem>>, vector<1x128xi32>
    %c0_17 = arith.constant 0 : index
    %c0_18 = arith.constant 0 : index
    %42 = vector.load %arg3[%c0_17, %c0_18] : memref<128x1xi32, #tpu.memory_space<vmem>>, vector<128x1xi32>
    %43 = vector.broadcast %42 : vector<128x1xi32> to vector<128x128xi32>
    %44 = vector.broadcast %41 : vector<1x128xi32> to vector<128x128xi32>
    %45 = arith.cmpi ne, %43, %44 : vector<128x128xi32>
    %46 = vector.broadcast %7 : vector<128x1xi1> to vector<128x128xi1>
    %47 = arith.andi %45, %46 : vector<128x128xi1>
    %cst_19 = arith.constant 0xFF800000 : f32
    %48 = vector.broadcast %cst_19 : f32 to vector<128x128xf32>
    %49 = arith.select %47, %39, %48 : vector<128x128xi1>, vector<128x128xf32>
    %c0_20 = arith.constant 0 : index
    %c0_21 = arith.constant 0 : index
    %50 = vector.load %arg11[%c0_20, %c0_21] : memref<128x128xf32, #tpu.memory_space<vmem>>, vector<128x128xf32>
    tpu.vector_store %arg11[%c0_20, %c0_21], %49 {strides = array<i32>} : memref<128x128xf32, #tpu.memory_space<vmem>>, vector<128x128xf32>,
    %cst_22 = arith.constant dense<0xFF800000> : vector<128xf32>
    %51 = vector.multi_reduction <maximumf>, %49, %cst_22 [0] : vector<128x128xf32> to vector<128xf32>
    %52 = vector.shape_cast %51 : vector<128xf32> to vector<1x128xf32>
    %cst_23 = arith.constant 0.000000e+00 : f32
    %53 = vector.broadcast %cst_23 : f32 to vector<1x128xf32>
    %54 = arith.maximumf %52, %53 : vector<1x128xf32>
    %c4_i32 = arith.constant 4 : i32
    %55 = arith.muli %arg1, %c4_i32 : i32
    %cst_24 = arith.constant 0.000000e+00 : f32
    %56 = vector.broadcast %cst_24 : f32 to vector<1x128xf32>
    %cst_25 = arith.constant 0x7F800000 : f32
    %c0_i32 = arith.constant 0 : i32
    %57 = arith.addi %55, %c0_i32 : i32
    %58 = arith.index_cast %57 : i32 to index
    %59 = memref.load %arg2[%58] : memref<128xi32, #tpu.memory_space<smem>>
    %60 = vector.broadcast %59 : i32 to vector<1x128xi32>
    %61 = arith.cmpi eq, %41, %60 : vector<1x128xi32>
    %62 = vector.broadcast %57 : i32 to vector<1x128xi32>
    %63 = arith.cmpi ne, %5, %62 : vector<1x128xi32>
    %64 = arith.andi %61, %63 : vector<1x128xi1>
    %65 = arith.andi %64, %9 : vector<1x128xi1>
    %66 = arith.extui %65 : vector<1x128xi1> to vector<1x128xi32>
    %67 = arith.sitofp %66 : vector<1x128xi32> to vector<1x128xf32>
    %c8_i32_26 = arith.constant 8 : i32
    %68 = arith.cmpi slt, %57, %c8_i32_26 : i32
    %69 = vector.shape_cast %67 : vector<1x128xf32> to vector<1x1x128xf32>
    %cst_27 = arith.constant dense<0.000000e+00> : vector<1xf32>
    %70 = vector.multi_reduction <add>, %69, %cst_27 [1, 2] : vector<1x1x128xf32> to vector<1xf32>
    %71 = vector.shape_cast %70 : vector<1xf32> to vector<1x1x1xf32>
    %72 = vector.extract %71[0, 0, 0] : f32 from vector<1x1x1xf32>
    %cst_28 = arith.constant 0.000000e+00 : f32
    %73 = arith.cmpf ogt, %72, %cst_28 : f32
    %74 = arith.andi %68, %73 : i1
    %75 = arith.extui %74 : i1 to i32
    %c0_i32_29 = arith.constant 0 : i32
    %76 = arith.cmpi ne, %75, %c0_i32_29 : i32
    %77:2 = scf.if %76 -> (vector<1x128xf32>, vector<1x128xf32>) {
      %147 = arith.index_cast %57 : i32 to index
      %c0_49 = arith.constant 0 : index
      %148 = vector.load %arg10[%147, %c0_49] : memref<128x128xf32, #tpu.memory_space<vmem>>, vector<1x128xf32>
      %c0_50 = arith.constant 0 : index
      %c0_51 = arith.constant 0 : index
      %149 = vector.load %arg11[%c0_50, %c0_51] : memref<128x128xf32, #tpu.memory_space<vmem>>, vector<128x128xf32>
      %150 = vector.broadcast %148 : vector<1x128xf32> to vector<128x128xf32>
      %151 = arith.cmpf ogt, %149, %150 : vector<128x128xf32>
      %152 = vector.broadcast %cst_25 : f32 to vector<128x128xf32>
      %153 = arith.select %151, %149, %152 : vector<128x128xi1>, vector<128x128xf32>
      %cst_52 = arith.constant dense<0x7F800000> : vector<128xf32>
      %154 = vector.multi_reduction <minimumf>, %153, %cst_52 [0] : vector<128x128xf32> to vector<128xf32>
      %155 = vector.shape_cast %154 : vector<128xf32> to vector<1x128xf32>
      %156 = vector.broadcast %cst_25 : f32 to vector<1x128xf32>
      %157 = arith.cmpf olt, %155, %156 : vector<1x128xf32>
      %158 = arith.select %157, %155, %54 : vector<1x128xi1>, vector<1x128xf32>
      %159 = arith.subf %148, %158 : vector<1x128xf32>
      %cst_53 = arith.constant 5.000000e+00 : f32
      %160 = vector.broadcast %cst_53 : f32 to vector<1x128xf32>
      %161 = arith.addf %159, %160 : vector<1x128xf32>
      %162 = arith.mulf %161, %67 : vector<1x128xf32>
      %cst_54 = arith.constant 0.000000e+00 : f32
      %163 = vector.broadcast %cst_54 : f32 to vector<1x128xf32>
      %164 = arith.maximumf %162, %163 : vector<1x128xf32>
      %165 = arith.addf %56, %164 : vector<1x128xf32>
      %166 = arith.addf %56, %67 : vector<1x128xf32>
      scf.yield %165, %166 : vector<1x128xf32>, vector<1x128xf32>
    } else {
      scf.yield %56, %56 : vector<1x128xf32>, vector<1x128xf32>
    }
    %c1_i32 = arith.constant 1 : i32
    %78 = arith.addi %55, %c1_i32 : i32
    %79 = arith.index_cast %78 : i32 to index
    %80 = memref.load %arg2[%79] : memref<128xi32, #tpu.memory_space<smem>>
    %81 = vector.broadcast %80 : i32 to vector<1x128xi32>
    %82 = arith.cmpi eq, %41, %81 : vector<1x128xi32>
    %83 = vector.broadcast %78 : i32 to vector<1x128xi32>
    %84 = arith.cmpi ne, %5, %83 : vector<1x128xi32>
    %85 = arith.andi %82, %84 : vector<1x128xi1>
    %86 = arith.andi %85, %9 : vector<1x128xi1>
    %87 = arith.extui %86 : vector<1x128xi1> to vector<1x128xi32>
    %88 = arith.sitofp %87 : vector<1x128xi32> to vector<1x128xf32>
    %c8_i32_30 = arith.constant 8 : i32
    %89 = arith.cmpi slt, %78, %c8_i32_30 : i32
    %90 = vector.shape_cast %88 : vector<1x128xf32> to vector<1x1x128xf32>
    %cst_31 = arith.constant dense<0.000000e+00> : vector<1xf32>
    %91 = vector.multi_reduction <add>, %90, %cst_31 [1, 2] : vector<1x1x128xf32> to vector<1xf32>
    %92 = vector.shape_cast %91 : vector<1xf32> to vector<1x1x1xf32>
    %93 = vector.extract %92[0, 0, 0] : f32 from vector<1x1x1xf32>
    %cst_32 = arith.constant 0.000000e+00 : f32
    %94 = arith.cmpf ogt, %93, %cst_32 : f32
    %95 = arith.andi %89, %94 : i1
    %96 = arith.extui %95 : i1 to i32
    %c0_i32_33 = arith.constant 0 : i32
    %97 = arith.cmpi ne, %96, %c0_i32_33 : i32
    %98:2 = scf.if %97 -> (vector<1x128xf32>, vector<1x128xf32>) {
      %147 = arith.index_cast %78 : i32 to index
      %c0_49 = arith.constant 0 : index
      %148 = vector.load %arg10[%147, %c0_49] : memref<128x128xf32, #tpu.memory_space<vmem>>, vector<1x128xf32>
      %c0_50 = arith.constant 0 : index
      %c0_51 = arith.constant 0 : index
      %149 = vector.load %arg11[%c0_50, %c0_51] : memref<128x128xf32, #tpu.memory_space<vmem>>, vector<128x128xf32>
      %150 = vector.broadcast %148 : vector<1x128xf32> to vector<128x128xf32>
      %151 = arith.cmpf ogt, %149, %150 : vector<128x128xf32>
      %152 = vector.broadcast %cst_25 : f32 to vector<128x128xf32>
      %153 = arith.select %151, %149, %152 : vector<128x128xi1>, vector<128x128xf32>
      %cst_52 = arith.constant dense<0x7F800000> : vector<128xf32>
      %154 = vector.multi_reduction <minimumf>, %153, %cst_52 [0] : vector<128x128xf32> to vector<128xf32>
      %155 = vector.shape_cast %154 : vector<128xf32> to vector<1x128xf32>
      %156 = vector.broadcast %cst_25 : f32 to vector<1x128xf32>
      %157 = arith.cmpf olt, %155, %156 : vector<1x128xf32>
      %158 = arith.select %157, %155, %54 : vector<1x128xi1>, vector<1x128xf32>
      %159 = arith.subf %148, %158 : vector<1x128xf32>
      %cst_53 = arith.constant 5.000000e+00 : f32
      %160 = vector.broadcast %cst_53 : f32 to vector<1x128xf32>
      %161 = arith.addf %159, %160 : vector<1x128xf32>
      %162 = arith.mulf %161, %88 : vector<1x128xf32>
      %cst_54 = arith.constant 0.000000e+00 : f32
      %163 = vector.broadcast %cst_54 : f32 to vector<1x128xf32>
      %164 = arith.maximumf %162, %163 : vector<1x128xf32>
      %165 = arith.addf %77#0, %164 : vector<1x128xf32>
      %166 = arith.addf %77#1, %88 : vector<1x128xf32>
      scf.yield %165, %166 : vector<1x128xf32>, vector<1x128xf32>
    } else {
      scf.yield %77#0, %77#1 : vector<1x128xf32>, vector<1x128xf32>
    }
    %c2_i32 = arith.constant 2 : i32
    %99 = arith.addi %55, %c2_i32 : i32
    %100 = arith.index_cast %99 : i32 to index
    %101 = memref.load %arg2[%100] : memref<128xi32, #tpu.memory_space<smem>>
    %102 = vector.broadcast %101 : i32 to vector<1x128xi32>
    %103 = arith.cmpi eq, %41, %102 : vector<1x128xi32>
    %104 = vector.broadcast %99 : i32 to vector<1x128xi32>
    %105 = arith.cmpi ne, %5, %104 : vector<1x128xi32>
    %106 = arith.andi %103, %105 : vector<1x128xi1>
    %107 = arith.andi %106, %9 : vector<1x128xi1>
    %108 = arith.extui %107 : vector<1x128xi1> to vector<1x128xi32>
    %109 = arith.sitofp %108 : vector<1x128xi32> to vector<1x128xf32>
    %c8_i32_34 = arith.constant 8 : i32
    %110 = arith.cmpi slt, %99, %c8_i32_34 : i32
    %111 = vector.shape_cast %109 : vector<1x128xf32> to vector<1x1x128xf32>
    %cst_35 = arith.constant dense<0.000000e+00> : vector<1xf32>
    %112 = vector.multi_reduction <add>, %111, %cst_35 [1, 2] : vector<1x1x128xf32> to vector<1xf32>
    %113 = vector.shape_cast %112 : vector<1xf32> to vector<1x1x1xf32>
    %114 = vector.extract %113[0, 0, 0] : f32 from vector<1x1x1xf32>
    %cst_36 = arith.constant 0.000000e+00 : f32
    %115 = arith.cmpf ogt, %114, %cst_36 : f32
    %116 = arith.andi %110, %115 : i1
    %117 = arith.extui %116 : i1 to i32
    %c0_i32_37 = arith.constant 0 : i32
    %118 = arith.cmpi ne, %117, %c0_i32_37 : i32
    %119:2 = scf.if %118 -> (vector<1x128xf32>, vector<1x128xf32>) {
      %147 = arith.index_cast %99 : i32 to index
      %c0_49 = arith.constant 0 : index
      %148 = vector.load %arg10[%147, %c0_49] : memref<128x128xf32, #tpu.memory_space<vmem>>, vector<1x128xf32>
      %c0_50 = arith.constant 0 : index
      %c0_51 = arith.constant 0 : index
      %149 = vector.load %arg11[%c0_50, %c0_51] : memref<128x128xf32, #tpu.memory_space<vmem>>, vector<128x128xf32>
      %150 = vector.broadcast %148 : vector<1x128xf32> to vector<128x128xf32>
      %151 = arith.cmpf ogt, %149, %150 : vector<128x128xf32>
      %152 = vector.broadcast %cst_25 : f32 to vector<128x128xf32>
      %153 = arith.select %151, %149, %152 : vector<128x128xi1>, vector<128x128xf32>
      %cst_52 = arith.constant dense<0x7F800000> : vector<128xf32>
      %154 = vector.multi_reduction <minimumf>, %153, %cst_52 [0] : vector<128x128xf32> to vector<128xf32>
      %155 = vector.shape_cast %154 : vector<128xf32> to vector<1x128xf32>
      %156 = vector.broadcast %cst_25 : f32 to vector<1x128xf32>
      %157 = arith.cmpf olt, %155, %156 : vector<1x128xf32>
      %158 = arith.select %157, %155, %54 : vector<1x128xi1>, vector<1x128xf32>
      %159 = arith.subf %148, %158 : vector<1x128xf32>
      %cst_53 = arith.constant 5.000000e+00 : f32
      %160 = vector.broadcast %cst_53 : f32 to vector<1x128xf32>
      %161 = arith.addf %159, %160 : vector<1x128xf32>
      %162 = arith.mulf %161, %109 : vector<1x128xf32>
      %cst_54 = arith.constant 0.000000e+00 : f32
      %163 = vector.broadcast %cst_54 : f32 to vector<1x128xf32>
      %164 = arith.maximumf %162, %163 : vector<1x128xf32>
      %165 = arith.addf %98#0, %164 : vector<1x128xf32>
      %166 = arith.addf %98#1, %109 : vector<1x128xf32>
      scf.yield %165, %166 : vector<1x128xf32>, vector<1x128xf32>
    } else {
      scf.yield %98#0, %98#1 : vector<1x128xf32>, vector<1x128xf32>
    }
    %c3_i32 = arith.constant 3 : i32
    %120 = arith.addi %55, %c3_i32 : i32
    %121 = arith.index_cast %120 : i32 to index
    %122 = memref.load %arg2[%121] : memref<128xi32, #tpu.memory_space<smem>>
    %123 = vector.broadcast %122 : i32 to vector<1x128xi32>
    %124 = arith.cmpi eq, %41, %123 : vector<1x128xi32>
    %125 = vector.broadcast %120 : i32 to vector<1x128xi32>
    %126 = arith.cmpi ne, %5, %125 : vector<1x128xi32>
    %127 = arith.andi %124, %126 : vector<1x128xi1>
    %128 = arith.andi %127, %9 : vector<1x128xi1>
    %129 = arith.extui %128 : vector<1x128xi1> to vector<1x128xi32>
    %130 = arith.sitofp %129 : vector<1x128xi32> to vector<1x128xf32>
    %c8_i32_38 = arith.constant 8 : i32
    %131 = arith.cmpi slt, %120, %c8_i32_38 : i32
    %132 = vector.shape_cast %130 : vector<1x128xf32> to vector<1x1x128xf32>
    %cst_39 = arith.constant dense<0.000000e+00> : vector<1xf32>
    %133 = vector.multi_reduction <add>, %132, %cst_39 [1, 2] : vector<1x1x128xf32> to vector<1xf32>
    %134 = vector.shape_cast %133 : vector<1xf32> to vector<1x1x1xf32>
    %135 = vector.extract %134[0, 0, 0] : f32 from vector<1x1x1xf32>
    %cst_40 = arith.constant 0.000000e+00 : f32
    %136 = arith.cmpf ogt, %135, %cst_40 : f32
    %137 = arith.andi %131, %136 : i1
    %138 = arith.extui %137 : i1 to i32
    %c0_i32_41 = arith.constant 0 : i32
    %139 = arith.cmpi ne, %138, %c0_i32_41 : i32
    %140:2 = scf.if %139 -> (vector<1x128xf32>, vector<1x128xf32>) {
      %147 = arith.index_cast %120 : i32 to index
      %c0_49 = arith.constant 0 : index
      %148 = vector.load %arg10[%147, %c0_49] : memref<128x128xf32, #tpu.memory_space<vmem>>, vector<1x128xf32>
      %c0_50 = arith.constant 0 : index
      %c0_51 = arith.constant 0 : index
      %149 = vector.load %arg11[%c0_50, %c0_51] : memref<128x128xf32, #tpu.memory_space<vmem>>, vector<128x128xf32>
      %150 = vector.broadcast %148 : vector<1x128xf32> to vector<128x128xf32>
      %151 = arith.cmpf ogt, %149, %150 : vector<128x128xf32>
      %152 = vector.broadcast %cst_25 : f32 to vector<128x128xf32>
      %153 = arith.select %151, %149, %152 : vector<128x128xi1>, vector<128x128xf32>
      %cst_52 = arith.constant dense<0x7F800000> : vector<128xf32>
      %154 = vector.multi_reduction <minimumf>, %153, %cst_52 [0] : vector<128x128xf32> to vector<128xf32>
      %155 = vector.shape_cast %154 : vector<128xf32> to vector<1x128xf32>
      %156 = vector.broadcast %cst_25 : f32 to vector<1x128xf32>
      %157 = arith.cmpf olt, %155, %156 : vector<1x128xf32>
      %158 = arith.select %157, %155, %54 : vector<1x128xi1>, vector<1x128xf32>
      %159 = arith.subf %148, %158 : vector<1x128xf32>
      %cst_53 = arith.constant 5.000000e+00 : f32
      %160 = vector.broadcast %cst_53 : f32 to vector<1x128xf32>
      %161 = arith.addf %159, %160 : vector<1x128xf32>
      %162 = arith.mulf %161, %130 : vector<1x128xf32>
      %cst_54 = arith.constant 0.000000e+00 : f32
      %163 = vector.broadcast %cst_54 : f32 to vector<1x128xf32>
      %164 = arith.maximumf %162, %163 : vector<1x128xf32>
      %165 = arith.addf %119#0, %164 : vector<1x128xf32>
      %166 = arith.addf %119#1, %130 : vector<1x128xf32>
      scf.yield %165, %166 : vector<1x128xf32>, vector<1x128xf32>
    } else {
      scf.yield %119#0, %119#1 : vector<1x128xf32>, vector<1x128xf32>
    }
    %c4_i32_42 = arith.constant 4 : i32
    %c0_43 = arith.constant 0 : index
    %c0_44 = arith.constant 0 : index
    %c0_45 = arith.constant 0 : index
    %141 = vector.load %arg8[%c0_43, %c0_44, %c0_45] : memref<1x1x128xf32, #tpu.memory_space<vmem>>, vector<1x1x128xf32>
    %142 = vector.shape_cast %141 : vector<1x1x128xf32> to vector<1x128xf32>
    %143 = vector.shape_cast %140#0 : vector<1x128xf32> to vector<1x1x128xf32>
    tpu.vector_store %arg8[%c0_43, %c0_44, %c0_45], %143 {strides = array<i32>} : memref<1x1x128xf32, #tpu.memory_space<vmem>>, vector<1x1x128xf32>,
    %c0_46 = arith.constant 0 : index
    %c0_47 = arith.constant 0 : index
    %c0_48 = arith.constant 0 : index
    %144 = vector.load %arg9[%c0_46, %c0_47, %c0_48] : memref<1x1x128xf32, #tpu.memory_space<vmem>>, vector<1x1x128xf32>
    %145 = vector.shape_cast %144 : vector<1x1x128xf32> to vector<1x128xf32>
    %146 = vector.shape_cast %140#1 : vector<1x128xf32> to vector<1x1x128xf32>
    tpu.vector_store %arg9[%c0_46, %c0_47, %c0_48], %146 {strides = array<i32>} : memref<1x1x128xf32, #tpu.memory_space<vmem>>, vector<1x1x128xf32>,
    return
  }
  func.func @transform_0(%arg0: i32, %arg1: i32, %arg2: memref<128xi32, #tpu.memory_space<smem>>) -> (i32, i32) {
    %c0_i32 = arith.constant 0 : i32
    %c0_i32_0 = arith.constant 0 : i32
    %c0_i32_1 = arith.constant 0 : i32
    return %c0_i32, %c0_i32_0 : i32, i32
  }
  func.func @transform_1(%arg0: i32, %arg1: i32, %arg2: memref<128xi32, #tpu.memory_space<smem>>) -> (i32, i32) {
    %c0_i32 = arith.constant 0 : i32
    %c0_i32_0 = arith.constant 0 : i32
    return %c0_i32, %arg0 : i32, i32
  }
  func.func @transform_2(%arg0: i32, %arg1: i32, %arg2: memref<128xi32, #tpu.memory_space<smem>>) -> (i32, i32) {
    %c0_i32 = arith.constant 0 : i32
    %c0_i32_0 = arith.constant 0 : i32
    %c0_i32_1 = arith.constant 0 : i32
    return %c0_i32, %c0_i32_0 : i32, i32
  }
  func.func @transform_3(%arg0: i32, %arg1: i32, %arg2: memref<128xi32, #tpu.memory_space<smem>>) -> (i32, i32) {
    %c0_i32 = arith.constant 0 : i32
    %c0_i32_0 = arith.constant 0 : i32
    return %c0_i32, %arg0 : i32, i32
  }
  func.func @transform_4(%arg0: i32, %arg1: i32, %arg2: memref<128xi32, #tpu.memory_space<smem>>) -> (i32, i32) {
    %c0_i32 = arith.constant 0 : i32
    %c0_i32_0 = arith.constant 0 : i32
    %c0_i32_1 = arith.constant 0 : i32
    return %c0_i32, %c0_i32_0 : i32, i32
  }
  func.func @transform_5(%arg0: i32, %arg1: i32, %arg2: memref<128xi32, #tpu.memory_space<smem>>) -> (i32, i32, i32) {
    %c0_i32 = arith.constant 0 : i32
    %c0_i32_0 = arith.constant 0 : i32
    return %arg1, %c0_i32, %arg0 : i32, i32, i32
  }
  func.func @transform_6(%arg0: i32, %arg1: i32, %arg2: memref<128xi32, #tpu.memory_space<smem>>) -> (i32, i32, i32) {
    %c0_i32 = arith.constant 0 : i32
    %c0_i32_0 = arith.constant 0 : i32
    return %arg1, %c0_i32, %arg0 : i32, i32, i32
  }
}

</mosaic_0001>

<llo_original>
// kernel: tpu_custom_call.1
$region0: #{tpu_custom_call.1}
  #allocation0 [shape = 'u32[]', space=smem, size = 0x4, offset = 0x4, fixed_abs, tag = 'smem constant byte address 0x4 - core index']
  #allocation1 [shape = 'u32[144,128]{1,0:T(1,128)}', space=vmem, size = 0x12000, scoped, tag = 'internal scratch']
  #allocation2 [shape = 'f32[128,128]{1,0:T(8,128)}', space=vmem, size = 0x10000, scoped, tag = 'scratch operand']
  #allocation3 [shape = 'f32[128,128]{1,0:T(8,128)}', space=vmem, size = 0x10000, scoped, tag = 'scratch operand']
  #allocation4 [shape = 's32[1]{0}', space=sflag, size = 0x4, scoped, tag = 'scoped memory for tpu_custom_call.1']
  #allocation5 [shape = 'u8[512]{0}', space=smem, size = 0x200, scoped, tag = 'prefetched SMEM operand 0']
  %s0 = inlined_call_operand.vmem [shape: s32[128], index: 0, kind: input, shape index: {}]
  %s1 = inlined_call_operand.vmem [shape: s32[128,1], index: 1, kind: input, shape index: {}]
  %s2 = inlined_call_operand.vmem [shape: s32[1,128], index: 2, kind: input, shape index: {}]
  %s3 = inlined_call_operand.vmem [shape: f32[128,1], index: 3, kind: input, shape index: {}]
  %s4 = inlined_call_operand.vmem [shape: f32[1,128], index: 4, kind: input, shape index: {}]
  %s5 = inlined_call_operand.vmem [shape: f32[128,128], index: 5, kind: input, shape index: {}]
  %s6 = inlined_call_operand.hbm [shape: f32[2,1,128], index: 6, kind: output, shape index: {0}]
  %s7 = inlined_call_operand.hbm [shape: f32[2,1,128], index: 7, kind: output, shape index: {1}]
  %8 = xla_tuple %s6, %s7
  %s9 = sld [smem:[#allocation0]]
  $region93: #{tpu_custom_call.1} parent=0
    _
  %s11 = ssub.s32 1, %s9
  %s12 = scalar_select 0, %s11, %s9
  %s13 = sshll.u32 %s0, 4
  %s14 = int_to_ptr.vmem [resolvable:$true] %s13
  %16 = dma.vmem_to_smem %s14, 16, [#allocation5], [#allocation4]
  %17 = dma.done [#allocation4], 16
  %18 = sfence
  $region1: #{tpu_custom_call.1} parent=0
    #allocation6 [shape = 'u8[1024]{0}', space=vmem, size = 0x400, scoped, tag = 'output window, operand 0']
    #allocation7 [shape = 's32[2]{0}', space=sflag, size = 0x8, scoped, tag = 'scoped memory for tpu_custom_call.1']
    #allocation8 [shape = 'u8[1024]{0}', space=vmem, size = 0x400, scoped, tag = 'output window, operand 1']
    #allocation9 [shape = 's32[2]{0}', space=sflag, size = 0x8, scoped, tag = 'scoped memory for tpu_custom_call.1']
    %19 = vsyncpa [#allocation7], 0
    %s20 = scalar_lea.sflag [#allocation7], 1
    %21 = vsyncpa %s20, 0
    %22 = vsyncpa [#allocation9], 0
    %s23 = scalar_lea.sflag [#allocation9], 1
    %24 = vsyncpa %s23, 0
    loop: start=0, step=1, limit=4
    $region2: #{tpu_custom_call.1} parent=1 // loop_pre_header
      _
    $region3: #{tpu_custom_call.1} parent=1 // loop_header
      %s26 = sphi 0, %s30
      %p27 = scmp.ge.s32.totalorder %s26, 4
      %s33 = sphi 0, %s45
      %s34 = sphi 0, %s41
      %s35 = sphi 0, %s33
      %s36 = sphi 0, %s34
      %s37 = sphi 0, %s35
      %s38 = sphi 0, %s36
      %s46 = sphi 0, %s46
      %s48 = sphi 0, %s46
      %s49 = sphi 0, %s48
      %s63 = sphi 0, %s49
      %s69 = sphi 0, %s71
      %s72 = sphi 0, %s69
      %s73 = sphi 0, %s72
      %s89 = sphi 0, %s73
      %s93 = sphi 0, %s93
      %s95 = sphi 0, %s93
      %s96 = sphi 0, %s95
      %s110 = sphi 0, %s96
      %s116 = sphi 0, %s118
      %s119 = sphi 0, %s116
      %s120 = sphi 0, %s119
      %s136 = sphi 0, %s120
      %s140 = sphi 0, %s140
      %s142 = sphi 0, %s140
      %s143 = sphi 0, %s142
      %s157 = sphi 0, %s143
      %s165 = sphi 0, %s167
      %s168 = sphi 0, %s165
      %s169 = sphi 0, %s168
      %s185 = sphi 0, %s169
      %s193 = sphi 0, %s195
      %s196 = sphi 0, %s193
      %s197 = sphi 0, %s196
      %s213 = sphi 0, %s197
    $region4: #{tpu_custom_call.1} parent=1 // loop_header_branch
      %29 = sbr.rel (%p27) target = $region8
    $region5: #{tpu_custom_call.1} parent=1 // loop_body
      %s31 = ssub.s32 %s26, 1
      %s32 = ssub.s32 %s26, 2
      %s39 = sadd.s32 1, %s34
      %p40 = scmp.ge.s32.totalorder %s39, 2
      %s41 = scalar_select %p40, 0, %s39
      %s42 = sadd.s32 1, %s33
      %s43 = scalar_select %p40, %s42, %s33
      %p44 = scmp.ge.s32.totalorder %s43, 1
      %s45 = scalar_select %p44, 0, %s43
      %s47 = sadd.s32 %s46, 1
      %p50 = scmp.eq.s32.totalorder %s26, 1
      %p51 = scmp.ne.s32.totalorder %s46, %s48
      %p52 = scmp.eq.s32.totalorder %s26, 0
      %p53 = por %p51, %p52
      %p54 = scmp.ne.s32.totalorder %s46, %s48
      %p55 = scmp.eq.s32.totalorder %s31, 1
      %p56 = por %p54, %p55
      %p57 = scmp.ne.s32.totalorder %s48, %s49
      %p58 = scmp.eq.s32.totalorder %s31, 0
      %p59 = por %p57, %p58
      %p60 = scmp.ne.s32.totalorder %s48, %s49
      %p61 = scmp.eq.s32.totalorder %s32, 1
      %p62 = por %p60, %p61
      %p64 = scmp.ne.s32.totalorder %s49, %s63
      %p65 = scmp.eq.s32.totalorder %s32, 0
      %p66 = por %p64, %p65
      %s67 = ssub.s32 %s33, %s45
      %p68 = scmp.eq.s32.totalorder %s67, 0
      %s70 = sadd.s32 %s69, 1
      %s71 = scalar_select %p68, %s69, %s70
      %p74 = pneg %p68
      %p75 = scmp.eq.s32.totalorder %s26, 1
      %p76 = por %p74, %p75
      %p77 = scmp.ne.s32.totalorder %s69, %s72
      %p78 = scmp.eq.s32.totalorder %s26, 0
      %p79 = por %p77, %p78
      %p80 = scmp.ne.s32.totalorder %s69, %s72
      %p81 = scmp.eq.s32.totalorder %s31, 1
      %p82 = por %p80, %p81
      %p83 = scmp.ne.s32.totalorder %s72, %s73
      %p84 = scmp.eq.s32.totalorder %s31, 0
      %p85 = por %p83, %p84
      %p86 = scmp.ne.s32.totalorder %s72, %s73
      %p87 = scmp.eq.s32.totalorder %s32, 1
      %p88 = por %p86, %p87
      %p90 = scmp.ne.s32.totalorder %s73, %s89
      %p91 = scmp.eq.s32.totalorder %s32, 0
      %p92 = por %p90, %p91
      %s94 = sadd.s32 %s93, 1
      %p97 = scmp.eq.s32.totalorder %s26, 1
      %p98 = scmp.ne.s32.totalorder %s93, %s95
      %p99 = scmp.eq.s32.totalorder %s26, 0
      %p100 = por %p98, %p99
      %p101 = scmp.ne.s32.totalorder %s93, %s95
      %p102 = scmp.eq.s32.totalorder %s31, 1
      %p103 = por %p101, %p102
      %p104 = scmp.ne.s32.totalorder %s95, %s96
      %p105 = scmp.eq.s32.totalorder %s31, 0
      %p106 = por %p104, %p105
      %p107 = scmp.ne.s32.totalorder %s95, %s96
      %p108 = scmp.eq.s32.totalorder %s32, 1
      %p109 = por %p107, %p108
      %p111 = scmp.ne.s32.totalorder %s96, %s110
      %p112 = scmp.eq.s32.totalorder %s32, 0
      %p113 = por %p111, %p112
      %s114 = ssub.s32 %s33, %s45
      %p115 = scmp.eq.s32.totalorder %s114, 0
      %s117 = sadd.s32 %s116, 1
      %s118 = scalar_select %p115, %s116, %s117
      %p121 = pneg %p115
      %p122 = scmp.eq.s32.totalorder %s26, 1
      %p123 = por %p121, %p122
      %p124 = scmp.ne.s32.totalorder %s116, %s119
      %p125 = scmp.eq.s32.totalorder %s26, 0
      %p126 = por %p124, %p125
      %p127 = scmp.ne.s32.totalorder %s116, %s119
      %p128 = scmp.eq.s32.totalorder %s31, 1
      %p129 = por %p127, %p128
      %p130 = scmp.ne.s32.totalorder %s119, %s120
      %p131 = scmp.eq.s32.totalorder %s31, 0
      %p132 = por %p130, %p131
      %p133 = scmp.ne.s32.totalorder %s119, %s120
      %p134 = scmp.eq.s32.totalorder %s32, 1
      %p135 = por %p133, %p134
      %p137 = scmp.ne.s32.totalorder %s120, %s136
      %p138 = scmp.eq.s32.totalorder %s32, 0
      %p139 = por %p137, %p138
      %s141 = sadd.s32 %s140, 1
      %p144 = scmp.eq.s32.totalorder %s26, 1
      %p145 = scmp.ne.s32.totalorder %s140, %s142
      %p146 = scmp.eq.s32.totalorder %s26, 0
      %p147 = por %p145, %p146
      %p148 = scmp.ne.s32.totalorder %s140, %s142
      %p149 = scmp.eq.s32.totalorder %s31, 1
      %p150 = por %p148, %p149
      %p151 = scmp.ne.s32.totalorder %s142, %s143
      %p152 = scmp.eq.s32.totalorder %s31, 0
      %p153 = por %p151, %p152
      %p154 = scmp.ne.s32.totalorder %s142, %s143
      %p155 = scmp.eq.s32.totalorder %s32, 1
      %p156 = por %p154, %p155
      %p158 = scmp.ne.s32.totalorder %s143, %s157
      %p159 = scmp.eq.s32.totalorder %s32, 0
      %p160 = por %p158, %p159
      %s161 = ssub.s32 %s34, %s41
      %s162 = ssub.s32 %s33, %s45
      %s163 = sor.u32 %s161, %s162
      %p164 = scmp.eq.s32.totalorder %s163, 0
      %s166 = sadd.s32 %s165, 1
      %s167 = scalar_select %p164, %s165, %s166
      %p170 = pneg %p164
      %p171 = scmp.eq.s32.totalorder %s26, 1
      %p172 = por %p170, %p171
      %p173 = scmp.ne.s32.totalorder %s165, %s168
      %p174 = scmp.eq.s32.totalorder %s26, 0
      %p175 = por %p173, %p174
      %p176 = scmp.ne.s32.totalorder %s165, %s168
      %p177 = scmp.eq.s32.totalorder %s31, 1
      %p178 = por %p176, %p177
      %p179 = scmp.ne.s32.totalorder %s168, %s169
      %p180 = scmp.eq.s32.totalorder %s31, 0
      %p181 = por %p179, %p180
      %p182 = scmp.ne.s32.totalorder %s168, %s169
      %p183 = scmp.eq.s32.totalorder %s32, 1
      %p184 = por %p182, %p183
      %p186 = scmp.ne.s32.totalorder %s169, %s185
      %p187 = scmp.eq.s32.totalorder %s32, 0
      %p188 = por %p186, %p187
      %s189 = ssub.s32 %s34, %s41
      %s190 = ssub.s32 %s33, %s45
      %s191 = sor.u32 %s189, %s190
      %p192 = scmp.eq.s32.totalorder %s191, 0
      %s194 = sadd.s32 %s193, 1
      %s195 = scalar_select %p192, %s193, %s194
      %p198 = pneg %p192
      %p199 = scmp.eq.s32.totalorder %s26, 1
      %p200 = por %p198, %p199
      %p201 = scmp.ne.s32.totalorder %s193, %s196
      %p202 = scmp.eq.s32.totalorder %s26, 0
      %p203 = por %p201, %p202
      %p204 = scmp.ne.s32.totalorder %s193, %s196
      %p205 = scmp.eq.s32.totalorder %s31, 1
      %p206 = por %p204, %p205
      %p207 = scmp.ne.s32.totalorder %s196, %s197
      %p208 = scmp.eq.s32.totalorder %s31, 0
      %p209 = por %p207, %p208
      %p210 = scmp.ne.s32.totalorder %s196, %s197
      %p211 = scmp.eq.s32.totalorder %s32, 1
      %p212 = por %p210, %p211
      %p214 = scmp.ne.s32.totalorder %s197, %s213
      %p215 = scmp.eq.s32.totalorder %s32, 0
      %p216 = por %p214, %p215
      %p217 = scmp.le.s32.totalorder 1, %s26
      %p218 = scmp.lt.s32.totalorder %s26, 3
      %p219 = pnand %p217, %p218
      %p220 = pneg %p219
      // Predicated region
      $region9: #{tpu_custom_call.1} parent=5 // pred_check
        _
      $region10: #{tpu_custom_call.1} parent=5 // pred_check_branch
        %222 = sbr.rel (%p219) target = $region12
      $region11: #{tpu_custom_call.1} parent=5 // pred_region
        %s223 = ssub.s32 %s26, 1
        // Predicated region
        $region13: #{tpu_custom_call.1} parent=11 // pred_check
          %p224 = pneg %p59
        $region14: #{tpu_custom_call.1} parent=11 // pred_check_branch
          %226 = sbr.rel (%p224) target = $region16
        $region15: #{tpu_custom_call.1} parent=11 // pred_region
          _
        $region16: #{tpu_custom_call.1} parent=11 // pred_fallthru
          _
        // Predicated region
        $region17: #{tpu_custom_call.1} parent=11 // pred_check
          %p227 = pneg %p85
        $region18: #{tpu_custom_call.1} parent=11 // pred_check_branch
          %229 = sbr.rel (%p227) target = $region20
        $region19: #{tpu_custom_call.1} parent=11 // pred_region
          %p230 = scmp.lt.s32.totalorder %s35, 0
          %s231 = scalar_select %p230, %s35, 0
          %s232 = scalar_lea.vmem %s2, %s231
        $region20: #{tpu_custom_call.1} parent=11 // pred_fallthru
          _
        // Predicated region
        $region21: #{tpu_custom_call.1} parent=11 // pred_check
          %p233 = pneg %p106
        $region22: #{tpu_custom_call.1} parent=11 // pred_check_branch
          %235 = sbr.rel (%p233) target = $region24
        $region23: #{tpu_custom_call.1} parent=11 // pred_region
          _
        $region24: #{tpu_custom_call.1} parent=11 // pred_fallthru
          _
        // Predicated region
        $region25: #{tpu_custom_call.1} parent=11 // pred_check
          %p236 = pneg %p132
        $region26: #{tpu_custom_call.1} parent=11 // pred_check_branch
          %238 = sbr.rel (%p236) target = $region28
        $region27: #{tpu_custom_call.1} parent=11 // pred_region
          %p239 = scmp.lt.s32.totalorder %s35, 0
          %s240 = scalar_select %p239, %s35, 0
          %s241 = scalar_lea.vmem %s4, %s240
        $region28: #{tpu_custom_call.1} parent=11 // pred_fallthru
          _
        // Predicated region
        $region29: #{tpu_custom_call.1} parent=11 // pred_check
          %p242 = pneg %p153
        $region30: #{tpu_custom_call.1} parent=11 // pred_check_branch
          %244 = sbr.rel (%p242) target = $region32
        $region31: #{tpu_custom_call.1} parent=11 // pred_region
          _
        $region32: #{tpu_custom_call.1} parent=11 // pred_fallthru
          _
      $region12: #{tpu_custom_call.1} parent=5 // pred_fallthru
        _
      %p245 = scmp.lt.s32.totalorder %s26, 2
      // Predicated region
      $region33: #{tpu_custom_call.1} parent=5 // pred_check
        %p246 = pneg %p245
      $region34: #{tpu_custom_call.1} parent=5 // pred_check_branch
        %248 = sbr.rel (%p246) target = $region36
      $region35: #{tpu_custom_call.1} parent=5 // pred_region
        _
      $region36: #{tpu_custom_call.1} parent=5 // pred_fallthru
        _
      %p249 = scmp.le.s32.totalorder 1, %s26
      %p250 = scmp.lt.s32.totalorder %s26, 3
      %p251 = pnand %p249, %p250
      %p252 = pneg %p251
      // Predicated region
      $region37: #{tpu_custom_call.1} parent=5 // pred_check
        _
      $region38: #{tpu_custom_call.1} parent=5 // pred_check_branch
        %254 = sbr.rel (%p251) target = $region40
      $region39: #{tpu_custom_call.1} parent=5 // pred_region
        %s255 = ssub.s32 %s26, 1
        %p256 = pneg %p59
        %p257 = pneg %p56
        %p258 = scmp.lt.s32.totalorder %s35, 0
        %s259 = scalar_select %p258, %s35, 0
        %s260 = scalar_lea.vmem %s2, %s259
        %p261 = pneg %p85
        %p262 = pneg %p82
        %p263 = pneg %p106
        %p264 = pneg %p103
        %p265 = scmp.lt.s32.totalorder %s35, 0
        %s266 = scalar_select %p265, %s35, 0
        %s267 = scalar_lea.vmem %s4, %s266
        %p268 = pneg %p132
        %p269 = pneg %p129
        %p270 = pneg %p153
        %p271 = pneg %p150
        %p272 = pneg %p181
        %p273 = pneg %p178
        %s274 = sand.u32 %s168, 1
        %s275 = scalar_lea.sflag [#allocation7], %s274
        %s276 = sand.u32 %s168, 1
        %s277 = scalar_lea.vmem [#allocation6], %s276
        %p278 = pneg %p209
        %p279 = pneg %p206
        %s280 = sand.u32 %s196, 1
        %s281 = scalar_lea.sflag [#allocation9], %s280
        %s282 = sand.u32 %s196, 1
        %s283 = scalar_lea.vmem [#allocation8], %s282
        %p284 = scmp.lt.s32.totalorder %s35, 0
        %s285 = scalar_select %p284, %s35, 0
        %s286 = scalar_lea.vmem %s2, %s285
        %p287 = scmp.lt.s32.totalorder %s35, 0
        %s288 = scalar_select %p287, %s35, 0
        %s289 = scalar_lea.vmem %s4, %s288
        %s290 = smul.u32 %s35, 128
        %v291 = vlaneseq
        %v292 = vshrl.u32 %v291, 7
        %v293 = vadd.s32 %v292, 8
        %v294 = vadd.s32 %v292, 16
        %v295 = vadd.s32 %v292, 24
        %v296 = vadd.s32 %v292, 32
        %v297 = vadd.s32 %v292, 40
        %v298 = vadd.s32 %v292, 48
        %v299 = vadd.s32 %v292, 56
        %v300 = vadd.s32 %v292, 64
        %v301 = vadd.s32 %v292, 72
        %v302 = vadd.s32 %v292, 80
        %v303 = vadd.s32 %v292, 88
        %v304 = vadd.s32 %v292, 96
        %v305 = vadd.s32 %v292, 104
        %v306 = vadd.s32 %v292, 112
        %v307 = vadd.s32 %v292, 120
        %v308 = vlaneseq
        %v309 = vand.u32 %v308, 127
        %v310 = vstv %s290
        %v311 = vadd.s32 %v310, %v309
        %vm312 = vcmp.lt.s32.totalorder %v292, 8
        %vm313 = vcmp.lt.s32.totalorder %v293, 8
        %vm314 = vcmp.lt.s32.totalorder %v294, 8
        %vm315 = vcmp.lt.s32.totalorder %v295, 8
        %vm316 = vcmp.lt.s32.totalorder %v296, 8
        %vm317 = vcmp.lt.s32.totalorder %v297, 8
        %vm318 = vcmp.lt.s32.totalorder %v298, 8
        %vm319 = vcmp.lt.s32.totalorder %v299, 8
        %vm320 = vcmp.lt.s32.totalorder %v300, 8
        %vm321 = vcmp.lt.s32.totalorder %v301, 8
        %vm322 = vcmp.lt.s32.totalorder %v302, 8
        %vm323 = vcmp.lt.s32.totalorder %v303, 8
        %vm324 = vcmp.lt.s32.totalorder %v304, 8
        %vm325 = vcmp.lt.s32.totalorder %v305, 8
        %vm326 = vcmp.lt.s32.totalorder %v306, 8
        %vm327 = vcmp.lt.s32.totalorder %v307, 8
        %vm328 = vcmp.lt.s32.totalorder %v311, 8
        %v329 = vld [vmem:[%s5] sm:$0xff]
        %v330 = vld [vmem:[%s5 + $0x8] sm:$0xff]
        %v331 = vld [vmem:[%s5 + $0x10] sm:$0xff]
        %v332 = vld [vmem:[%s5 + $0x18] sm:$0xff]
        %v333 = vld [vmem:[%s5 + $0x20] sm:$0xff]
        %v334 = vld [vmem:[%s5 + $0x28] sm:$0xff]
        %v335 = vld [vmem:[%s5 + $0x30] sm:$0xff]
        %v336 = vld [vmem:[%s5 + $0x38] sm:$0xff]
        %v337 = vld [vmem:[%s5 + $0x40] sm:$0xff]
        %v338 = vld [vmem:[%s5 + $0x48] sm:$0xff]
        %v339 = vld [vmem:[%s5 + $0x50] sm:$0xff]
        %v340 = vld [vmem:[%s5 + $0x58] sm:$0xff]
        %v341 = vld [vmem:[%s5 + $0x60] sm:$0xff]
        %v342 = vld [vmem:[%s5 + $0x68] sm:$0xff]
        %v343 = vld [vmem:[%s5 + $0x70] sm:$0xff]
        %v344 = vld [vmem:[%s5 + $0x78] sm:$0xff]
        %s345 = scalar_lea.vmem %s5, %s290
        %v346 = vld [vmem:[%s345] sm:$0xff]
        %v347 = vld [vmem:[%s345 + $0x8] sm:$0xff]
        %v348 = vld [vmem:[%s345 + $0x10] sm:$0xff]
        %v349 = vld [vmem:[%s345 + $0x18] sm:$0xff]
        %v350 = vld [vmem:[%s345 + $0x20] sm:$0xff]
        %v351 = vld [vmem:[%s345 + $0x28] sm:$0xff]
        %v352 = vld [vmem:[%s345 + $0x30] sm:$0xff]
        %v353 = vld [vmem:[%s345 + $0x38] sm:$0xff]
        %v354 = vld [vmem:[%s345 + $0x40] sm:$0xff]
        %v355 = vld [vmem:[%s345 + $0x48] sm:$0xff]
        %v356 = vld [vmem:[%s345 + $0x50] sm:$0xff]
        %v357 = vld [vmem:[%s345 + $0x58] sm:$0xff]
        %v358 = vld [vmem:[%s345 + $0x60] sm:$0xff]
        %v359 = vld [vmem:[%s345 + $0x68] sm:$0xff]
        %v360 = vld [vmem:[%s345 + $0x70] sm:$0xff]
        %v361 = vld [vmem:[%s345 + $0x78] sm:$0xff]
        %362 = vmatprep.subr.mxu0 0.0
        %363 = vmatpush1.xpose.msra.mxu0 %v346
        %364 = vmatprep.subr.mxu0 0.0
        %365 = vmatpush1.xpose.msra.mxu0 %v347
        %366 = vmatprep.subr.mxu0 0.0
        %367 = vmatpush1.xpose.msra.mxu0 %v348
        %368 = vmatprep.subr.mxu0 0.0
        %369 = vmatpush1.xpose.msra.mxu0 %v349
        %370 = vmatprep.subr.mxu0 0.0
        %371 = vmatpush1.xpose.msra.mxu0 %v350
        %372 = vmatprep.subr.mxu0 0.0
        %373 = vmatpush1.xpose.msra.mxu0 %v351
        %374 = vmatprep.subr.mxu0 0.0
        %375 = vmatpush1.xpose.msra.mxu0 %v352
        %376 = vmatprep.subr.mxu0 0.0
        %377 = vmatpush1.xpose.msra.mxu0 %v353
        %378 = vmatprep.subr.mxu0 0.0
        %379 = vmatpush1.xpose.msra.mxu0 %v354
        %380 = vmatprep.subr.mxu0 0.0
        %381 = vmatpush1.xpose.msra.mxu0 %v355
        %382 = vmatprep.subr.mxu0 0.0
        %383 = vmatpush1.xpose.msra.mxu0 %v356
        %384 = vmatprep.subr.mxu0 0.0
        %385 = vmatpush1.xpose.msra.mxu0 %v357
        %386 = vmatprep.subr.mxu0 0.0
        %387 = vmatpush1.xpose.msra.mxu0 %v358
        %388 = vmatprep.subr.mxu0 0.0
        %389 = vmatpush1.xpose.msra.mxu0 %v359
        %390 = vmatprep.subr.mxu0 0.0
        %391 = vmatpush1.xpose.msra.mxu0 %v360
        %392 = vmatprep.subr.mxu0 0.0
        %393 = vmatpush1.xpose.msra.mxu0 %v361
        %394 = vmatprep.subr.mxu0 0.0
        %395 = vmatpush1.xpose.msra.mxu0 0.0
        %396 = vmatprep.subr.mxu0 0.0
        %397 = vmatpush1.xpose.msra.mxu0 0.0
        %398 = vmatprep.subr.mxu0 0.0
        %399 = vmatpush1.xpose.msra.mxu0 0.0
        %400 = vmatprep.subr.mxu0 0.0
        %401 = vmatpush1.xpose.msra.mxu0 0.0
        %402 = vmatprep.subr.mxu0 0.0
        %403 = vmatpush1.xpose.msra.mxu0 0.0
        %404 = vmatprep.subr.mxu0 0.0
        %405 = vmatpush1.xpose.msra.mxu0 0.0
        %406 = vmatprep.subr.mxu0 0.0
        %407 = vmatpush1.xpose.msra.mxu0 0.0
        %408 = vmatprep.subr.mxu0 0.0
        %409 = vmatpush1.xpose.msra.mxu0 0.0
        %410 = vmatprep.subr.mxu0 0.0
        %411 = vmatpush1.xpose.msra.mxu0 0.0
        %412 = vmatprep.subr.mxu0 0.0
        %413 = vmatpush1.xpose.msra.mxu0 0.0
        %414 = vmatprep.subr.mxu0 0.0
        %415 = vmatpush1.xpose.msra.mxu0 0.0
        %416 = vmatprep.subr.mxu0 0.0
        %417 = vmatpush1.xpose.msra.mxu0 0.0
        %418 = vmatprep.subr.mxu0 0.0
        %419 = vmatpush1.xpose.msra.mxu0 0.0
        %420 = vmatprep.subr.mxu0 0.0
        %421 = vmatpush1.xpose.msra.mxu0 0.0
        %422 = vmatprep.subr.mxu0 0.0
        %423 = vmatpush1.xpose.msra.mxu0 0.0
        %424 = vmatprep.subr.mxu0 0.0
        %425 = vmatpush1.xpose.msra.mxu0 0.0
        %426 = vmatprep.mubr.f32.mxu0 0.0
        %427 = vmatmul.mubr.f32.gmra.mrb[0].mxu0 %v329
        %v428 = vpop.f32.mrb[0].mxu0
        %v429 = vadd.f32 0.0, %v428
        %v430 = vpop.f32.mrb[0].mxu0
        %431 = vmatprep.mubr.f32.mxu0 0.0
        %432 = vmatmul.mubr.f32.gmra.mrb[0].mxu0 %v330
        %v433 = vpop.f32.mrb[0].mxu0
        %v434 = vadd.f32 0.0, %v433
        %v435 = vpop.f32.mrb[0].mxu0
        %436 = vmatprep.mubr.f32.mxu0 0.0
        %437 = vmatmul.mubr.f32.gmra.mrb[0].mxu0 %v331
        %v438 = vpop.f32.mrb[0].mxu0
        %v439 = vadd.f32 0.0, %v438
        %v440 = vpop.f32.mrb[0].mxu0
        %441 = vmatprep.mubr.f32.mxu0 0.0
        %442 = vmatmul.mubr.f32.gmra.mrb[0].mxu0 %v332
        %v443 = vpop.f32.mrb[0].mxu0
        %v444 = vadd.f32 0.0, %v443
        %v445 = vpop.f32.mrb[0].mxu0
        %446 = vmatprep.mubr.f32.mxu0 0.0
        %447 = vmatmul.mubr.f32.gmra.mrb[0].mxu0 %v333
        %v448 = vpop.f32.mrb[0].mxu0
        %v449 = vadd.f32 0.0, %v448
        %v450 = vpop.f32.mrb[0].mxu0
        %451 = vmatprep.mubr.f32.mxu0 0.0
        %452 = vmatmul.mubr.f32.gmra.mrb[0].mxu0 %v334
        %v453 = vpop.f32.mrb[0].mxu0
        %v454 = vadd.f32 0.0, %v453
        %v455 = vpop.f32.mrb[0].mxu0
        %456 = vmatprep.mubr.f32.mxu0 0.0
        %457 = vmatmul.mubr.f32.gmra.mrb[0].mxu0 %v335
        %v458 = vpop.f32.mrb[0].mxu0
        %v459 = vadd.f32 0.0, %v458
        %v460 = vpop.f32.mrb[0].mxu0
        %461 = vmatprep.mubr.f32.mxu0 0.0
        %462 = vmatmul.mubr.f32.gmra.mrb[0].mxu0 %v336
        %v463 = vpop.f32.mrb[0].mxu0
        %v464 = vadd.f32 0.0, %v463
        %v465 = vpop.f32.mrb[0].mxu0
        %466 = vmatprep.mubr.f32.mxu0 0.0
        %467 = vmatmul.mubr.f32.gmra.mrb[0].mxu0 %v337
        %v468 = vpop.f32.mrb[0].mxu0
        %v469 = vadd.f32 0.0, %v468
        %v470 = vpop.f32.mrb[0].mxu0
        %471 = vmatprep.mubr.f32.mxu0 0.0
        %472 = vmatmul.mubr.f32.gmra.mrb[0].mxu0 %v338
        %v473 = vpop.f32.mrb[0].mxu0
        %v474 = vadd.f32 0.0, %v473
        %v475 = vpop.f32.mrb[0].mxu0
        %476 = vmatprep.mubr.f32.mxu0 0.0
        %477 = vmatmul.mubr.f32.gmra.mrb[0].mxu0 %v339
        %v478 = vpop.f32.mrb[0].mxu0
        %v479 = vadd.f32 0.0, %v478
        %v480 = vpop.f32.mrb[0].mxu0
        %481 = vmatprep.mubr.f32.mxu0 0.0
        %482 = vmatmul.mubr.f32.gmra.mrb[0].mxu0 %v340
        %v483 = vpop.f32.mrb[0].mxu0
        %v484 = vadd.f32 0.0, %v483
        %v485 = vpop.f32.mrb[0].mxu0
        %486 = vmatprep.mubr.f32.mxu0 0.0
        %487 = vmatmul.mubr.f32.gmra.mrb[0].mxu0 %v341
        %v488 = vpop.f32.mrb[0].mxu0
        %v489 = vadd.f32 0.0, %v488
        %v490 = vpop.f32.mrb[0].mxu0
        %491 = vmatprep.mubr.f32.mxu0 0.0
        %492 = vmatmul.mubr.f32.gmra.mrb[0].mxu0 %v342
        %v493 = vpop.f32.mrb[0].mxu0
        %v494 = vadd.f32 0.0, %v493
        %v495 = vpop.f32.mrb[0].mxu0
        %496 = vmatprep.mubr.f32.mxu0 0.0
        %497 = vmatmul.mubr.f32.gmra.mrb[0].mxu0 %v343
        %v498 = vpop.f32.mrb[0].mxu0
        %v499 = vadd.f32 0.0, %v498
        %v500 = vpop.f32.mrb[0].mxu0
        %501 = vmatprep.mubr.f32.mxu0 0.0
        %502 = vmatmul.mubr.f32.gmra.mrb[0].mxu0 %v344
        %v503 = vpop.f32.mrb[0].mxu0
        %v504 = vadd.f32 0.0, %v503
        %v505 = vpop.f32.mrb[0].mxu0
        %506 = vdwg.mxu0
        %v507 = vld [vmem:[%s3] sm:$0xff]
        %v508 = vld [vmem:[%s3 + $0x8] sm:$0xff]
        %v509 = vld [vmem:[%s3 + $0x10] sm:$0xff]
        %v510 = vld [vmem:[%s3 + $0x18] sm:$0xff]
        %v511 = vld [vmem:[%s3 + $0x20] sm:$0xff]
        %v512 = vld [vmem:[%s3 + $0x28] sm:$0xff]
        %v513 = vld [vmem:[%s3 + $0x30] sm:$0xff]
        %v514 = vld [vmem:[%s3 + $0x38] sm:$0xff]
        %v515 = vld [vmem:[%s3 + $0x40] sm:$0xff]
        %v516 = vld [vmem:[%s3 + $0x48] sm:$0xff]
        %v517 = vld [vmem:[%s3 + $0x50] sm:$0xff]
        %v518 = vld [vmem:[%s3 + $0x58] sm:$0xff]
        %v519 = vld [vmem:[%s3 + $0x60] sm:$0xff]
        %v520 = vld [vmem:[%s3 + $0x68] sm:$0xff]
        %v521 = vld [vmem:[%s3 + $0x70] sm:$0xff]
        %v522 = vld [vmem:[%s3 + $0x78] sm:$0xff]
        %v523 = vmul.f32 %v429, 2.0
        %v524 = vmul.f32 %v434, 2.0
        %v525 = vmul.f32 %v439, 2.0
        %v526 = vmul.f32 %v444, 2.0
        %v527 = vmul.f32 %v449, 2.0
        %v528 = vmul.f32 %v454, 2.0
        %v529 = vmul.f32 %v459, 2.0
        %v530 = vmul.f32 %v464, 2.0
        %v531 = vmul.f32 %v469, 2.0
        %v532 = vmul.f32 %v474, 2.0
        %v533 = vmul.f32 %v479, 2.0
        %v534 = vmul.f32 %v484, 2.0
        %v535 = vmul.f32 %v489, 2.0
        %v536 = vmul.f32 %v494, 2.0
        %v537 = vmul.f32 %v499, 2.0
        %v538 = vmul.f32 %v504, 2.0
        %540 = vset.pattern.permute.xlu0 0
        %541 = vperm.xlu0 %540, %v507
        %v542 = vpop.permute.xlu0 %541
        %545 = vset.pattern.permute.xlu0 0
        %546 = vperm.xlu0 %545, %v508
        %v547 = vpop.permute.xlu0 %546
        %550 = vset.pattern.permute.xlu0 0
        %551 = vperm.xlu0 %550, %v509
        %v552 = vpop.permute.xlu0 %551
        %555 = vset.pattern.permute.xlu0 0
        %556 = vperm.xlu0 %555, %v510
        %v557 = vpop.permute.xlu0 %556
        %560 = vset.pattern.permute.xlu0 0
        %561 = vperm.xlu0 %560, %v511
        %v562 = vpop.permute.xlu0 %561
        %565 = vset.pattern.permute.xlu0 0
        %566 = vperm.xlu0 %565, %v512
        %v567 = vpop.permute.xlu0 %566
        %570 = vset.pattern.permute.xlu0 0
        %571 = vperm.xlu0 %570, %v513
        %v572 = vpop.permute.xlu0 %571
        %575 = vset.pattern.permute.xlu0 0
        %576 = vperm.xlu0 %575, %v514
        %v577 = vpop.permute.xlu0 %576
        %580 = vset.pattern.permute.xlu0 0
        %581 = vperm.xlu0 %580, %v515
        %v582 = vpop.permute.xlu0 %581
        %585 = vset.pattern.permute.xlu0 0
        %586 = vperm.xlu0 %585, %v516
        %v587 = vpop.permute.xlu0 %586
        %590 = vset.pattern.permute.xlu0 0
        %591 = vperm.xlu0 %590, %v517
        %v592 = vpop.permute.xlu0 %591
        %595 = vset.pattern.permute.xlu0 0
        %596 = vperm.xlu0 %595, %v518
        %v597 = vpop.permute.xlu0 %596
        %600 = vset.pattern.permute.xlu0 0
        %601 = vperm.xlu0 %600, %v519
        %v602 = vpop.permute.xlu0 %601
        %605 = vset.pattern.permute.xlu0 0
        %606 = vperm.xlu0 %605, %v520
        %v607 = vpop.permute.xlu0 %606
        %610 = vset.pattern.permute.xlu0 0
        %611 = vperm.xlu0 %610, %v521
        %v612 = vpop.permute.xlu0 %611
        %615 = vset.pattern.permute.xlu0 0
        %616 = vperm.xlu0 %615, %v522
        %v617 = vpop.permute.xlu0 %616
        %v619 = vsub.f32 %v542, %v523
        %v620 = vsub.f32 %v547, %v524
        %v621 = vsub.f32 %v552, %v525
        %v622 = vsub.f32 %v557, %v526
        %v623 = vsub.f32 %v562, %v527
        %v624 = vsub.f32 %v567, %v528
        %v625 = vsub.f32 %v572, %v529
        %v626 = vsub.f32 %v577, %v530
        %v627 = vsub.f32 %v582, %v531
        %v628 = vsub.f32 %v587, %v532
        %v629 = vsub.f32 %v592, %v533
        %v630 = vsub.f32 %v597, %v534
        %v631 = vsub.f32 %v602, %v535
        %v632 = vsub.f32 %v607, %v536
        %v633 = vsub.f32 %v612, %v537
        %v634 = vsub.f32 %v617, %v538
        %v635 = vld [vmem:[%s289] sm:$0x1]
        %v637 = vlaneseq
        %v638 = vshrl.u32 %v637, 7
        %v639 = vsub.s32 0, %v638
        %v640 = vrot.slane %v635, %v639
        %v642 = vadd.f32 %v619, %v640
        %v643 = vadd.f32 %v620, %v640
        %v644 = vadd.f32 %v621, %v640
        %v645 = vadd.f32 %v622, %v640
        %v646 = vadd.f32 %v623, %v640
        %v647 = vadd.f32 %v624, %v640
        %v648 = vadd.f32 %v625, %v640
        %v649 = vadd.f32 %v626, %v640
        %v650 = vadd.f32 %v627, %v640
        %v651 = vadd.f32 %v628, %v640
        %v652 = vadd.f32 %v629, %v640
        %v653 = vadd.f32 %v630, %v640
        %v654 = vadd.f32 %v631, %v640
        %v655 = vadd.f32 %v632, %v640
        %v656 = vadd.f32 %v633, %v640
        %v657 = vadd.f32 %v634, %v640
        %v658 = vmax.f32 %v642, 0.0
        %v659 = vmax.f32 %v643, 0.0
        %v660 = vmax.f32 %v644, 0.0
        %v661 = vmax.f32 %v645, 0.0
        %v662 = vmax.f32 %v646, 0.0
        %v663 = vmax.f32 %v647, 0.0
        %v664 = vmax.f32 %v648, 0.0
        %v665 = vmax.f32 %v649, 0.0
        %v666 = vmax.f32 %v650, 0.0
        %v667 = vmax.f32 %v651, 0.0
        %v668 = vmax.f32 %v652, 0.0
        %v669 = vmax.f32 %v653, 0.0
        %v670 = vmax.f32 %v654, 0.0
        %v671 = vmax.f32 %v655, 0.0
        %v672 = vmax.f32 %v656, 0.0
        %v673 = vmax.f32 %v657, 0.0
        %vm674 = vcmp.eq.s32.totalorder %v292, %v311
        %vm675 = vcmp.eq.s32.totalorder %v293, %v311
        %vm676 = vcmp.eq.s32.totalorder %v294, %v311
        %vm677 = vcmp.eq.s32.totalorder %v295, %v311
        %vm678 = vcmp.eq.s32.totalorder %v296, %v311
        %vm679 = vcmp.eq.s32.totalorder %v297, %v311
        %vm680 = vcmp.eq.s32.totalorder %v298, %v311
        %vm681 = vcmp.eq.s32.totalorder %v299, %v311
        %vm682 = vcmp.eq.s32.totalorder %v300, %v311
        %vm683 = vcmp.eq.s32.totalorder %v301, %v311
        %vm684 = vcmp.eq.s32.totalorder %v302, %v311
        %vm685 = vcmp.eq.s32.totalorder %v303, %v311
        %vm686 = vcmp.eq.s32.totalorder %v304, %v311
        %vm687 = vcmp.eq.s32.totalorder %v305, %v311
        %vm688 = vcmp.eq.s32.totalorder %v306, %v311
        %vm689 = vcmp.eq.s32.totalorder %v307, %v311
        %v690 = vsel %vm674, 0.0, %v658
        %v691 = vsel %vm675, 0.0, %v659
        %v692 = vsel %vm676, 0.0, %v660
        %v693 = vsel %vm677, 0.0, %v661
        %v694 = vsel %vm678, 0.0, %v662
        %v695 = vsel %vm679, 0.0, %v663
        %v696 = vsel %vm680, 0.0, %v664
        %v697 = vsel %vm681, 0.0, %v665
        %v698 = vsel %vm682, 0.0, %v666
        %v699 = vsel %vm683, 0.0, %v667
        %v700 = vsel %vm684, 0.0, %v668
        %v701 = vsel %vm685, 0.0, %v669
        %v702 = vsel %vm686, 0.0, %v670
        %v703 = vsel %vm687, 0.0, %v671
        %v704 = vsel %vm688, 0.0, %v672
        %v705 = vsel %vm689, 0.0, %v673
        %vm706 = vcmp.eq.f32.partialorder %v690, 0.0
        %vm707 = vcmp.eq.f32.partialorder %v691, 0.0
        %vm708 = vcmp.eq.f32.partialorder %v692, 0.0
        %vm709 = vcmp.eq.f32.partialorder %v693, 0.0
        %vm710 = vcmp.eq.f32.partialorder %v694, 0.0
        %vm711 = vcmp.eq.f32.partialorder %v695, 0.0
        %vm712 = vcmp.eq.f32.partialorder %v696, 0.0
        %vm713 = vcmp.eq.f32.partialorder %v697, 0.0
        %vm714 = vcmp.eq.f32.partialorder %v698, 0.0
        %vm715 = vcmp.eq.f32.partialorder %v699, 0.0
        %vm716 = vcmp.eq.f32.partialorder %v700, 0.0
        %vm717 = vcmp.eq.f32.partialorder %v701, 0.0
        %vm718 = vcmp.eq.f32.partialorder %v702, 0.0
        %vm719 = vcmp.eq.f32.partialorder %v703, 0.0
        %vm720 = vcmp.eq.f32.partialorder %v704, 0.0
        %vm721 = vcmp.eq.f32.partialorder %v705, 0.0
        %v722 = vsel %vm706, 1, 0
        %v723 = vsel %vm707, 1, 0
        %v724 = vsel %vm708, 1, 0
        %v725 = vsel %vm709, 1, 0
        %v726 = vsel %vm710, 1, 0
        %v727 = vsel %vm711, 1, 0
        %v728 = vsel %vm712, 1, 0
        %v729 = vsel %vm713, 1, 0
        %v730 = vsel %vm714, 1, 0
        %v731 = vsel %vm715, 1, 0
        %v732 = vsel %vm716, 1, 0
        %v733 = vsel %vm717, 1, 0
        %v734 = vsel %vm718, 1, 0
        %v735 = vsel %vm719, 1, 0
        %v736 = vsel %vm720, 1, 0
        %v737 = vsel %vm721, 1, 0
        %v738 = vcvt.s32.f32 %v722
        %v739 = vcvt.s32.f32 %v723
        %v740 = vcvt.s32.f32 %v724
        %v741 = vcvt.s32.f32 %v725
        %v742 = vcvt.s32.f32 %v726
        %v743 = vcvt.s32.f32 %v727
        %v744 = vcvt.s32.f32 %v728
        %v745 = vcvt.s32.f32 %v729
        %v746 = vcvt.s32.f32 %v730
        %v747 = vcvt.s32.f32 %v731
        %v748 = vcvt.s32.f32 %v732
        %v749 = vcvt.s32.f32 %v733
        %v750 = vcvt.s32.f32 %v734
        %v751 = vcvt.s32.f32 %v735
        %v752 = vcvt.s32.f32 %v736
        %v753 = vcvt.s32.f32 %v737
        %v754 = vsub.f32 1.0, %v738
        %v755 = vsub.f32 1.0, %v739
        %v756 = vsub.f32 1.0, %v740
        %v757 = vsub.f32 1.0, %v741
        %v758 = vsub.f32 1.0, %v742
        %v759 = vsub.f32 1.0, %v743
        %v760 = vsub.f32 1.0, %v744
        %v761 = vsub.f32 1.0, %v745
        %v762 = vsub.f32 1.0, %v746
        %v763 = vsub.f32 1.0, %v747
        %v764 = vsub.f32 1.0, %v748
        %v765 = vsub.f32 1.0, %v749
        %v766 = vsub.f32 1.0, %v750
        %v767 = vsub.f32 1.0, %v751
        %v768 = vsub.f32 1.0, %v752
        %v769 = vsub.f32 1.0, %v753
        %v770 = vmul.f32 %v738, 1e-16
        %v771 = vmul.f32 %v739, 1e-16
        %v772 = vmul.f32 %v740, 1e-16
        %v773 = vmul.f32 %v741, 1e-16
        %v774 = vmul.f32 %v742, 1e-16
        %v775 = vmul.f32 %v743, 1e-16
        %v776 = vmul.f32 %v744, 1e-16
        %v777 = vmul.f32 %v745, 1e-16
        %v778 = vmul.f32 %v746, 1e-16
        %v779 = vmul.f32 %v747, 1e-16
        %v780 = vmul.f32 %v748, 1e-16
        %v781 = vmul.f32 %v749, 1e-16
        %v782 = vmul.f32 %v750, 1e-16
        %v783 = vmul.f32 %v751, 1e-16
        %v784 = vmul.f32 %v752, 1e-16
        %v785 = vmul.f32 %v753, 1e-16
        %v786 = vadd.f32 %v690, %v770
        %v787 = vadd.f32 %v691, %v771
        %v788 = vadd.f32 %v692, %v772
        %v789 = vadd.f32 %v693, %v773
        %v790 = vadd.f32 %v694, %v774
        %v791 = vadd.f32 %v695, %v775
        %v792 = vadd.f32 %v696, %v776
        %v793 = vadd.f32 %v697, %v777
        %v794 = vadd.f32 %v698, %v778
        %v795 = vadd.f32 %v699, %v779
        %v796 = vadd.f32 %v700, %v780
        %v797 = vadd.f32 %v701, %v781
        %v798 = vadd.f32 %v702, %v782
        %v799 = vadd.f32 %v703, %v783
        %v800 = vadd.f32 %v704, %v784
        %v801 = vadd.f32 %v705, %v785
        %v802 = vrsqrt.pop %v786
        %v803 = vmul.f32 %v786, %v802
        %vm804 = vcmp.eq.f32.partialorder %v786, inf
        %v805 = vsel %vm804, %v786, %v803
        %vm806 = vcmp.eq.f32.partialorder %v786, 0.0
        %v807 = vand.u32 %v786, 2147483648
        %v808 = vsel %vm806, %v807, %v805
        %v809 = vrsqrt.pop %v787
        %v810 = vmul.f32 %v787, %v809
        %vm811 = vcmp.eq.f32.partialorder %v787, inf
        %v812 = vsel %vm811, %v787, %v810
        %vm813 = vcmp.eq.f32.partialorder %v787, 0.0
        %v814 = vand.u32 %v787, 2147483648
        %v815 = vsel %vm813, %v814, %v812
        %v816 = vrsqrt.pop %v788
        %v817 = vmul.f32 %v788, %v816
        %vm818 = vcmp.eq.f32.partialorder %v788, inf
        %v819 = vsel %vm818, %v788, %v817
        %vm820 = vcmp.eq.f32.partialorder %v788, 0.0
        %v821 = vand.u32 %v788, 2147483648
        %v822 = vsel %vm820, %v821, %v819
        %v823 = vrsqrt.pop %v789
        %v824 = vmul.f32 %v789, %v823
        %vm825 = vcmp.eq.f32.partialorder %v789, inf
        %v826 = vsel %vm825, %v789, %v824
        %vm827 = vcmp.eq.f32.partialorder %v789, 0.0
        %v828 = vand.u32 %v789, 2147483648
        %v829 = vsel %vm827, %v828, %v826
        %v830 = vrsqrt.pop %v790
        %v831 = vmul.f32 %v790, %v830
        %vm832 = vcmp.eq.f32.partialorder %v790, inf
        %v833 = vsel %vm832, %v790, %v831
        %vm834 = vcmp.eq.f32.partialorder %v790, 0.0
        %v835 = vand.u32 %v790, 2147483648
        %v836 = vsel %vm834, %v835, %v833
        %v837 = vrsqrt.pop %v791
        %v838 = vmul.f32 %v791, %v837
        %vm839 = vcmp.eq.f32.partialorder %v791, inf
        %v840 = vsel %vm839, %v791, %v838
        %vm841 = vcmp.eq.f32.partialorder %v791, 0.0
        %v842 = vand.u32 %v791, 2147483648
        %v843 = vsel %vm841, %v842, %v840
        %v844 = vrsqrt.pop %v792
        %v845 = vmul.f32 %v792, %v844
        %vm846 = vcmp.eq.f32.partialorder %v792, inf
        %v847 = vsel %vm846, %v792, %v845
        %vm848 = vcmp.eq.f32.partialorder %v792, 0.0
        %v849 = vand.u32 %v792, 2147483648
        %v850 = vsel %vm848, %v849, %v847
        %v851 = vrsqrt.pop %v793
        %v852 = vmul.f32 %v793, %v851
        %vm853 = vcmp.eq.f32.partialorder %v793, inf
        %v854 = vsel %vm853, %v793, %v852
        %vm855 = vcmp.eq.f32.partialorder %v793, 0.0
        %v856 = vand.u32 %v793, 2147483648
        %v857 = vsel %vm855, %v856, %v854
        %v858 = vrsqrt.pop %v794
        %v859 = vmul.f32 %v794, %v858
        %vm860 = vcmp.eq.f32.partialorder %v794, inf
        %v861 = vsel %vm860, %v794, %v859
        %vm862 = vcmp.eq.f32.partialorder %v794, 0.0
        %v863 = vand.u32 %v794, 2147483648
        %v864 = vsel %vm862, %v863, %v861
        %v865 = vrsqrt.pop %v795
        %v866 = vmul.f32 %v795, %v865
        %vm867 = vcmp.eq.f32.partialorder %v795, inf
        %v868 = vsel %vm867, %v795, %v866
        %vm869 = vcmp.eq.f32.partialorder %v795, 0.0
        %v870 = vand.u32 %v795, 2147483648
        %v871 = vsel %vm869, %v870, %v868
        %v872 = vrsqrt.pop %v796
        %v873 = vmul.f32 %v796, %v872
        %vm874 = vcmp.eq.f32.partialorder %v796, inf
        %v875 = vsel %vm874, %v796, %v873
        %vm876 = vcmp.eq.f32.partialorder %v796, 0.0
        %v877 = vand.u32 %v796, 2147483648
        %v878 = vsel %vm876, %v877, %v875
        %v879 = vrsqrt.pop %v797
        %v880 = vmul.f32 %v797, %v879
        %vm881 = vcmp.eq.f32.partialorder %v797, inf
        %v882 = vsel %vm881, %v797, %v880
        %vm883 = vcmp.eq.f32.partialorder %v797, 0.0
        %v884 = vand.u32 %v797, 2147483648
        %v885 = vsel %vm883, %v884, %v882
        %v886 = vrsqrt.pop %v798
        %v887 = vmul.f32 %v798, %v886
        %vm888 = vcmp.eq.f32.partialorder %v798, inf
        %v889 = vsel %vm888, %v798, %v887
        %vm890 = vcmp.eq.f32.partialorder %v798, 0.0
        %v891 = vand.u32 %v798, 2147483648
        %v892 = vsel %vm890, %v891, %v889
        %v893 = vrsqrt.pop %v799
        %v894 = vmul.f32 %v799, %v893
        %vm895 = vcmp.eq.f32.partialorder %v799, inf
        %v896 = vsel %vm895, %v799, %v894
        %vm897 = vcmp.eq.f32.partialorder %v799, 0.0
        %v898 = vand.u32 %v799, 2147483648
        %v899 = vsel %vm897, %v898, %v896
        %v900 = vrsqrt.pop %v800
        %v901 = vmul.f32 %v800, %v900
        %vm902 = vcmp.eq.f32.partialorder %v800, inf
        %v903 = vsel %vm902, %v800, %v901
        %vm904 = vcmp.eq.f32.partialorder %v800, 0.0
        %v905 = vand.u32 %v800, 2147483648
        %v906 = vsel %vm904, %v905, %v903
        %v907 = vrsqrt.pop %v801
        %v908 = vmul.f32 %v801, %v907
        %vm909 = vcmp.eq.f32.partialorder %v801, inf
        %v910 = vsel %vm909, %v801, %v908
        %vm911 = vcmp.eq.f32.partialorder %v801, 0.0
        %v912 = vand.u32 %v801, 2147483648
        %v913 = vsel %vm911, %v912, %v910
        %v914 = vmul.f32 %v754, %v808
        %v915 = vmul.f32 %v755, %v815
        %v916 = vmul.f32 %v756, %v822
        %v917 = vmul.f32 %v757, %v829
        %v918 = vmul.f32 %v758, %v836
        %v919 = vmul.f32 %v759, %v843
        %v920 = vmul.f32 %v760, %v850
        %v921 = vmul.f32 %v761, %v857
        %v922 = vmul.f32 %v762, %v864
        %v923 = vmul.f32 %v763, %v871
        %v924 = vmul.f32 %v764, %v878
        %v925 = vmul.f32 %v765, %v885
        %v926 = vmul.f32 %v766, %v892
        %v927 = vmul.f32 %v767, %v899
        %v928 = vmul.f32 %v768, %v906
        %v929 = vmul.f32 %v769, %v913
        %930 = vst [vmem:[#allocation2] sm:$0xff] %v914
        %931 = vst [vmem:[#allocation2 + $0x8] sm:$0xff] %v915
        %932 = vst [vmem:[#allocation2 + $0x10] sm:$0xff] %v916
        %933 = vst [vmem:[#allocation2 + $0x18] sm:$0xff] %v917
        %934 = vst [vmem:[#allocation2 + $0x20] sm:$0xff] %v918
        %935 = vst [vmem:[#allocation2 + $0x28] sm:$0xff] %v919
        %936 = vst [vmem:[#allocation2 + $0x30] sm:$0xff] %v920
        %937 = vst [vmem:[#allocation2 + $0x38] sm:$0xff] %v921
        %938 = vst [vmem:[#allocation2 + $0x40] sm:$0xff] %v922
        %939 = vst [vmem:[#allocation2 + $0x48] sm:$0xff] %v923
        %940 = vst [vmem:[#allocation2 + $0x50] sm:$0xff] %v924
        %941 = vst [vmem:[#allocation2 + $0x58] sm:$0xff] %v925
        %942 = vst [vmem:[#allocation2 + $0x60] sm:$0xff] %v926
        %943 = vst [vmem:[#allocation2 + $0x68] sm:$0xff] %v927
        %944 = vst [vmem:[#allocation2 + $0x70] sm:$0xff] %v928
        %945 = vst [vmem:[#allocation2 + $0x78] sm:$0xff] %v929
        %v946 = vld [vmem:[%s286] sm:$0x1]
        %v947 = vld [vmem:[%s1] sm:$0xff]
        %v948 = vld [vmem:[%s1 + $0x8] sm:$0xff]
        %v949 = vld [vmem:[%s1 + $0x10] sm:$0xff]
        %v950 = vld [vmem:[%s1 + $0x18] sm:$0xff]
        %v951 = vld [vmem:[%s1 + $0x20] sm:$0xff]
        %v952 = vld [vmem:[%s1 + $0x28] sm:$0xff]
        %v953 = vld [vmem:[%s1 + $0x30] sm:$0xff]
        %v954 = vld [vmem:[%s1 + $0x38] sm:$0xff]
        %v955 = vld [vmem:[%s1 + $0x40] sm:$0xff]
        %v956 = vld [vmem:[%s1 + $0x48] sm:$0xff]
        %v957 = vld [vmem:[%s1 + $0x50] sm:$0xff]
        %v958 = vld [vmem:[%s1 + $0x58] sm:$0xff]
        %v959 = vld [vmem:[%s1 + $0x60] sm:$0xff]
        %v960 = vld [vmem:[%s1 + $0x68] sm:$0xff]
        %v961 = vld [vmem:[%s1 + $0x70] sm:$0xff]
        %v962 = vld [vmem:[%s1 + $0x78] sm:$0xff]
        %963 = vset.pattern.permute.xlu0 0
        %964 = vperm.xlu0 %963, %v947
        %v965 = vpop.permute.xlu0 %964
        %966 = vset.pattern.permute.xlu0 0
        %967 = vperm.xlu0 %966, %v948
        %v968 = vpop.permute.xlu0 %967
        %969 = vset.pattern.permute.xlu0 0
        %970 = vperm.xlu0 %969, %v949
        %v971 = vpop.permute.xlu0 %970
        %972 = vset.pattern.permute.xlu0 0
        %973 = vperm.xlu0 %972, %v950
        %v974 = vpop.permute.xlu0 %973
        %975 = vset.pattern.permute.xlu0 0
        %976 = vperm.xlu0 %975, %v951
        %v977 = vpop.permute.xlu0 %976
        %978 = vset.pattern.permute.xlu0 0
        %979 = vperm.xlu0 %978, %v952
        %v980 = vpop.permute.xlu0 %979
        %981 = vset.pattern.permute.xlu0 0
        %982 = vperm.xlu0 %981, %v953
        %v983 = vpop.permute.xlu0 %982
        %984 = vset.pattern.permute.xlu0 0
        %985 = vperm.xlu0 %984, %v954
        %v986 = vpop.permute.xlu0 %985
        %987 = vset.pattern.permute.xlu0 0
        %988 = vperm.xlu0 %987, %v955
        %v989 = vpop.permute.xlu0 %988
        %990 = vset.pattern.permute.xlu0 0
        %991 = vperm.xlu0 %990, %v956
        %v992 = vpop.permute.xlu0 %991
        %993 = vset.pattern.permute.xlu0 0
        %994 = vperm.xlu0 %993, %v957
        %v995 = vpop.permute.xlu0 %994
        %996 = vset.pattern.permute.xlu0 0
        %997 = vperm.xlu0 %996, %v958
        %v998 = vpop.permute.xlu0 %997
        %999 = vset.pattern.permute.xlu0 0
        %1000 = vperm.xlu0 %999, %v959
        %v1001 = vpop.permute.xlu0 %1000
        %1002 = vset.pattern.permute.xlu0 0
        %1003 = vperm.xlu0 %1002, %v960
        %v1004 = vpop.permute.xlu0 %1003
        %1005 = vset.pattern.permute.xlu0 0
        %1006 = vperm.xlu0 %1005, %v961
        %v1007 = vpop.permute.xlu0 %1006
        %1008 = vset.pattern.permute.xlu0 0
        %1009 = vperm.xlu0 %1008, %v962
        %v1010 = vpop.permute.xlu0 %1009
        %v1011 = vlaneseq
        %v1012 = vshrl.u32 %v1011, 7
        %v1013 = vsub.s32 0, %v1012
        %v1014 = vrot.slane %v946, %v1013
        %vm1015 = vcmp.ne.s32.totalorder %v965, %v1014
        %vm1016 = vcmp.ne.s32.totalorder %v968, %v1014
        %vm1017 = vcmp.ne.s32.totalorder %v971, %v1014
        %vm1018 = vcmp.ne.s32.totalorder %v974, %v1014
        %vm1019 = vcmp.ne.s32.totalorder %v977, %v1014
        %vm1020 = vcmp.ne.s32.totalorder %v980, %v1014
        %vm1021 = vcmp.ne.s32.totalorder %v983, %v1014
        %vm1022 = vcmp.ne.s32.totalorder %v986, %v1014
        %vm1023 = vcmp.ne.s32.totalorder %v989, %v1014
        %vm1024 = vcmp.ne.s32.totalorder %v992, %v1014
        %vm1025 = vcmp.ne.s32.totalorder %v995, %v1014
        %vm1026 = vcmp.ne.s32.totalorder %v998, %v1014
        %vm1027 = vcmp.ne.s32.totalorder %v1001, %v1014
        %vm1028 = vcmp.ne.s32.totalorder %v1004, %v1014
        %vm1029 = vcmp.ne.s32.totalorder %v1007, %v1014
        %vm1030 = vcmp.ne.s32.totalorder %v1010, %v1014
        %v1031 = vsel %vm312, 1, 0
        %v1032 = vsel %vm313, 1, 0
        %v1033 = vsel %vm314, 1, 0
        %v1034 = vsel %vm315, 1, 0
        %v1035 = vsel %vm316, 1, 0
        %v1036 = vsel %vm317, 1, 0
        %v1037 = vsel %vm318, 1, 0
        %v1038 = vsel %vm319, 1, 0
        %v1039 = vsel %vm320, 1, 0
        %v1040 = vsel %vm321, 1, 0
        %v1041 = vsel %vm322, 1, 0
        %v1042 = vsel %vm323, 1, 0
        %v1043 = vsel %vm324, 1, 0
        %v1044 = vsel %vm325, 1, 0
        %v1045 = vsel %vm326, 1, 0
        %v1046 = vsel %vm327, 1, 0
        %vm1047 = vcmp.eq.s32.totalorder %v1031, 1
        %vm1048 = vcmp.eq.s32.totalorder %v1032, 1
        %vm1049 = vcmp.eq.s32.totalorder %v1033, 1
        %vm1050 = vcmp.eq.s32.totalorder %v1034, 1
        %vm1051 = vcmp.eq.s32.totalorder %v1035, 1
        %vm1052 = vcmp.eq.s32.totalorder %v1036, 1
        %vm1053 = vcmp.eq.s32.totalorder %v1037, 1
        %vm1054 = vcmp.eq.s32.totalorder %v1038, 1
        %vm1055 = vcmp.eq.s32.totalorder %v1039, 1
        %vm1056 = vcmp.eq.s32.totalorder %v1040, 1
        %vm1057 = vcmp.eq.s32.totalorder %v1041, 1
        %vm1058 = vcmp.eq.s32.totalorder %v1042, 1
        %vm1059 = vcmp.eq.s32.totalorder %v1043, 1
        %vm1060 = vcmp.eq.s32.totalorder %v1044, 1
        %vm1061 = vcmp.eq.s32.totalorder %v1045, 1
        %vm1062 = vcmp.eq.s32.totalorder %v1046, 1
        %vm1063 = vmand %vm1015, %vm1047
        %vm1064 = vmand %vm1016, %vm1048
        %vm1065 = vmand %vm1017, %vm1049
        %vm1066 = vmand %vm1018, %vm1050
        %vm1067 = vmand %vm1019, %vm1051
        %vm1068 = vmand %vm1020, %vm1052
        %vm1069 = vmand %vm1021, %vm1053
        %vm1070 = vmand %vm1022, %vm1054
        %vm1071 = vmand %vm1023, %vm1055
        %vm1072 = vmand %vm1024, %vm1056
        %vm1073 = vmand %vm1025, %vm1057
        %vm1074 = vmand %vm1026, %vm1058
        %vm1075 = vmand %vm1027, %vm1059
        %vm1076 = vmand %vm1028, %vm1060
        %vm1077 = vmand %vm1029, %vm1061
        %vm1078 = vmand %vm1030, %vm1062
        %v1079 = vsel %vm1063, %v914, -inf
        %v1080 = vsel %vm1064, %v915, -inf
        %v1081 = vsel %vm1065, %v916, -inf
        %v1082 = vsel %vm1066, %v917, -inf
        %v1083 = vsel %vm1067, %v918, -inf
        %v1084 = vsel %vm1068, %v919, -inf
        %v1085 = vsel %vm1069, %v920, -inf
        %v1086 = vsel %vm1070, %v921, -inf
        %v1087 = vsel %vm1071, %v922, -inf
        %v1088 = vsel %vm1072, %v923, -inf
        %v1089 = vsel %vm1073, %v924, -inf
        %v1090 = vsel %vm1074, %v925, -inf
        %v1091 = vsel %vm1075, %v926, -inf
        %v1092 = vsel %vm1076, %v927, -inf
        %v1093 = vsel %vm1077, %v928, -inf
        %v1094 = vsel %vm1078, %v929, -inf
        %1095 = vst [vmem:[#allocation3] sm:$0xff] %v1079
        %1096 = vst [vmem:[#allocation3 + $0x8] sm:$0xff] %v1080
        %1097 = vst [vmem:[#allocation3 + $0x10] sm:$0xff] %v1081
        %1098 = vst [vmem:[#allocation3 + $0x18] sm:$0xff] %v1082
        %1099 = vst [vmem:[#allocation3 + $0x20] sm:$0xff] %v1083
        %1100 = vst [vmem:[#allocation3 + $0x28] sm:$0xff] %v1084
        %1101 = vst [vmem:[#allocation3 + $0x30] sm:$0xff] %v1085
        %1102 = vst [vmem:[#allocation3 + $0x38] sm:$0xff] %v1086
        %1103 = vst [vmem:[#allocation3 + $0x40] sm:$0xff] %v1087
        %1104 = vst [vmem:[#allocation3 + $0x48] sm:$0xff] %v1088
        %1105 = vst [vmem:[#allocation3 + $0x50] sm:$0xff] %v1089
        %1106 = vst [vmem:[#allocation3 + $0x58] sm:$0xff] %v1090
        %1107 = vst [vmem:[#allocation3 + $0x60] sm:$0xff] %v1091
        %1108 = vst [vmem:[#allocation3 + $0x68] sm:$0xff] %v1092
        %1109 = vst [vmem:[#allocation3 + $0x70] sm:$0xff] %v1093
        %1110 = vst [vmem:[#allocation3 + $0x78] sm:$0xff] %v1094
        %v1111 = vmax.f32 %v1079, %v1083
        %v1112 = vmax.f32 %v1080, %v1084
        %v1113 = vmax.f32 %v1081, %v1085
        %v1114 = vmax.f32 %v1082, %v1086
        %v1115 = vmax.f32 %v1111, %v1087
        %v1116 = vmax.f32 %v1112, %v1088
        %v1117 = vmax.f32 %v1113, %v1089
        %v1118 = vmax.f32 %v1114, %v1090
        %v1119 = vmax.f32 %v1115, %v1091
        %v1120 = vmax.f32 %v1116, %v1092
        %v1121 = vmax.f32 %v1117, %v1093
        %v1122 = vmax.f32 %v1118, %v1094
        %v1123 = vmax.f32 %v1119, %v1120
        %v1124 = vmax.f32 %v1121, %v1122
        %v1125 = vmax.f32 %v1123, %v1124
        %v1126 = vrot.slane %v1125, 4
        %v1127 = vmax.f32 %v1125, %v1126
        %v1128 = vrot.slane %v1127, 2
        %v1129 = vmax.f32 %v1127, %v1128
        %v1130 = vrot.slane %v1129, 1
        %v1131 = vmax.f32 %v1129, %v1130
        %v1132 = vmax.f32 %v1131, 0.0
        %s1133 = smul.u32 %s36, 4
        %s1134 = sld [smem:[#allocation5 + %s1133]]
        %v1135 = vstv %s1134
        %vm1136 = vcmp.eq.s32.totalorder %v946, %v1135
        %v1137 = vstv %s1133
        %vm1138 = vcmp.ne.s32.totalorder %v311, %v1137
        %vm1139 = vmand %vm1136, %vm1138
        %vm1140 = vmand %vm1139, %vm328
        %v1141 = vsel %vm1140, 1, 0
        %v1142 = vcvt.s32.f32 %v1141
        %p1143 = scmp.lt.s32.totalorder %s1133, 8
        %vm1144 = vcmask 1040384
        %v1145 = vsel %vm1144, %v1142, 0.0
        %1146 = vadd.xlane.f32.xlu0 %v1145
        %v1147 = vpop.xlane.xlu0 %1146
        %v1148 = vrot.slane %v1147, 4
        %v1149 = vadd.f32 %v1147, %v1148
        %v1150 = vrot.slane %v1149, 2
        %v1151 = vadd.f32 %v1149, %v1150
        %v1152 = vrot.slane %v1151, 1
        %v1153 = vadd.f32 %v1151, %v1152
        %s1154 = vtos %v1153
        %p1155 = scmp.gt.f32.partialorder %s1154, 0.0
        %p1156 = pnand %p1143, %p1155
        %p1157 = pneg %p1156
        // Predicated region
        $region41: #{tpu_custom_call.1} parent=39 // pred_check
          _
        $region42: #{tpu_custom_call.1} parent=39 // pred_check_branch
          %1159 = sbr.rel (%p1156) target = $region44
        $region43: #{tpu_custom_call.1} parent=39 // pred_region
          %s1160 = scalar_lea.vmem [#allocation2], %s1133
          %v1161 = vld [vmem:[%s1160] sm:$0x1]
          %v1162 = vld [vmem:[#allocation3] sm:$0xff]
          %v1163 = vld [vmem:[#allocation3 + $0x8] sm:$0xff]
          %v1164 = vld [vmem:[#allocation3 + $0x10] sm:$0xff]
          %v1165 = vld [vmem:[#allocation3 + $0x18] sm:$0xff]
          %v1166 = vld [vmem:[#allocation3 + $0x20] sm:$0xff]
          %v1167 = vld [vmem:[#allocation3 + $0x28] sm:$0xff]
          %v1168 = vld [vmem:[#allocation3 + $0x30] sm:$0xff]
          %v1169 = vld [vmem:[#allocation3 + $0x38] sm:$0xff]
          %v1170 = vld [vmem:[#allocation3 + $0x40] sm:$0xff]
          %v1171 = vld [vmem:[#allocation3 + $0x48] sm:$0xff]
          %v1172 = vld [vmem:[#allocation3 + $0x50] sm:$0xff]
          %v1173 = vld [vmem:[#allocation3 + $0x58] sm:$0xff]
          %v1174 = vld [vmem:[#allocation3 + $0x60] sm:$0xff]
          %v1175 = vld [vmem:[#allocation3 + $0x68] sm:$0xff]
          %v1176 = vld [vmem:[#allocation3 + $0x70] sm:$0xff]
          %v1177 = vld [vmem:[#allocation3 + $0x78] sm:$0xff]
          %v1178 = vlaneseq
          %v1179 = vshrl.u32 %v1178, 7
          %v1180 = vsub.s32 0, %v1179
          %v1181 = vrot.slane %v1161, %v1180
          %vm1182 = vcmp.gt.f32.partialorder %v1162, %v1181
          %vm1183 = vcmp.gt.f32.partialorder %v1163, %v1181
          %vm1184 = vcmp.gt.f32.partialorder %v1164, %v1181
          %vm1185 = vcmp.gt.f32.partialorder %v1165, %v1181
          %vm1186 = vcmp.gt.f32.partialorder %v1166, %v1181
          %vm1187 = vcmp.gt.f32.partialorder %v1167, %v1181
          %vm1188 = vcmp.gt.f32.partialorder %v1168, %v1181
          %vm1189 = vcmp.gt.f32.partialorder %v1169, %v1181
          %vm1190 = vcmp.gt.f32.partialorder %v1170, %v1181
          %vm1191 = vcmp.gt.f32.partialorder %v1171, %v1181
          %vm1192 = vcmp.gt.f32.partialorder %v1172, %v1181
          %vm1193 = vcmp.gt.f32.partialorder %v1173, %v1181
          %vm1194 = vcmp.gt.f32.partialorder %v1174, %v1181
          %vm1195 = vcmp.gt.f32.partialorder %v1175, %v1181
          %vm1196 = vcmp.gt.f32.partialorder %v1176, %v1181
          %vm1197 = vcmp.gt.f32.partialorder %v1177, %v1181
          %v1198 = vsel %vm1182, %v1162, inf
          %v1199 = vsel %vm1183, %v1163, inf
          %v1200 = vsel %vm1184, %v1164, inf
          %v1201 = vsel %vm1185, %v1165, inf
          %v1202 = vsel %vm1186, %v1166, inf
          %v1203 = vsel %vm1187, %v1167, inf
          %v1204 = vsel %vm1188, %v1168, inf
          %v1205 = vsel %vm1189, %v1169, inf
          %v1206 = vsel %vm1190, %v1170, inf
          %v1207 = vsel %vm1191, %v1171, inf
          %v1208 = vsel %vm1192, %v1172, inf
          %v1209 = vsel %vm1193, %v1173, inf
          %v1210 = vsel %vm1194, %v1174, inf
          %v1211 = vsel %vm1195, %v1175, inf
          %v1212 = vsel %vm1196, %v1176, inf
          %v1213 = vsel %vm1197, %v1177, inf
          %v1214 = vmin.f32 %v1198, %v1202
          %v1215 = vmin.f32 %v1199, %v1203
          %v1216 = vmin.f32 %v1200, %v1204
          %v1217 = vmin.f32 %v1201, %v1205
          %v1218 = vmin.f32 %v1214, %v1206
          %v1219 = vmin.f32 %v1215, %v1207
          %v1220 = vmin.f32 %v1216, %v1208
          %v1221 = vmin.f32 %v1217, %v1209
          %v1222 = vmin.f32 %v1218, %v1210
          %v1223 = vmin.f32 %v1219, %v1211
          %v1224 = vmin.f32 %v1220, %v1212
          %v1225 = vmin.f32 %v1221, %v1213
          %v1226 = vmin.f32 %v1222, %v1223
          %v1227 = vmin.f32 %v1224, %v1225
          %v1228 = vmin.f32 %v1226, %v1227
          %v1229 = vrot.slane %v1228, 4
          %v1230 = vmin.f32 %v1228, %v1229
          %v1231 = vrot.slane %v1230, 2
          %v1232 = vmin.f32 %v1230, %v1231
          %v1233 = vrot.slane %v1232, 1
          %v1234 = vmin.f32 %v1232, %v1233
          %vm1235 = vcmp.lt.f32.partialorder %v1234, inf
          %v1236 = vsel %vm1235, %v1234, %v1132
          %v1237 = vsub.f32 %v1161, %v1236
          %v1238 = vadd.f32 %v1237, 5.0
          %v1239 = vmul.f32 %v1238, %v1142
          %v1240 = vmax.f32 %v1239, 0.0
          %v1241 = vadd.f32 %v1240, 0.0
          %v1242 = vadd.f32 %v1142, 0.0
        $region44: #{tpu_custom_call.1} parent=39 // pred_fallthru
          %v1243 = vphi 0, %v1241
          %v1244 = vphi 0, %v1242
        // Predicated region
        $region45: #{tpu_custom_call.1} parent=39 // pred_check
          %p1245 = pneg %p1156
        $region46: #{tpu_custom_call.1} parent=39 // pred_check_branch
          %1247 = sbr.rel (%p1245) target = $region48
        $region47: #{tpu_custom_call.1} parent=39 // pred_region
          _
        $region48: #{tpu_custom_call.1} parent=39 // pred_fallthru
          %v1248 = vphi %v1243, 0.0
          %v1249 = vphi %v1244, 0.0
        %s1250 = sadd.s32 %s1133, 1
        %s1251 = sld [smem:[#allocation5 + %s1250]]
        %v1252 = vstv %s1251
        %vm1253 = vcmp.eq.s32.totalorder %v946, %v1252
        %v1254 = vstv %s1250
        %vm1255 = vcmp.ne.s32.totalorder %v311, %v1254
        %vm1256 = vmand %vm1253, %vm1255
        %vm1257 = vmand %vm1256, %vm328
        %v1258 = vsel %vm1257, 1, 0
        %v1259 = vcvt.s32.f32 %v1258
        %p1260 = scmp.lt.s32.totalorder %s1250, 8
        %v1261 = vsel %vm1144, %v1259, 0.0
        %1262 = vadd.xlane.f32.xlu0 %v1261
        %v1263 = vpop.xlane.xlu0 %1262
        %v1264 = vrot.slane %v1263, 4
        %v1265 = vadd.f32 %v1263, %v1264
        %v1266 = vrot.slane %v1265, 2
        %v1267 = vadd.f32 %v1265, %v1266
        %v1268 = vrot.slane %v1267, 1
        %v1269 = vadd.f32 %v1267, %v1268
        %s1270 = vtos %v1269
        %p1271 = scmp.gt.f32.partialorder %s1270, 0.0
        %p1272 = pnand %p1260, %p1271
        %p1273 = pneg %p1272
        // Predicated region
        $region49: #{tpu_custom_call.1} parent=39 // pred_check
          _
        $region50: #{tpu_custom_call.1} parent=39 // pred_check_branch
          %1275 = sbr.rel (%p1272) target = $region52
        $region51: #{tpu_custom_call.1} parent=39 // pred_region
          %s1276 = scalar_lea.vmem [#allocation2], %s1250
          %v1277 = vld [vmem:[%s1276] sm:$0x1]
          %v1278 = vld [vmem:[#allocation3] sm:$0xff]
          %v1279 = vld [vmem:[#allocation3 + $0x8] sm:$0xff]
          %v1280 = vld [vmem:[#allocation3 + $0x10] sm:$0xff]
          %v1281 = vld [vmem:[#allocation3 + $0x18] sm:$0xff]
          %v1282 = vld [vmem:[#allocation3 + $0x20] sm:$0xff]
          %v1283 = vld [vmem:[#allocation3 + $0x28] sm:$0xff]
          %v1284 = vld [vmem:[#allocation3 + $0x30] sm:$0xff]
          %v1285 = vld [vmem:[#allocation3 + $0x38] sm:$0xff]
          %v1286 = vld [vmem:[#allocation3 + $0x40] sm:$0xff]
          %v1287 = vld [vmem:[#allocation3 + $0x48] sm:$0xff]
          %v1288 = vld [vmem:[#allocation3 + $0x50] sm:$0xff]
          %v1289 = vld [vmem:[#allocation3 + $0x58] sm:$0xff]
          %v1290 = vld [vmem:[#allocation3 + $0x60] sm:$0xff]
          %v1291 = vld [vmem:[#allocation3 + $0x68] sm:$0xff]
          %v1292 = vld [vmem:[#allocation3 + $0x70] sm:$0xff]
          %v1293 = vld [vmem:[#allocation3 + $0x78] sm:$0xff]
          %v1294 = vlaneseq
          %v1295 = vshrl.u32 %v1294, 7
          %v1296 = vsub.s32 0, %v1295
          %v1297 = vrot.slane %v1277, %v1296
          %vm1298 = vcmp.gt.f32.partialorder %v1278, %v1297
          %vm1299 = vcmp.gt.f32.partialorder %v1279, %v1297
          %vm1300 = vcmp.gt.f32.partialorder %v1280, %v1297
          %vm1301 = vcmp.gt.f32.partialorder %v1281, %v1297
          %vm1302 = vcmp.gt.f32.partialorder %v1282, %v1297
          %vm1303 = vcmp.gt.f32.partialorder %v1283, %v1297
          %vm1304 = vcmp.gt.f32.partialorder %v1284, %v1297
          %vm1305 = vcmp.gt.f32.partialorder %v1285, %v1297
          %vm1306 = vcmp.gt.f32.partialorder %v1286, %v1297
          %vm1307 = vcmp.gt.f32.partialorder %v1287, %v1297
          %vm1308 = vcmp.gt.f32.partialorder %v1288, %v1297
          %vm1309 = vcmp.gt.f32.partialorder %v1289, %v1297
          %vm1310 = vcmp.gt.f32.partialorder %v1290, %v1297
          %vm1311 = vcmp.gt.f32.partialorder %v1291, %v1297
          %vm1312 = vcmp.gt.f32.partialorder %v1292, %v1297
          %vm1313 = vcmp.gt.f32.partialorder %v1293, %v1297
          %v1314 = vsel %vm1298, %v1278, inf
          %v1315 = vsel %vm1299, %v1279, inf
          %v1316 = vsel %vm1300, %v1280, inf
          %v1317 = vsel %vm1301, %v1281, inf
          %v1318 = vsel %vm1302, %v1282, inf
          %v1319 = vsel %vm1303, %v1283, inf
          %v1320 = vsel %vm1304, %v1284, inf
          %v1321 = vsel %vm1305, %v1285, inf
          %v1322 = vsel %vm1306, %v1286, inf
          %v1323 = vsel %vm1307, %v1287, inf
          %v1324 = vsel %vm1308, %v1288, inf
          %v1325 = vsel %vm1309, %v1289, inf
          %v1326 = vsel %vm1310, %v1290, inf
          %v1327 = vsel %vm1311, %v1291, inf
          %v1328 = vsel %vm1312, %v1292, inf
          %v1329 = vsel %vm1313, %v1293, inf
          %v1330 = vmin.f32 %v1314, %v1318
          %v1331 = vmin.f32 %v1315, %v1319
          %v1332 = vmin.f32 %v1316, %v1320
          %v1333 = vmin.f32 %v1317, %v1321
          %v1334 = vmin.f32 %v1330, %v1322
          %v1335 = vmin.f32 %v1331, %v1323
          %v1336 = vmin.f32 %v1332, %v1324
          %v1337 = vmin.f32 %v1333, %v1325
          %v1338 = vmin.f32 %v1334, %v1326
          %v1339 = vmin.f32 %v1335, %v1327
          %v1340 = vmin.f32 %v1336, %v1328
          %v1341 = vmin.f32 %v1337, %v1329
          %v1342 = vmin.f32 %v1338, %v1339
          %v1343 = vmin.f32 %v1340, %v1341
          %v1344 = vmin.f32 %v1342, %v1343
          %v1345 = vrot.slane %v1344, 4
          %v1346 = vmin.f32 %v1344, %v1345
          %v1347 = vrot.slane %v1346, 2
          %v1348 = vmin.f32 %v1346, %v1347
          %v1349 = vrot.slane %v1348, 1
          %v1350 = vmin.f32 %v1348, %v1349
          %vm1351 = vcmp.lt.f32.partialorder %v1350, inf
          %v1352 = vsel %vm1351, %v1350, %v1132
          %v1353 = vsub.f32 %v1277, %v1352
          %v1354 = vadd.f32 %v1353, 5.0
          %v1355 = vmul.f32 %v1354, %v1259
          %v1356 = vmax.f32 %v1355, 0.0
          %v1357 = vadd.f32 %v1248, %v1356
          %v1358 = vadd.f32 %v1249, %v1259
        $region52: #{tpu_custom_call.1} parent=39 // pred_fallthru
          %v1359 = vphi 0, %v1357
          %v1360 = vphi 0, %v1358
        // Predicated region
        $region53: #{tpu_custom_call.1} parent=39 // pred_check
          %p1361 = pneg %p1272
        $region54: #{tpu_custom_call.1} parent=39 // pred_check_branch
          %1363 = sbr.rel (%p1361) target = $region56
        $region55: #{tpu_custom_call.1} parent=39 // pred_region
          _
        $region56: #{tpu_custom_call.1} parent=39 // pred_fallthru
          %v1364 = vphi %v1359, %v1248
          %v1365 = vphi %v1360, %v1249
        %s1366 = sadd.s32 %s1133, 2
        %s1367 = sld [smem:[#allocation5 + %s1366]]
        %v1368 = vstv %s1367
        %vm1369 = vcmp.eq.s32.totalorder %v946, %v1368
        %v1370 = vstv %s1366
        %vm1371 = vcmp.ne.s32.totalorder %v311, %v1370
        %vm1372 = vmand %vm1369, %vm1371
        %vm1373 = vmand %vm1372, %vm328
        %v1374 = vsel %vm1373, 1, 0
        %v1375 = vcvt.s32.f32 %v1374
        %p1376 = scmp.lt.s32.totalorder %s1366, 8
        %v1377 = vsel %vm1144, %v1375, 0.0
        %1378 = vadd.xlane.f32.xlu0 %v1377
        %v1379 = vpop.xlane.xlu0 %1378
        %v1380 = vrot.slane %v1379, 4
        %v1381 = vadd.f32 %v1379, %v1380
        %v1382 = vrot.slane %v1381, 2
        %v1383 = vadd.f32 %v1381, %v1382
        %v1384 = vrot.slane %v1383, 1
        %v1385 = vadd.f32 %v1383, %v1384
        %s1386 = vtos %v1385
        %p1387 = scmp.gt.f32.partialorder %s1386, 0.0
        %p1388 = pnand %p1376, %p1387
        %p1389 = pneg %p1388
        // Predicated region
        $region57: #{tpu_custom_call.1} parent=39 // pred_check
          _
        $region58: #{tpu_custom_call.1} parent=39 // pred_check_branch
          %1391 = sbr.rel (%p1388) target = $region60
        $region59: #{tpu_custom_call.1} parent=39 // pred_region
          %s1392 = scalar_lea.vmem [#allocation2], %s1366
          %v1393 = vld [vmem:[%s1392] sm:$0x1]
          %v1394 = vld [vmem:[#allocation3] sm:$0xff]
          %v1395 = vld [vmem:[#allocation3 + $0x8] sm:$0xff]
          %v1396 = vld [vmem:[#allocation3 + $0x10] sm:$0xff]
          %v1397 = vld [vmem:[#allocation3 + $0x18] sm:$0xff]
          %v1398 = vld [vmem:[#allocation3 + $0x20] sm:$0xff]
          %v1399 = vld [vmem:[#allocation3 + $0x28] sm:$0xff]
          %v1400 = vld [vmem:[#allocation3 + $0x30] sm:$0xff]
          %v1401 = vld [vmem:[#allocation3 + $0x38] sm:$0xff]
          %v1402 = vld [vmem:[#allocation3 + $0x40] sm:$0xff]
          %v1403 = vld [vmem:[#allocation3 + $0x48] sm:$0xff]
          %v1404 = vld [vmem:[#allocation3 + $0x50] sm:$0xff]
          %v1405 = vld [vmem:[#allocation3 + $0x58] sm:$0xff]
          %v1406 = vld [vmem:[#allocation3 + $0x60] sm:$0xff]
          %v1407 = vld [vmem:[#allocation3 + $0x68] sm:$0xff]
          %v1408 = vld [vmem:[#allocation3 + $0x70] sm:$0xff]
          %v1409 = vld [vmem:[#allocation3 + $0x78] sm:$0xff]
          %v1410 = vlaneseq
          %v1411 = vshrl.u32 %v1410, 7
          %v1412 = vsub.s32 0, %v1411
          %v1413 = vrot.slane %v1393, %v1412
          %vm1414 = vcmp.gt.f32.partialorder %v1394, %v1413
          %vm1415 = vcmp.gt.f32.partialorder %v1395, %v1413
          %vm1416 = vcmp.gt.f32.partialorder %v1396, %v1413
          %vm1417 = vcmp.gt.f32.partialorder %v1397, %v1413
          %vm1418 = vcmp.gt.f32.partialorder %v1398, %v1413
          %vm1419 = vcmp.gt.f32.partialorder %v1399, %v1413
          %vm1420 = vcmp.gt.f32.partialorder %v1400, %v1413
          %vm1421 = vcmp.gt.f32.partialorder %v1401, %v1413
          %vm1422 = vcmp.gt.f32.partialorder %v1402, %v1413
          %vm1423 = vcmp.gt.f32.partialorder %v1403, %v1413
          %vm1424 = vcmp.gt.f32.partialorder %v1404, %v1413
          %vm1425 = vcmp.gt.f32.partialorder %v1405, %v1413
          %vm1426 = vcmp.gt.f32.partialorder %v1406, %v1413
          %vm1427 = vcmp.gt.f32.partialorder %v1407, %v1413
          %vm1428 = vcmp.gt.f32.partialorder %v1408, %v1413
          %vm1429 = vcmp.gt.f32.partialorder %v1409, %v1413
          %v1430 = vsel %vm1414, %v1394, inf
          %v1431 = vsel %vm1415, %v1395, inf
          %v1432 = vsel %vm1416, %v1396, inf
          %v1433 = vsel %vm1417, %v1397, inf
          %v1434 = vsel %vm1418, %v1398, inf
          %v1435 = vsel %vm1419, %v1399, inf
          %v1436 = vsel %vm1420, %v1400, inf
          %v1437 = vsel %vm1421, %v1401, inf
          %v1438 = vsel %vm1422, %v1402, inf
          %v1439 = vsel %vm1423, %v1403, inf
          %v1440 = vsel %vm1424, %v1404, inf
          %v1441 = vsel %vm1425, %v1405, inf
          %v1442 = vsel %vm1426, %v1406, inf
          %v1443 = vsel %vm1427, %v1407, inf
          %v1444 = vsel %vm1428, %v1408, inf
          %v1445 = vsel %vm1429, %v1409, inf
          %v1446 = vmin.f32 %v1430, %v1434
          %v1447 = vmin.f32 %v1431, %v1435
          %v1448 = vmin.f32 %v1432, %v1436
          %v1449 = vmin.f32 %v1433, %v1437
          %v1450 = vmin.f32 %v1446, %v1438
          %v1451 = vmin.f32 %v1447, %v1439
          %v1452 = vmin.f32 %v1448, %v1440
          %v1453 = vmin.f32 %v1449, %v1441
          %v1454 = vmin.f32 %v1450, %v1442
          %v1455 = vmin.f32 %v1451, %v1443
          %v1456 = vmin.f32 %v1452, %v1444
          %v1457 = vmin.f32 %v1453, %v1445
          %v1458 = vmin.f32 %v1454, %v1455
          %v1459 = vmin.f32 %v1456, %v1457
          %v1460 = vmin.f32 %v1458, %v1459
          %v1461 = vrot.slane %v1460, 4
          %v1462 = vmin.f32 %v1460, %v1461
          %v1463 = vrot.slane %v1462, 2
          %v1464 = vmin.f32 %v1462, %v1463
          %v1465 = vrot.slane %v1464, 1
          %v1466 = vmin.f32 %v1464, %v1465
          %vm1467 = vcmp.lt.f32.partialorder %v1466, inf
          %v1468 = vsel %vm1467, %v1466, %v1132
          %v1469 = vsub.f32 %v1393, %v1468
          %v1470 = vadd.f32 %v1469, 5.0
          %v1471 = vmul.f32 %v1470, %v1375
          %v1472 = vmax.f32 %v1471, 0.0
          %v1473 = vadd.f32 %v1364, %v1472
          %v1474 = vadd.f32 %v1365, %v1375
        $region60: #{tpu_custom_call.1} parent=39 // pred_fallthru
          %v1475 = vphi 0, %v1473
          %v1476 = vphi 0, %v1474
        // Predicated region
        $region61: #{tpu_custom_call.1} parent=39 // pred_check
          %p1477 = pneg %p1388
        $region62: #{tpu_custom_call.1} parent=39 // pred_check_branch
          %1479 = sbr.rel (%p1477) target = $region64
        $region63: #{tpu_custom_call.1} parent=39 // pred_region
          _
        $region64: #{tpu_custom_call.1} parent=39 // pred_fallthru
          %v1480 = vphi %v1475, %v1364
          %v1481 = vphi %v1476, %v1365
        %s1482 = sadd.s32 %s1133, 3
        %s1483 = sld [smem:[#allocation5 + %s1482]]
        %v1484 = vstv %s1483
        %vm1485 = vcmp.eq.s32.totalorder %v946, %v1484
        %v1486 = vstv %s1482
        %vm1487 = vcmp.ne.s32.totalorder %v311, %v1486
        %vm1488 = vmand %vm1485, %vm1487
        %vm1489 = vmand %vm1488, %vm328
        %v1490 = vsel %vm1489, 1, 0
        %v1491 = vcvt.s32.f32 %v1490
        %p1492 = scmp.lt.s32.totalorder %s1482, 8
        %v1493 = vsel %vm1144, %v1491, 0.0
        %1494 = vadd.xlane.f32.xlu0 %v1493
        %v1495 = vpop.xlane.xlu0 %1494
        %v1496 = vrot.slane %v1495, 4
        %v1497 = vadd.f32 %v1495, %v1496
        %v1498 = vrot.slane %v1497, 2
        %v1499 = vadd.f32 %v1497, %v1498
        %v1500 = vrot.slane %v1499, 1
        %v1501 = vadd.f32 %v1499, %v1500
        %s1502 = vtos %v1501
        %p1503 = scmp.gt.f32.partialorder %s1502, 0.0
        %p1504 = pnand %p1492, %p1503
        %p1505 = pneg %p1504
        // Predicated region
        $region65: #{tpu_custom_call.1} parent=39 // pred_check
          _
        $region66: #{tpu_custom_call.1} parent=39 // pred_check_branch
          %1507 = sbr.rel (%p1504) target = $region68
        $region67: #{tpu_custom_call.1} parent=39 // pred_region
          %s1508 = scalar_lea.vmem [#allocation2], %s1482
          %v1509 = vld [vmem:[%s1508] sm:$0x1]
          %v1510 = vld [vmem:[#allocation3] sm:$0xff]
          %v1511 = vld [vmem:[#allocation3 + $0x8] sm:$0xff]
          %v1512 = vld [vmem:[#allocation3 + $0x10] sm:$0xff]
          %v1513 = vld [vmem:[#allocation3 + $0x18] sm:$0xff]
          %v1514 = vld [vmem:[#allocation3 + $0x20] sm:$0xff]
          %v1515 = vld [vmem:[#allocation3 + $0x28] sm:$0xff]
          %v1516 = vld [vmem:[#allocation3 + $0x30] sm:$0xff]
          %v1517 = vld [vmem:[#allocation3 + $0x38] sm:$0xff]
          %v1518 = vld [vmem:[#allocation3 + $0x40] sm:$0xff]
          %v1519 = vld [vmem:[#allocation3 + $0x48] sm:$0xff]
          %v1520 = vld [vmem:[#allocation3 + $0x50] sm:$0xff]
          %v1521 = vld [vmem:[#allocation3 + $0x58] sm:$0xff]
          %v1522 = vld [vmem:[#allocation3 + $0x60] sm:$0xff]
          %v1523 = vld [vmem:[#allocation3 + $0x68] sm:$0xff]
          %v1524 = vld [vmem:[#allocation3 + $0x70] sm:$0xff]
          %v1525 = vld [vmem:[#allocation3 + $0x78] sm:$0xff]
          %v1526 = vlaneseq
          %v1527 = vshrl.u32 %v1526, 7
          %v1528 = vsub.s32 0, %v1527
          %v1529 = vrot.slane %v1509, %v1528
          %vm1530 = vcmp.gt.f32.partialorder %v1510, %v1529
          %vm1531 = vcmp.gt.f32.partialorder %v1511, %v1529
          %vm1532 = vcmp.gt.f32.partialorder %v1512, %v1529
          %vm1533 = vcmp.gt.f32.partialorder %v1513, %v1529
          %vm1534 = vcmp.gt.f32.partialorder %v1514, %v1529
          %vm1535 = vcmp.gt.f32.partialorder %v1515, %v1529
          %vm1536 = vcmp.gt.f32.partialorder %v1516, %v1529
          %vm1537 = vcmp.gt.f32.partialorder %v1517, %v1529
          %vm1538 = vcmp.gt.f32.partialorder %v1518, %v1529
          %vm1539 = vcmp.gt.f32.partialorder %v1519, %v1529
          %vm1540 = vcmp.gt.f32.partialorder %v1520, %v1529
          %vm1541 = vcmp.gt.f32.partialorder %v1521, %v1529
          %vm1542 = vcmp.gt.f32.partialorder %v1522, %v1529
          %vm1543 = vcmp.gt.f32.partialorder %v1523, %v1529
          %vm1544 = vcmp.gt.f32.partialorder %v1524, %v1529
          %vm1545 = vcmp.gt.f32.partialorder %v1525, %v1529
          %v1546 = vsel %vm1530, %v1510, inf
          %v1547 = vsel %vm1531, %v1511, inf
          %v1548 = vsel %vm1532, %v1512, inf
          %v1549 = vsel %vm1533, %v1513, inf
          %v1550 = vsel %vm1534, %v1514, inf
          %v1551 = vsel %vm1535, %v1515, inf
          %v1552 = vsel %vm1536, %v1516, inf
          %v1553 = vsel %vm1537, %v1517, inf
          %v1554 = vsel %vm1538, %v1518, inf
          %v1555 = vsel %vm1539, %v1519, inf
          %v1556 = vsel %vm1540, %v1520, inf
          %v1557 = vsel %vm1541, %v1521, inf
          %v1558 = vsel %vm1542, %v1522, inf
          %v1559 = vsel %vm1543, %v1523, inf
          %v1560 = vsel %vm1544, %v1524, inf
          %v1561 = vsel %vm1545, %v1525, inf
          %v1562 = vmin.f32 %v1546, %v1550
          %v1563 = vmin.f32 %v1547, %v1551
          %v1564 = vmin.f32 %v1548, %v1552
          %v1565 = vmin.f32 %v1549, %v1553
          %v1566 = vmin.f32 %v1562, %v1554
          %v1567 = vmin.f32 %v1563, %v1555
          %v1568 = vmin.f32 %v1564, %v1556
          %v1569 = vmin.f32 %v1565, %v1557
          %v1570 = vmin.f32 %v1566, %v1558
          %v1571 = vmin.f32 %v1567, %v1559
          %v1572 = vmin.f32 %v1568, %v1560
          %v1573 = vmin.f32 %v1569, %v1561
          %v1574 = vmin.f32 %v1570, %v1571
          %v1575 = vmin.f32 %v1572, %v1573
          %v1576 = vmin.f32 %v1574, %v1575
          %v1577 = vrot.slane %v1576, 4
          %v1578 = vmin.f32 %v1576, %v1577
          %v1579 = vrot.slane %v1578, 2
          %v1580 = vmin.f32 %v1578, %v1579
          %v1581 = vrot.slane %v1580, 1
          %v1582 = vmin.f32 %v1580, %v1581
          %vm1583 = vcmp.lt.f32.partialorder %v1582, inf
          %v1584 = vsel %vm1583, %v1582, %v1132
          %v1585 = vsub.f32 %v1509, %v1584
          %v1586 = vadd.f32 %v1585, 5.0
          %v1587 = vmul.f32 %v1586, %v1491
          %v1588 = vmax.f32 %v1587, 0.0
          %v1589 = vadd.f32 %v1480, %v1588
          %v1590 = vadd.f32 %v1481, %v1491
        $region68: #{tpu_custom_call.1} parent=39 // pred_fallthru
          %v1591 = vphi 0, %v1589
          %v1592 = vphi 0, %v1590
        // Predicated region
        $region69: #{tpu_custom_call.1} parent=39 // pred_check
          %p1593 = pneg %p1504
        $region70: #{tpu_custom_call.1} parent=39 // pred_check_branch
          %1595 = sbr.rel (%p1593) target = $region72
        $region71: #{tpu_custom_call.1} parent=39 // pred_region
          _
        $region72: #{tpu_custom_call.1} parent=39 // pred_fallthru
          %v1596 = vphi %v1591, %v1480
          %v1597 = vphi %v1592, %v1481
        %1598 = vst [vmem:[%s277] sm:$0x1] %v1596
        %1599 = vst [vmem:[%s283] sm:$0x1] %v1597
        %s1600 = sand.u32 %s168, 1
        %s1601 = scalar_lea.sflag [#allocation7], %s1600
        %s1602 = sand.u32 %s168, 1
        %s1603 = scalar_lea.vmem [#allocation6], %s1602
        %s1604 = sand.u32 %s196, 1
        %s1605 = scalar_lea.sflag [#allocation9], %s1604
        %s1606 = sand.u32 %s196, 1
        %s1607 = scalar_lea.vmem [#allocation8], %s1606
        // Predicated region
        $region73: #{tpu_custom_call.1} parent=39 // pred_check
          %p1608 = pneg %p178
        $region74: #{tpu_custom_call.1} parent=39 // pred_check_branch
          %1610 = sbr.rel (%p1608) target = $region76
        $region75: #{tpu_custom_call.1} parent=39 // pred_region
          %s1612 = ssub.s32 16, 16
          %1613 = vsyncadd %s1601, %s1612
          %s1614 = sadd.s32 %s35, %s36
          %s1615 = smul.addr %s1614, 16
          %s1616 = scalar_lea.hbm %s6, %s1615
          %s1618 = sshll.u32 %s1603, 4
          %s1619 = int_to_ptr.vmem [resolvable:$true] %s1618
          %1621 = dma.vmem_to_hbm [thread:$0]  %s1619, 16, %s1616, %s1601
        $region76: #{tpu_custom_call.1} parent=39 // pred_fallthru
          _
        // Predicated region
        $region77: #{tpu_custom_call.1} parent=39 // pred_check
          %p1622 = pneg %p206
        $region78: #{tpu_custom_call.1} parent=39 // pred_check_branch
          %1624 = sbr.rel (%p1622) target = $region80
        $region79: #{tpu_custom_call.1} parent=39 // pred_region
          %s1626 = ssub.s32 16, 16
          %1627 = vsyncadd %s1605, %s1626
          %s1628 = sadd.s32 %s35, %s36
          %s1629 = smul.addr %s1628, 16
          %s1630 = scalar_lea.hbm %s7, %s1629
          %s1632 = sshll.u32 %s1607, 4
          %s1633 = int_to_ptr.vmem [resolvable:$true] %s1632
          %1635 = dma.vmem_to_hbm [thread:$0]  %s1633, 16, %s1630, %s1605
        $region80: #{tpu_custom_call.1} parent=39 // pred_fallthru
          _
      $region40: #{tpu_custom_call.1} parent=5 // pred_fallthru
        _
      %p1636 = scmp.le.s32.totalorder 2, %s26
      // Predicated region
      $region81: #{tpu_custom_call.1} parent=5 // pred_check
        %p1637 = pneg %p1636
      $region82: #{tpu_custom_call.1} parent=5 // pred_check_branch
        %1639 = sbr.rel (%p1637) target = $region84
      $region83: #{tpu_custom_call.1} parent=5 // pred_region
        %s1640 = ssub.s32 %s26, 2
        // Predicated region
        $region85: #{tpu_custom_call.1} parent=83 // pred_check
          %p1641 = pneg %p184
        $region86: #{tpu_custom_call.1} parent=83 // pred_check_branch
          %1643 = sbr.rel (%p1641) target = $region88
        $region87: #{tpu_custom_call.1} parent=83 // pred_region
          %s1644 = sand.u32 %s169, 1
          %s1645 = scalar_lea.sflag [#allocation7], %s1644
          %s1646 = sand.u32 %s169, 1
          %s1647 = scalar_lea.vmem [#allocation6], %s1646
          %1648 = dma.done %s1645, 16
        $region88: #{tpu_custom_call.1} parent=83 // pred_fallthru
          _
        // Predicated region
        $region89: #{tpu_custom_call.1} parent=83 // pred_check
          %p1649 = pneg %p212
        $region90: #{tpu_custom_call.1} parent=83 // pred_check_branch
          %1651 = sbr.rel (%p1649) target = $region92
        $region91: #{tpu_custom_call.1} parent=83 // pred_region
          %s1652 = sand.u32 %s197, 1
          %s1653 = scalar_lea.sflag [#allocation9], %s1652
          %s1654 = sand.u32 %s197, 1
          %s1655 = scalar_lea.vmem [#allocation8], %s1654
          %1656 = dma.done %s1653, 16
        $region92: #{tpu_custom_call.1} parent=83 // pred_fallthru
          _
      $region84: #{tpu_custom_call.1} parent=5 // pred_fallthru
        _
    $region6: #{tpu_custom_call.1} parent=1 // loop_footer
      %s30 = sadd.s32 1, %s26
    $region7: #{tpu_custom_call.1} parent=1 // loop_footer_branch
      %25 = sbr.rel target = $region3
    $region8: #{tpu_custom_call.1} parent=1 // loop_exit
      _
    %1657 = vsyncpa [#allocation7], 1
    %s1658 = scalar_lea.sflag [#allocation7], 1
    %1659 = vsyncpa %s1658, 1
    %1660 = vsyncpa [#allocation9], 1
    %s1661 = scalar_lea.sflag [#allocation9], 1
    %1662 = vsyncpa %s1661, 1

// kernel: tpu_custom_call.1
$region0: #{tpu_custom_call.1}
  #allocation0 [shape = 'u32[]', space=smem, size = 0x4, offset = 0x4, fixed_abs, tag = 'smem constant byte address 0x4 - core index']
  #allocation1 [shape = 'u32[144,128]{1,0:T(1,128)}', space=vmem, size = 0x12000, scoped, tag = 'internal scratch']
  #allocation2 [shape = 'f32[128,128]{1,0:T(8,128)}', space=vmem, size = 0x10000, scoped, tag = 'scratch operand']
  #allocation3 [shape = 'f32[128,128]{1,0:T(8,128)}', space=vmem, size = 0x10000, scoped, tag = 'scratch operand']
  #allocation4 [shape = 's32[1]{0}', space=sflag, size = 0x4, scoped, tag = 'scoped memory for tpu_custom_call.1']
  #allocation5 [shape = 'u8[512]{0}', space=smem, size = 0x200, scoped, tag = 'prefetched SMEM operand 0']
  %s0 = inlined_call_operand.vmem [shape: s32[128], index: 0, kind: input, shape index: {}]
  %s1 = inlined_call_operand.vmem [shape: s32[128,1], index: 1, kind: input, shape index: {}]
  %s2 = inlined_call_operand.vmem [shape: s32[1,128], index: 2, kind: input, shape index: {}]
  %s3 = inlined_call_operand.vmem [shape: f32[128,1], index: 3, kind: input, shape index: {}]
  %s4 = inlined_call_operand.vmem [shape: f32[1,128], index: 4, kind: input, shape index: {}]
  %s5 = inlined_call_operand.vmem [shape: f32[128,128], index: 5, kind: input, shape index: {}]
  %s6 = inlined_call_operand.hbm [shape: f32[2,1,128], index: 6, kind: output, shape index: {0}]
  %s7 = inlined_call_operand.hbm [shape: f32[2,1,128], index: 7, kind: output, shape index: {1}]
  %8 = xla_tuple %s6, %s7
  %s9 = sld [smem:[#allocation0]]
  $region93: #{tpu_custom_call.1} parent=0
    _
  %s11 = ssub.s32 1, %s9
  %s12 = scalar_select 0, %s11, %s9
  %s13 = sshll.u32 %s0, 4
  %s14 = int_to_ptr.vmem [resolvable:$true] %s13
  %16 = dma.vmem_to_smem %s14, 16, [#allocation5], [#allocation4]
  %17 = dma.done [#allocation4], 16
  %18 = sfence
  $region1: #{tpu_custom_call.1} parent=0
    #allocation6 [shape = 'u8[1024]{0}', space=vmem, size = 0x400, scoped, tag = 'output window, operand 0']
    #allocation7 [shape = 's32[2]{0}', space=sflag, size = 0x8, scoped, tag = 'scoped memory for tpu_custom_call.1']
    #allocation8 [shape = 'u8[1024]{0}', space=vmem, size = 0x400, scoped, tag = 'output window, operand 1']
    #allocation9 [shape = 's32[2]{0}', space=sflag, size = 0x8, scoped, tag = 'scoped memory for tpu_custom_call.1']
    %19 = vsyncpa [#allocation7], 0
    %s20 = scalar_lea.sflag [#allocation7], 1
    %21 = vsyncpa %s20, 0
    %22 = vsyncpa [#allocation9], 0
    %s23 = scalar_lea.sflag [#allocation9], 1
    %24 = vsyncpa %s23, 0
    loop: start=0, step=1, limit=4
    $region2: #{tpu_custom_call.1} parent=1 // loop_pre_header
      _
    $region3: #{tpu_custom_call.1} parent=1 // loop_header
      %s26 = sphi 0, %s30
      %p27 = scmp.ge.s32.totalorder %s26, 4
      %s33 = sphi 0, %s45
      %s34 = sphi 0, %s41
      %s35 = sphi 0, %s33
      %s36 = sphi 0, %s34
      %s37 = sphi 0, %s35
      %s38 = sphi 0, %s36
      %s46 = sphi 0, %s46
      %s48 = sphi 0, %s46
      %s49 = sphi 0, %s48
      %s63 = sphi 0, %s49
      %s69 = sphi 0, %s71
      %s72 = sphi 0, %s69
      %s73 = sphi 0, %s72
      %s89 = sphi 0, %s73
      %s93 = sphi 0, %s93
      %s95 = sphi 0, %s93
      %s96 = sphi 0, %s95
      %s110 = sphi 0, %s96
      %s116 = sphi 0, %s118
      %s119 = sphi 0, %s116
      %s120 = sphi 0, %s119
      %s136 = sphi 0, %s120
      %s140 = sphi 0, %s140
      %s142 = sphi 0, %s140
      %s143 = sphi 0, %s142
      %s157 = sphi 0, %s143
      %s165 = sphi 0, %s167
      %s168 = sphi 0, %s165
      %s169 = sphi 0, %s168
      %s185 = sphi 0, %s169
      %s193 = sphi 0, %s195
      %s196 = sphi 0, %s193
      %s197 = sphi 0, %s196
      %s213 = sphi 0, %s197
    $region4: #{tpu_custom_call.1} parent=1 // loop_header_branch
      %29 = sbr.rel (%p27) target = $region8
    $region5: #{tpu_custom_call.1} parent=1 // loop_body
      %s31 = ssub.s32 %s26, 1
      %s32 = ssub.s32 %s26, 2
      %s39 = sadd.s32 1, %s34
      %p40 = scmp.ge.s32.totalorder %s39, 2
      %s41 = scalar_select %p40, 0, %s39
      %s42 = sadd.s32 1, %s33
      %s43 = scalar_select %p40, %s42, %s33
      %p44 = scmp.ge.s32.totalorder %s43, 1
      %s45 = scalar_select %p44, 0, %s43
      %s47 = sadd.s32 %s46, 1
      %p50 = scmp.eq.s32.totalorder %s26, 1
      %p51 = scmp.ne.s32.totalorder %s46, %s48
      %p52 = scmp.eq.s32.totalorder %s26, 0
      %p53 = por %p51, %p52
      %p54 = scmp.ne.s32.totalorder %s46, %s48
      %p55 = scmp.eq.s32.totalorder %s31, 1
      %p56 = por %p54, %p55
      %p57 = scmp.ne.s32.totalorder %s48, %s49
      %p58 = scmp.eq.s32.totalorder %s31, 0
      %p59 = por %p57, %p58
      %p60 = scmp.ne.s32.totalorder %s48, %s49
      %p61 = scmp.eq.s32.totalorder %s32, 1
      %p62 = por %p60, %p61
      %p64 = scmp.ne.s32.totalorder %s49, %s63
      %p65 = scmp.eq.s32.totalorder %s32, 0
      %p66 = por %p64, %p65
      %s67 = ssub.s32 %s33, %s45
      %p68 = scmp.eq.s32.totalorder %s67, 0
      %s70 = sadd.s32 %s69, 1
      %s71 = scalar_select %p68, %s69, %s70
      %p74 = pneg %p68
      %p75 = scmp.eq.s32.totalorder %s26, 1
      %p76 = por %p74, %p75
      %p77 = scmp.ne.s32.totalorder %s69, %s72
      %p78 = scmp.eq.s32.totalorder %s26, 0
      %p79 = por %p77, %p78
      %p80 = scmp.ne.s32.totalorder %s69, %s72
      %p81 = scmp.eq.s32.totalorder %s31, 1
      %p82 = por %p80, %p81
      %p83 = scmp.ne.s32.totalorder %s72, %s73
      %p84 = scmp.eq.s32.totalorder %s31, 0
      %p85 = por %p83, %p84
      %p86 = scmp.ne.s32.totalorder %s72, %s73
      %p87 = scmp.eq.s32.totalorder %s32, 1
      %p88 = por %p86, %p87
      %p90 = scmp.ne.s32.totalorder %s73, %s89
      %p91 = scmp.eq.s32.totalorder %s32, 0
      %p92 = por %p90, %p91
      %s94 = sadd.s32 %s93, 1
      %p97 = scmp.eq.s32.totalorder %s26, 1
      %p98 = scmp.ne.s32.totalorder %s93, %s95
      %p99 = scmp.eq.s32.totalorder %s26, 0
      %p100 = por %p98, %p99
      %p101 = scmp.ne.s32.totalorder %s93, %s95
      %p102 = scmp.eq.s32.totalorder %s31, 1
      %p103 = por %p101, %p102
      %p104 = scmp.ne.s32.totalorder %s95, %s96
      %p105 = scmp.eq.s32.totalorder %s31, 0
      %p106 = por %p104, %p105
      %p107 = scmp.ne.s32.totalorder %s95, %s96
      %p108 = scmp.eq.s32.totalorder %s32, 1
      %p109 = por %p107, %p108
      %p111 = scmp.ne.s32.totalorder %s96, %s110
      %p112 = scmp.eq.s32.totalorder %s32, 0
      %p113 = por %p111, %p112
      %s114 = ssub.s32 %s33, %s45
      %p115 = scmp.eq.s32.totalorder %s114, 0
      %s117 = sadd.s32 %s116, 1
      %s118 = scalar_select %p115, %s116, %s117
      %p121 = pneg %p115
      %p122 = scmp.eq.s32.totalorder %s26, 1
      %p123 = por %p121, %p122
      %p124 = scmp.ne.s32.totalorder %s116, %s119
      %p125 = scmp.eq.s32.totalorder %s26, 0
      %p126 = por %p124, %p125
      %p127 = scmp.ne.s32.totalorder %s116, %s119
      %p128 = scmp.eq.s32.totalorder %s31, 1
      %p129 = por %p127, %p128
      %p130 = scmp.ne.s32.totalorder %s119, %s120
      %p131 = scmp.eq.s32.totalorder %s31, 0
      %p132 = por %p130, %p131
      %p133 = scmp.ne.s32.totalorder %s119, %s120
      %p134 = scmp.eq.s32.totalorder %s32, 1
      %p135 = por %p133, %p134
      %p137 = scmp.ne.s32.totalorder %s120, %s136
      %p138 = scmp.eq.s32.totalorder %s32, 0
      %p139 = por %p137, %p138
      %s141 = sadd.s32 %s140, 1
      %p144 = scmp.eq.s32.totalorder %s26, 1
      %p145 = scmp.ne.s32.totalorder %s140, %s142
      %p146 = scmp.eq.s32.totalorder %s26, 0
      %p147 = por %p145, %p146
      %p148 = scmp.ne.s32.totalorder %s140, %s142
      %p149 = scmp.eq.s32.totalorder %s31, 1
      %p150 = por %p148, %p149
      %p151 = scmp.ne.s32.totalorder %s142, %s143
      %p152 = scmp.eq.s32.totalorder %s31, 0
      %p153 = por %p151, %p152
      %p154 = scmp.ne.s32.totalorder %s142, %s143
      %p155 = scmp.eq.s32.totalorder %s32, 1
      %p156 = por %p154, %p155
      %p158 = scmp.ne.s32.totalorder %s143, %s157
      %p159 = scmp.eq.s32.totalorder %s32, 0
      %p160 = por %p158, %p159
      %s161 = ssub.s32 %s34, %s41
      %s162 = ssub.s32 %s33, %s45
      %s163 = sor.u32 %s161, %s162
      %p164 = scmp.eq.s32.totalorder %s163, 0
      %s166 = sadd.s32 %s165, 1
      %s167 = scalar_select %p164, %s165, %s166
      %p170 = pneg %p164
      %p171 = scmp.eq.s32.totalorder %s26, 1
      %p172 = por %p170, %p171
      %p173 = scmp.ne.s32.totalorder %s165, %s168
      %p174 = scmp.eq.s32.totalorder %s26, 0
      %p175 = por %p173, %p174
      %p176 = scmp.ne.s32.totalorder %s165, %s168
      %p177 = scmp.eq.s32.totalorder %s31, 1
      %p178 = por %p176, %p177
      %p179 = scmp.ne.s32.totalorder %s168, %s169
      %p180 = scmp.eq.s32.totalorder %s31, 0
      %p181 = por %p179, %p180
      %p182 = scmp.ne.s32.totalorder %s168, %s169
      %p183 = scmp.eq.s32.totalorder %s32, 1
      %p184 = por %p182, %p183
      %p186 = scmp.ne.s32.totalorder %s169, %s185
      %p187 = scmp.eq.s32.totalorder %s32, 0
      %p188 = por %p186, %p187
      %s189 = ssub.s32 %s34, %s41
      %s190 = ssub.s32 %s33, %s45
      %s191 = sor.u32 %s189, %s190
      %p192 = scmp.eq.s32.totalorder %s191, 0
      %s194 = sadd.s32 %s193, 1
      %s195 = scalar_select %p192, %s193, %s194
      %p198 = pneg %p192
      %p199 = scmp.eq.s32.totalorder %s26, 1
      %p200 = por %p198, %p199
      %p201 = scmp.ne.s32.totalorder %s193, %s196
      %p202 = scmp.eq.s32.totalorder %s26, 0
      %p203 = por %p201, %p202
      %p204 = scmp.ne.s32.totalorder %s193, %s196
      %p205 = scmp.eq.s32.totalorder %s31, 1
      %p206 = por %p204, %p205
      %p207 = scmp.ne.s32.totalorder %s196, %s197
      %p208 = scmp.eq.s32.totalorder %s31, 0
      %p209 = por %p207, %p208
      %p210 = scmp.ne.s32.totalorder %s196, %s197
      %p211 = scmp.eq.s32.totalorder %s32, 1
      %p212 = por %p210, %p211
      %p214 = scmp.ne.s32.totalorder %s197, %s213
      %p215 = scmp.eq.s32.totalorder %s32, 0
      %p216 = por %p214, %p215
      %p217 = scmp.le.s32.totalorder 1, %s26
      %p218 = scmp.lt.s32.totalorder %s26, 3
      %p219 = pnand %p217, %p218
      %p220 = pneg %p219
      // Predicated region
      $region9: #{tpu_custom_call.1} parent=5 // pred_check
        _
      $region10: #{tpu_custom_call.1} parent=5 // pred_check_branch
        %222 = sbr.rel (%p219) target = $region12
      $region11: #{tpu_custom_call.1} parent=5 // pred_region
        %s223 = ssub.s32 %s26, 1
        // Predicated region
        $region13: #{tpu_custom_call.1} parent=11 // pred_check
          %p224 = pneg %p59
        $region14: #{tpu_custom_call.1} parent=11 // pred_check_branch
          %226 = sbr.rel (%p224) target = $region16
        $region15: #{tpu_custom_call.1} parent=11 // pred_region
          _
        $region16: #{tpu_custom_call.1} parent=11 // pred_fallthru
          _
        // Predicated region
        $region17: #{tpu_custom_call.1} parent=11 // pred_check
          %p227 = pneg %p85
        $region18: #{tpu_custom_call.1} parent=11 // pred_check_branch
          %229 = sbr.rel (%p227) target = $region20
        $region19: #{tpu_custom_call.1} parent=11 // pred_region
          %p230 = scmp.lt.s32.totalorder %s35, 0
          %s231 = scalar_select %p230, %s35, 0
          %s232 = scalar_lea.vmem %s2, %s231
        $region20: #{tpu_custom_call.1} parent=11 // pred_fallthru
          _
        // Predicated region
        $region21: #{tpu_custom_call.1} parent=11 // pred_check
          %p233 = pneg %p106
        $region22: #{tpu_custom_call.1} parent=11 // pred_check_branch
          %235 = sbr.rel (%p233) target = $region24
        $region23: #{tpu_custom_call.1} parent=11 // pred_region
          _
        $region24: #{tpu_custom_call.1} parent=11 // pred_fallthru
          _
        // Predicated region
        $region25: #{tpu_custom_call.1} parent=11 // pred_check
          %p236 = pneg %p132
        $region26: #{tpu_custom_call.1} parent=11 // pred_check_branch
          %238 = sbr.rel (%p236) target = $region28
        $region27: #{tpu_custom_call.1} parent=11 // pred_region
          %p239 = scmp.lt.s32.totalorder %s35, 0
          %s240 = scalar_select %p239, %s35, 0
          %s241 = scalar_lea.vmem %s4, %s240
        $region28: #{tpu_custom_call.1} parent=11 // pred_fallthru
          _
        // Predicated region
        $region29: #{tpu_custom_call.1} parent=11 // pred_check
          %p242 = pneg %p153
        $region30: #{tpu_custom_call.1} parent=11 // pred_check_branch
          %244 = sbr.rel (%p242) target = $region32
        $region31: #{tpu_custom_call.1} parent=11 // pred_region
          _
        $region32: #{tpu_custom_call.1} parent=11 // pred_fallthru
          _
      $region12: #{tpu_custom_call.1} parent=5 // pred_fallthru
        _
      %p245 = scmp.lt.s32.totalorder %s26, 2
      // Predicated region
      $region33: #{tpu_custom_call.1} parent=5 // pred_check
        %p246 = pneg %p245
      $region34: #{tpu_custom_call.1} parent=5 // pred_check_branch
        %248 = sbr.rel (%p246) target = $region36
      $region35: #{tpu_custom_call.1} parent=5 // pred_region
        _
      $region36: #{tpu_custom_call.1} parent=5 // pred_fallthru
        _
      %p249 = scmp.le.s32.totalorder 1, %s26
      %p250 = scmp.lt.s32.totalorder %s26, 3
      %p251 = pnand %p249, %p250
      %p252 = pneg %p251
      // Predicated region
      $region37: #{tpu_custom_call.1} parent=5 // pred_check
        _
      $region38: #{tpu_custom_call.1} parent=5 // pred_check_branch
        %254 = sbr.rel (%p251) target = $region40
      $region39: #{tpu_custom_call.1} parent=5 // pred_region
        %s255 = ssub.s32 %s26, 1
        %p256 = pneg %p59
        %p257 = pneg %p56
        %p258 = scmp.lt.s32.totalorder %s35, 0
        %s259 = scalar_select %p258, %s35, 0
        %s260 = scalar_lea.vmem %s2, %s259
        %p261 = pneg %p85
        %p262 = pneg %p82
        %p263 = pneg %p106
        %p264 = pneg %p103
        %p265 = scmp.lt.s32.totalorder %s35, 0
        %s266 = scalar_select %p265, %s35, 0
        %s267 = scalar_lea.vmem %s4, %s266
        %p268 = pneg %p132
        %p269 = pneg %p129
        %p270 = pneg %p153
        %p271 = pneg %p150
        %p272 = pneg %p181
        %p273 = pneg %p178
        %s274 = sand.u32 %s168, 1
        %s275 = scalar_lea.sflag [#allocation7], %s274
        %s276 = sand.u32 %s168, 1
        %s277 = scalar_lea.vmem [#allocation6], %s276
        %p278 = pneg %p209
        %p279 = pneg %p206
        %s280 = sand.u32 %s196, 1
        %s281 = scalar_lea.sflag [#allocation9], %s280
        %s282 = sand.u32 %s196, 1
        %s283 = scalar_lea.vmem [#allocation8], %s282
        %p284 = scmp.lt.s32.totalorder %s35, 0
        %s285 = scalar_select %p284, %s35, 0
        %s286 = scalar_lea.vmem %s2, %s285
        %p287 = scmp.lt.s32.totalorder %s35, 0
        %s288 = scalar_select %p287, %s35, 0
        %s289 = scalar_lea.vmem %s4, %s288
        %s290 = smul.u32 %s35, 128
        %v291 = vlaneseq
        %v292 = vshrl.u32 %v291, 7
        %v293 = vadd.s32 %v292, 8
        %v294 = vadd.s32 %v292, 16
        %v295 = vadd.s32 %v292, 24
        %v296 = vadd.s32 %v292, 32
        %v297 = vadd.s32 %v292, 40
        %v298 = vadd.s32 %v292, 48
        %v299 = vadd.s32 %v292, 56
        %v300 = vadd.s32 %v292, 64
        %v301 = vadd.s32 %v292, 72
        %v302 = vadd.s32 %v292, 80
        %v303 = vadd.s32 %v292, 88
        %v304 = vadd.s32 %v292, 96
        %v305 = vadd.s32 %v292, 104
        %v306 = vadd.s32 %v292, 112
        %v307 = vadd.s32 %v292, 120
        %v308 = vlaneseq
        %v309 = vand.u32 %v308, 127
        %v310 = vstv %s290
        %v311 = vadd.s32 %v310, %v309
        %vm312 = vcmp.lt.s32.totalorder %v292, 8
        %vm313 = vcmp.lt.s32.totalorder %v293, 8
        %vm314 = vcmp.lt.s32.totalorder %v294, 8
        %vm315 = vcmp.lt.s32.totalorder %v295, 8
        %vm316 = vcmp.lt.s32.totalorder %v296, 8
        %vm317 = vcmp.lt.s32.totalorder %v297, 8
        %vm318 = vcmp.lt.s32.totalorder %v298, 8
        %vm319 = vcmp.lt.s32.totalorder %v299, 8
        %vm320 = vcmp.lt.s32.totalorder %v300, 8
        %vm321 = vcmp.lt.s32.totalorder %v301, 8
        %vm322 = vcmp.lt.s32.totalorder %v302, 8
        %vm323 = vcmp.lt.s32.totalorder %v303, 8
        %vm324 = vcmp.lt.s32.totalorder %v304, 8
        %vm325 = vcmp.lt.s32.totalorder %v305, 8
        %vm326 = vcmp.lt.s32.totalorder %v306, 8
        %vm327 = vcmp.lt.s32.totalorder %v307, 8
        %vm328 = vcmp.lt.s32.totalorder %v311, 8
        %v329 = vld [vmem:[%s5] sm:$0xff]
        %v330 = vld [vmem:[%s5 + $0x8] sm:$0xff]
        %v331 = vld [vmem:[%s5 + $0x10] sm:$0xff]
        %v332 = vld [vmem:[%s5 + $0x18] sm:$0xff]
        %v333 = vld [vmem:[%s5 + $0x20] sm:$0xff]
        %v334 = vld [vmem:[%s5 + $0x28] sm:$0xff]
        %v335 = vld [vmem:[%s5 + $0x30] sm:$0xff]
        %v336 = vld [vmem:[%s5 + $0x38] sm:$0xff]
        %v337 = vld [vmem:[%s5 + $0x40] sm:$0xff]
        %v338 = vld [vmem:[%s5 + $0x48] sm:$0xff]
        %v339 = vld [vmem:[%s5 + $0x50] sm:$0xff]
        %v340 = vld [vmem:[%s5 + $0x58] sm:$0xff]
        %v341 = vld [vmem:[%s5 + $0x60] sm:$0xff]
        %v342 = vld [vmem:[%s5 + $0x68] sm:$0xff]
        %v343 = vld [vmem:[%s5 + $0x70] sm:$0xff]
        %v344 = vld [vmem:[%s5 + $0x78] sm:$0xff]
        %s345 = scalar_lea.vmem %s5, %s290
        %v346 = vld [vmem:[%s345] sm:$0xff]
        %v347 = vld [vmem:[%s345 + $0x8] sm:$0xff]
        %v348 = vld [vmem:[%s345 + $0x10] sm:$0xff]
        %v349 = vld [vmem:[%s345 + $0x18] sm:$0xff]
        %v350 = vld [vmem:[%s345 + $0x20] sm:$0xff]
        %v351 = vld [vmem:[%s345 + $0x28] sm:$0xff]
        %v352 = vld [vmem:[%s345 + $0x30] sm:$0xff]
        %v353 = vld [vmem:[%s345 + $0x38] sm:$0xff]
        %v354 = vld [vmem:[%s345 + $0x40] sm:$0xff]
        %v355 = vld [vmem:[%s345 + $0x48] sm:$0xff]
        %v356 = vld [vmem:[%s345 + $0x50] sm:$0xff]
        %v357 = vld [vmem:[%s345 + $0x58] sm:$0xff]
        %v358 = vld [vmem:[%s345 + $0x60] sm:$0xff]
        %v359 = vld [vmem:[%s345 + $0x68] sm:$0xff]
        %v360 = vld [vmem:[%s345 + $0x70] sm:$0xff]
        %v361 = vld [vmem:[%s345 + $0x78] sm:$0xff]
        %362 = vmatprep.subr.mxu0 0.0
        %363 = vmatpush1.xpose.msra.mxu0 %v346
        %364 = vmatprep.subr.mxu0 0.0
        %365 = vmatpush1.xpose.msra.mxu0 %v347
        %366 = vmatprep.subr.mxu0 0.0
        %367 = vmatpush1.xpose.msra.mxu0 %v348
        %368 = vmatprep.subr.mxu0 0.0
        %369 = vmatpush1.xpose.msra.mxu0 %v349
        %370 = vmatprep.subr.mxu0 0.0
        %371 = vmatpush1.xpose.msra.mxu0 %v350
        %372 = vmatprep.subr.mxu0 0.0
        %373 = vmatpush1.xpose.msra.mxu0 %v351
        %374 = vmatprep.subr.mxu0 0.0
        %375 = vmatpush1.xpose.msra.mxu0 %v352
        %376 = vmatprep.subr.mxu0 0.0
        %377 = vmatpush1.xpose.msra.mxu0 %v353
        %378 = vmatprep.subr.mxu0 0.0
        %379 = vmatpush1.xpose.msra.mxu0 %v354
        %380 = vmatprep.subr.mxu0 0.0
        %381 = vmatpush1.xpose.msra.mxu0 %v355
        %382 = vmatprep.subr.mxu0 0.0
        %383 = vmatpush1.xpose.msra.mxu0 %v356
        %384 = vmatprep.subr.mxu0 0.0
        %385 = vmatpush1.xpose.msra.mxu0 %v357
        %386 = vmatprep.subr.mxu0 0.0
        %387 = vmatpush1.xpose.msra.mxu0 %v358
        %388 = vmatprep.subr.mxu0 0.0
        %389 = vmatpush1.xpose.msra.mxu0 %v359
        %390 = vmatprep.subr.mxu0 0.0
        %391 = vmatpush1.xpose.msra.mxu0 %v360
        %392 = vmatprep.subr.mxu0 0.0
        %393 = vmatpush1.xpose.msra.mxu0 %v361
        %394 = vmatprep.subr.mxu0 0.0
        %395 = vmatpush1.xpose.msra.mxu0 0.0
        %396 = vmatprep.subr.mxu0 0.0
        %397 = vmatpush1.xpose.msra.mxu0 0.0
        %398 = vmatprep.subr.mxu0 0.0
        %399 = vmatpush1.xpose.msra.mxu0 0.0
        %400 = vmatprep.subr.mxu0 0.0
        %401 = vmatpush1.xpose.msra.mxu0 0.0
        %402 = vmatprep.subr.mxu0 0.0
        %403 = vmatpush1.xpose.msra.mxu0 0.0
        %404 = vmatprep.subr.mxu0 0.0
        %405 = vmatpush1.xpose.msra.mxu0 0.0
        %406 = vmatprep.subr.mxu0 0.0
        %407 = vmatpush1.xpose.msra.mxu0 0.0
        %408 = vmatprep.subr.mxu0 0.0
        %409 = vmatpush1.xpose.msra.mxu0 0.0
        %410 = vmatprep.subr.mxu0 0.0
        %411 = vmatpush1.xpose.msra.mxu0 0.0
        %412 = vmatprep.subr.mxu0 0.0
        %413 = vmatpush1.xpose.msra.mxu0 0.0
        %414 = vmatprep.subr.mxu0 0.0
        %415 = vmatpush1.xpose.msra.mxu0 0.0
        %416 = vmatprep.subr.mxu0 0.0
        %417 = vmatpush1.xpose.msra.mxu0 0.0
        %418 = vmatprep.subr.mxu0 0.0
        %419 = vmatpush1.xpose.msra.mxu0 0.0
        %420 = vmatprep.subr.mxu0 0.0
        %421 = vmatpush1.xpose.msra.mxu0 0.0
        %422 = vmatprep.subr.mxu0 0.0
        %423 = vmatpush1.xpose.msra.mxu0 0.0
        %424 = vmatprep.subr.mxu0 0.0
        %425 = vmatpush1.xpose.msra.mxu0 0.0
        %426 = vmatprep.mubr.f32.mxu0 0.0
        %427 = vmatmul.mubr.f32.gmra.mrb[0].mxu0 %v329
        %v428 = vpop.f32.mrb[0].mxu0
        %v429 = vadd.f32 0.0, %v428
        %v430 = vpop.f32.mrb[0].mxu0
        %431 = vmatprep.mubr.f32.mxu0 0.0
        %432 = vmatmul.mubr.f32.gmra.mrb[0].mxu0 %v330
        %v433 = vpop.f32.mrb[0].mxu0
        %v434 = vadd.f32 0.0, %v433
        %v435 = vpop.f32.mrb[0].mxu0
        %436 = vmatprep.mubr.f32.mxu0 0.0
        %437 = vmatmul.mubr.f32.gmra.mrb[0].mxu0 %v331
        %v438 = vpop.f32.mrb[0].mxu0
        %v439 = vadd.f32 0.0, %v438
        %v440 = vpop.f32.mrb[0].mxu0
        %441 = vmatprep.mubr.f32.mxu0 0.0
        %442 = vmatmul.mubr.f32.gmra.mrb[0].mxu0 %v332
        %v443 = vpop.f32.mrb[0].mxu0
        %v444 = vadd.f32 0.0, %v443
        %v445 = vpop.f32.mrb[0].mxu0
        %446 = vmatprep.mubr.f32.mxu0 0.0
        %447 = vmatmul.mubr.f32.gmra.mrb[0].mxu0 %v333
        %v448 = vpop.f32.mrb[0].mxu0
        %v449 = vadd.f32 0.0, %v448
        %v450 = vpop.f32.mrb[0].mxu0
        %451 = vmatprep.mubr.f32.mxu0 0.0
        %452 = vmatmul.mubr.f32.gmra.mrb[0].mxu0 %v334
        %v453 = vpop.f32.mrb[0].mxu0
        %v454 = vadd.f32 0.0, %v453
        %v455 = vpop.f32.mrb[0].mxu0
        %456 = vmatprep.mubr.f32.mxu0 0.0
        %457 = vmatmul.mubr.f32.gmra.mrb[0].mxu0 %v335
        %v458 = vpop.f32.mrb[0].mxu0
        %v459 = vadd.f32 0.0, %v458
        %v460 = vpop.f32.mrb[0].mxu0
        %461 = vmatprep.mubr.f32.mxu0 0.0
        %462 = vmatmul.mubr.f32.gmra.mrb[0].mxu0 %v336
        %v463 = vpop.f32.mrb[0].mxu0
        %v464 = vadd.f32 0.0, %v463
        %v465 = vpop.f32.mrb[0].mxu0
        %466 = vmatprep.mubr.f32.mxu0 0.0
        %467 = vmatmul.mubr.f32.gmra.mrb[0].mxu0 %v337
        %v468 = vpop.f32.mrb[0].mxu0
        %v469 = vadd.f32 0.0, %v468
        %v470 = vpop.f32.mrb[0].mxu0
        %471 = vmatprep.mubr.f32.mxu0 0.0
        %472 = vmatmul.mubr.f32.gmra.mrb[0].mxu0 %v338
        %v473 = vpop.f32.mrb[0].mxu0
        %v474 = vadd.f32 0.0, %v473
        %v475 = vpop.f32.mrb[0].mxu0
        %476 = vmatprep.mubr.f32.mxu0 0.0
        %477 = vmatmul.mubr.f32.gmra.mrb[0].mxu0 %v339
        %v478 = vpop.f32.mrb[0].mxu0
        %v479 = vadd.f32 0.0, %v478
        %v480 = vpop.f32.mrb[0].mxu0
        %481 = vmatprep.mubr.f32.mxu0 0.0
        %482 = vmatmul.mubr.f32.gmra.mrb[0].mxu0 %v340
        %v483 = vpop.f32.mrb[0].mxu0
        %v484 = vadd.f32 0.0, %v483
        %v485 = vpop.f32.mrb[0].mxu0
        %486 = vmatprep.mubr.f32.mxu0 0.0
        %487 = vmatmul.mubr.f32.gmra.mrb[0].mxu0 %v341
        %v488 = vpop.f32.mrb[0].mxu0
        %v489 = vadd.f32 0.0, %v488
        %v490 = vpop.f32.mrb[0].mxu0
        %491 = vmatprep.mubr.f32.mxu0 0.0
        %492 = vmatmul.mubr.f32.gmra.mrb[0].mxu0 %v342
        %v493 = vpop.f32.mrb[0].mxu0
        %v494 = vadd.f32 0.0, %v493
        %v495 = vpop.f32.mrb[0].mxu0
        %496 = vmatprep.mubr.f32.mxu0 0.0
        %497 = vmatmul.mubr.f32.gmra.mrb[0].mxu0 %v343
        %v498 = vpop.f32.mrb[0].mxu0
        %v499 = vadd.f32 0.0, %v498
        %v500 = vpop.f32.mrb[0].mxu0
        %501 = vmatprep.mubr.f32.mxu0 0.0
        %502 = vmatmul.mubr.f32.gmra.mrb[0].mxu0 %v344
        %v503 = vpop.f32.mrb[0].mxu0
        %v504 = vadd.f32 0.0, %v503
        %v505 = vpop.f32.mrb[0].mxu0
        %506 = vdwg.mxu0
        %v507 = vld [vmem:[%s3] sm:$0xff]
        %v508 = vld [vmem:[%s3 + $0x8] sm:$0xff]
        %v509 = vld [vmem:[%s3 + $0x10] sm:$0xff]
        %v510 = vld [vmem:[%s3 + $0x18] sm:$0xff]
        %v511 = vld [vmem:[%s3 + $0x20] sm:$0xff]
        %v512 = vld [vmem:[%s3 + $0x28] sm:$0xff]
        %v513 = vld [vmem:[%s3 + $0x30] sm:$0xff]
        %v514 = vld [vmem:[%s3 + $0x38] sm:$0xff]
        %v515 = vld [vmem:[%s3 + $0x40] sm:$0xff]
        %v516 = vld [vmem:[%s3 + $0x48] sm:$0xff]
        %v517 = vld [vmem:[%s3 + $0x50] sm:$0xff]
        %v518 = vld [vmem:[%s3 + $0x58] sm:$0xff]
        %v519 = vld [vmem:[%s3 + $0x60] sm:$0xff]
        %v520 = vld [vmem:[%s3 + $0x68] sm:$0xff]
        %v521 = vld [vmem:[%s3 + $0x70] sm:$0xff]
        %v522 = vld [vmem:[%s3 + $0x78] sm:$0xff]
        %v523 = vmul.f32 %v429, 2.0
        %v524 = vmul.f32 %v434, 2.0
        %v525 = vmul.f32 %v439, 2.0
        %v526 = vmul.f32 %v444, 2.0
        %v527 = vmul.f32 %v449, 2.0
        %v528 = vmul.f32 %v454, 2.0
        %v529 = vmul.f32 %v459, 2.0
        %v530 = vmul.f32 %v464, 2.0
        %v531 = vmul.f32 %v469, 2.0
        %v532 = vmul.f32 %v474, 2.0
        %v533 = vmul.f32 %v479, 2.0
        %v534 = vmul.f32 %v484, 2.0
        %v535 = vmul.f32 %v489, 2.0
        %v536 = vmul.f32 %v494, 2.0
        %v537 = vmul.f32 %v499, 2.0
        %v538 = vmul.f32 %v504, 2.0
        %540 = vset.pattern.permute.xlu0 0
        %541 = vperm.xlu0 %540, %v507
        %v542 = vpop.permute.xlu0 %541
        %545 = vset.pattern.permute.xlu0 0
        %546 = vperm.xlu0 %545, %v508
        %v547 = vpop.permute.xlu0 %546
        %550 = vset.pattern.permute.xlu0 0
        %551 = vperm.xlu0 %550, %v509
        %v552 = vpop.permute.xlu0 %551
        %555 = vset.pattern.permute.xlu0 0
        %556 = vperm.xlu0 %555, %v510
        %v557 = vpop.permute.xlu0 %556
        %560 = vset.pattern.permute.xlu0 0
        %561 = vperm.xlu0 %560, %v511
        %v562 = vpop.permute.xlu0 %561
        %565 = vset.pattern.permute.xlu0 0
        %566 = vperm.xlu0 %565, %v512
        %v567 = vpop.permute.xlu0 %566
        %570 = vset.pattern.permute.xlu0 0
        %571 = vperm.xlu0 %570, %v513
        %v572 = vpop.permute.xlu0 %571
        %575 = vset.pattern.permute.xlu0 0
        %576 = vperm.xlu0 %575, %v514
        %v577 = vpop.permute.xlu0 %576
        %580 = vset.pattern.permute.xlu0 0
        %581 = vperm.xlu0 %580, %v515
        %v582 = vpop.permute.xlu0 %581
        %585 = vset.pattern.permute.xlu0 0
        %586 = vperm.xlu0 %585, %v516
        %v587 = vpop.permute.xlu0 %586
        %590 = vset.pattern.permute.xlu0 0
        %591 = vperm.xlu0 %590, %v517
        %v592 = vpop.permute.xlu0 %591
        %595 = vset.pattern.permute.xlu0 0
        %596 = vperm.xlu0 %595, %v518
        %v597 = vpop.permute.xlu0 %596
        %600 = vset.pattern.permute.xlu0 0
        %601 = vperm.xlu0 %600, %v519
        %v602 = vpop.permute.xlu0 %601
        %605 = vset.pattern.permute.xlu0 0
        %606 = vperm.xlu0 %605, %v520
        %v607 = vpop.permute.xlu0 %606
        %610 = vset.pattern.permute.xlu0 0
        %611 = vperm.xlu0 %610, %v521
        %v612 = vpop.permute.xlu0 %611
        %615 = vset.pattern.permute.xlu0 0
        %616 = vperm.xlu0 %615, %v522
        %v617 = vpop.permute.xlu0 %616
        %v619 = vsub.f32 %v542, %v523
        %v620 = vsub.f32 %v547, %v524
        %v621 = vsub.f32 %v552, %v525
        %v622 = vsub.f32 %v557, %v526
        %v623 = vsub.f32 %v562, %v527
        %v624 = vsub.f32 %v567, %v528
        %v625 = vsub.f32 %v572, %v529
        %v626 = vsub.f32 %v577, %v530
        %v627 = vsub.f32 %v582, %v531
        %v628 = vsub.f32 %v587, %v532
        %v629 = vsub.f32 %v592, %v533
        %v630 = vsub.f32 %v597, %v534
        %v631 = vsub.f32 %v602, %v535
        %v632 = vsub.f32 %v607, %v536
        %v633 = vsub.f32 %v612, %v537
        %v634 = vsub.f32 %v617, %v538
        %v635 = vld [vmem:[%s289] sm:$0x1]
        %v637 = vlaneseq
        %v638 = vshrl.u32 %v637, 7
        %v639 = vsub.s32 0, %v638
        %v640 = vrot.slane %v635, %v639
        %v642 = vadd.f32 %v619, %v640
        %v643 = vadd.f32 %v620, %v640
        %v644 = vadd.f32 %v621, %v640
        %v645 = vadd.f32 %v622, %v640
        %v646 = vadd.f32 %v623, %v640
        %v647 = vadd.f32 %v624, %v640
        %v648 = vadd.f32 %v625, %v640
        %v649 = vadd.f32 %v626, %v640
        %v650 = vadd.f32 %v627, %v640
        %v651 = vadd.f32 %v628, %v640
        %v652 = vadd.f32 %v629, %v640
        %v653 = vadd.f32 %v630, %v640
        %v654 = vadd.f32 %v631, %v640
        %v655 = vadd.f32 %v632, %v640
        %v656 = vadd.f32 %v633, %v640
        %v657 = vadd.f32 %v634, %v640
        %v658 = vmax.f32 %v642, 0.0
        %v659 = vmax.f32 %v643, 0.0
        %v660 = vmax.f32 %v644, 0.0
        %v661 = vmax.f32 %v645, 0.0
        %v662 = vmax.f32 %v646, 0.0
        %v663 = vmax.f32 %v647, 0.0
        %v664 = vmax.f32 %v648, 0.0
        %v665 = vmax.f32 %v649, 0.0
        %v666 = vmax.f32 %v650, 0.0
        %v667 = vmax.f32 %v651, 0.0
        %v668 = vmax.f32 %v652, 0.0
        %v669 = vmax.f32 %v653, 0.0
        %v670 = vmax.f32 %v654, 0.0
        %v671 = vmax.f32 %v655, 0.0
        %v672 = vmax.f32 %v656, 0.0
        %v673 = vmax.f32 %v657, 0.0
        %vm674 = vcmp.eq.s32.totalorder %v292, %v311
        %vm675 = vcmp.eq.s32.totalorder %v293, %v311
        %vm676 = vcmp.eq.s32.totalorder %v294, %v311
        %vm677 = vcmp.eq.s32.totalorder %v295, %v311
        %vm678 = vcmp.eq.s32.totalorder %v296, %v311
        %vm679 = vcmp.eq.s32.totalorder %v297, %v311
        %vm680 = vcmp.eq.s32.totalorder %v298, %v311
        %vm681 = vcmp.eq.s32.totalorder %v299, %v311
        %vm682 = vcmp.eq.s32.totalorder %v300, %v311
        %vm683 = vcmp.eq.s32.totalorder %v301, %v311
        %vm684 = vcmp.eq.s32.totalorder %v302, %v311
        %vm685 = vcmp.eq.s32.totalorder %v303, %v311
        %vm686 = vcmp.eq.s32.totalorder %v304, %v311
        %vm687 = vcmp.eq.s32.totalorder %v305, %v311
        %vm688 = vcmp.eq.s32.totalorder %v306, %v311
        %vm689 = vcmp.eq.s32.totalorder %v307, %v311
        %v690 = vsel %vm674, 0.0, %v658
        %v691 = vsel %vm675, 0.0, %v659
        %v692 = vsel %vm676, 0.0, %v660
        %v693 = vsel %vm677, 0.0, %v661
        %v694 = vsel %vm678, 0.0, %v662
        %v695 = vsel %vm679, 0.0, %v663
        %v696 = vsel %vm680, 0.0, %v664
        %v697 = vsel %vm681, 0.0, %v665
        %v698 = vsel %vm682, 0.0, %v666
        %v699 = vsel %vm683, 0.0, %v667
        %v700 = vsel %vm684, 0.0, %v668
        %v701 = vsel %vm685, 0.0, %v669
        %v702 = vsel %vm686, 0.0, %v670
        %v703 = vsel %vm687, 0.0, %v671
        %v704 = vsel %vm688, 0.0, %v672
        %v705 = vsel %vm689, 0.0, %v673
        %vm706 = vcmp.eq.f32.partialorder %v690, 0.0
        %vm707 = vcmp.eq.f32.partialorder %v691, 0.0
        %vm708 = vcmp.eq.f32.partialorder %v692, 0.0
        %vm709 = vcmp.eq.f32.partialorder %v693, 0.0
        %vm710 = vcmp.eq.f32.partialorder %v694, 0.0
        %vm711 = vcmp.eq.f32.partialorder %v695, 0.0
        %vm712 = vcmp.eq.f32.partialorder %v696, 0.0
        %vm713 = vcmp.eq.f32.partialorder %v697, 0.0
        %vm714 = vcmp.eq.f32.partialorder %v698, 0.0
        %vm715 = vcmp.eq.f32.partialorder %v699, 0.0
        %vm716 = vcmp.eq.f32.partialorder %v700, 0.0
        %vm717 = vcmp.eq.f32.partialorder %v701, 0.0
        %vm718 = vcmp.eq.f32.partialorder %v702, 0.0
        %vm719 = vcmp.eq.f32.partialorder %v703, 0.0
        %vm720 = vcmp.eq.f32.partialorder %v704, 0.0
        %vm721 = vcmp.eq.f32.partialorder %v705, 0.0
        %v722 = vsel %vm706, 1, 0
        %v723 = vsel %vm707, 1, 0
        %v724 = vsel %vm708, 1, 0
        %v725 = vsel %vm709, 1, 0
        %v726 = vsel %vm710, 1, 0
        %v727 = vsel %vm711, 1, 0
        %v728 = vsel %vm712, 1, 0
        %v729 = vsel %vm713, 1, 0
        %v730 = vsel %vm714, 1, 0
        %v731 = vsel %vm715, 1, 0
        %v732 = vsel %vm716, 1, 0
        %v733 = vsel %vm717, 1, 0
        %v734 = vsel %vm718, 1, 0
        %v735 = vsel %vm719, 1, 0
        %v736 = vsel %vm720, 1, 0
        %v737 = vsel %vm721, 1, 0
        %v738 = vcvt.s32.f32 %v722
        %v739 = vcvt.s32.f32 %v723
        %v740 = vcvt.s32.f32 %v724
        %v741 = vcvt.s32.f32 %v725
        %v742 = vcvt.s32.f32 %v726
        %v743 = vcvt.s32.f32 %v727
        %v744 = vcvt.s32.f32 %v728
        %v745 = vcvt.s32.f32 %v729
        %v746 = vcvt.s32.f32 %v730
        %v747 = vcvt.s32.f32 %v731
        %v748 = vcvt.s32.f32 %v732
        %v749 = vcvt.s32.f32 %v733
        %v750 = vcvt.s32.f32 %v734
        %v751 = vcvt.s32.f32 %v735
        %v752 = vcvt.s32.f32 %v736
        %v753 = vcvt.s32.f32 %v737
        %v754 = vsub.f32 1.0, %v738
        %v755 = vsub.f32 1.0, %v739
        %v756 = vsub.f32 1.0, %v740
        %v757 = vsub.f32 1.0, %v741
        %v758 = vsub.f32 1.0, %v742
        %v759 = vsub.f32 1.0, %v743
        %v760 = vsub.f32 1.0, %v744
        %v761 = vsub.f32 1.0, %v745
        %v762 = vsub.f32 1.0, %v746
        %v763 = vsub.f32 1.0, %v747
        %v764 = vsub.f32 1.0, %v748
        %v765 = vsub.f32 1.0, %v749
        %v766 = vsub.f32 1.0, %v750
        %v767 = vsub.f32 1.0, %v751
        %v768 = vsub.f32 1.0, %v752
        %v769 = vsub.f32 1.0, %v753
        %v770 = vmul.f32 %v738, 1e-16
        %v771 = vmul.f32 %v739, 1e-16
        %v772 = vmul.f32 %v740, 1e-16
        %v773 = vmul.f32 %v741, 1e-16
        %v774 = vmul.f32 %v742, 1e-16
        %v775 = vmul.f32 %v743, 1e-16
        %v776 = vmul.f32 %v744, 1e-16
        %v777 = vmul.f32 %v745, 1e-16
        %v778 = vmul.f32 %v746, 1e-16
        %v779 = vmul.f32 %v747, 1e-16
        %v780 = vmul.f32 %v748, 1e-16
        %v781 = vmul.f32 %v749, 1e-16
        %v782 = vmul.f32 %v750, 1e-16
        %v783 = vmul.f32 %v751, 1e-16
        %v784 = vmul.f32 %v752, 1e-16
        %v785 = vmul.f32 %v753, 1e-16
        %v786 = vadd.f32 %v690, %v770
        %v787 = vadd.f32 %v691, %v771
        %v788 = vadd.f32 %v692, %v772
        %v789 = vadd.f32 %v693, %v773
        %v790 = vadd.f32 %v694, %v774
        %v791 = vadd.f32 %v695, %v775
        %v792 = vadd.f32 %v696, %v776
        %v793 = vadd.f32 %v697, %v777
        %v794 = vadd.f32 %v698, %v778
        %v795 = vadd.f32 %v699, %v779
        %v796 = vadd.f32 %v700, %v780
        %v797 = vadd.f32 %v701, %v781
        %v798 = vadd.f32 %v702, %v782
        %v799 = vadd.f32 %v703, %v783
        %v800 = vadd.f32 %v704, %v784
        %v801 = vadd.f32 %v705, %v785
        %v802 = vrsqrt.pop %v786
        %v803 = vmul.f32 %v786, %v802
        %vm804 = vcmp.eq.f32.partialorder %v786, inf
        %v805 = vsel %vm804, %v786, %v803
        %vm806 = vcmp.eq.f32.partialorder %v786, 0.0
        %v807 = vand.u32 %v786, 2147483648
        %v808 = vsel %vm806, %v807, %v805
        %v809 = vrsqrt.pop %v787
        %v810 = vmul.f32 %v787, %v809
        %vm811 = vcmp.eq.f32.partialorder %v787, inf
        %v812 = vsel %vm811, %v787, %v810
        %vm813 = vcmp.eq.f32.partialorder %v787, 0.0
        %v814 = vand.u32 %v787, 2147483648
        %v815 = vsel %vm813, %v814, %v812
        %v816 = vrsqrt.pop %v788
        %v817 = vmul.f32 %v788, %v816
        %vm818 = vcmp.eq.f32.partialorder %v788, inf
        %v819 = vsel %vm818, %v788, %v817
        %vm820 = vcmp.eq.f32.partialorder %v788, 0.0
        %v821 = vand.u32 %v788, 2147483648
        %v822 = vsel %vm820, %v821, %v819
        %v823 = vrsqrt.pop %v789
        %v824 = vmul.f32 %v789, %v823
        %vm825 = vcmp.eq.f32.partialorder %v789, inf
        %v826 = vsel %vm825, %v789, %v824
        %vm827 = vcmp.eq.f32.partialorder %v789, 0.0
        %v828 = vand.u32 %v789, 2147483648
        %v829 = vsel %vm827, %v828, %v826
        %v830 = vrsqrt.pop %v790
        %v831 = vmul.f32 %v790, %v830
        %vm832 = vcmp.eq.f32.partialorder %v790, inf
        %v833 = vsel %vm832, %v790, %v831
        %vm834 = vcmp.eq.f32.partialorder %v790, 0.0
        %v835 = vand.u32 %v790, 2147483648
        %v836 = vsel %vm834, %v835, %v833
        %v837 = vrsqrt.pop %v791
        %v838 = vmul.f32 %v791, %v837
        %vm839 = vcmp.eq.f32.partialorder %v791, inf
        %v840 = vsel %vm839, %v791, %v838
        %vm841 = vcmp.eq.f32.partialorder %v791, 0.0
        %v842 = vand.u32 %v791, 2147483648
        %v843 = vsel %vm841, %v842, %v840
        %v844 = vrsqrt.pop %v792
        %v845 = vmul.f32 %v792, %v844
        %vm846 = vcmp.eq.f32.partialorder %v792, inf
        %v847 = vsel %vm846, %v792, %v845
        %vm848 = vcmp.eq.f32.partialorder %v792, 0.0
        %v849 = vand.u32 %v792, 2147483648
        %v850 = vsel %vm848, %v849, %v847
        %v851 = vrsqrt.pop %v793
        %v852 = vmul.f32 %v793, %v851
        %vm853 = vcmp.eq.f32.partialorder %v793, inf
        %v854 = vsel %vm853, %v793, %v852
        %vm855 = vcmp.eq.f32.partialorder %v793, 0.0
        %v856 = vand.u32 %v793, 2147483648
        %v857 = vsel %vm855, %v856, %v854
        %v858 = vrsqrt.pop %v794
        %v859 = vmul.f32 %v794, %v858
        %vm860 = vcmp.eq.f32.partialorder %v794, inf
        %v861 = vsel %vm860, %v794, %v859
        %vm862 = vcmp.eq.f32.partialorder %v794, 0.0
        %v863 = vand.u32 %v794, 2147483648
        %v864 = vsel %vm862, %v863, %v861
        %v865 = vrsqrt.pop %v795
        %v866 = vmul.f32 %v795, %v865
        %vm867 = vcmp.eq.f32.partialorder %v795, inf
        %v868 = vsel %vm867, %v795, %v866
        %vm869 = vcmp.eq.f32.partialorder %v795, 0.0
        %v870 = vand.u32 %v795, 2147483648
        %v871 = vsel %vm869, %v870, %v868
        %v872 = vrsqrt.pop %v796
        %v873 = vmul.f32 %v796, %v872
        %vm874 = vcmp.eq.f32.partialorder %v796, inf
        %v875 = vsel %vm874, %v796, %v873
        %vm876 = vcmp.eq.f32.partialorder %v796, 0.0
        %v877 = vand.u32 %v796, 2147483648
        %v878 = vsel %vm876, %v877, %v875
        %v879 = vrsqrt.pop %v797
        %v880 = vmul.f32 %v797, %v879
        %vm881 = vcmp.eq.f32.partialorder %v797, inf
        %v882 = vsel %vm881, %v797, %v880
        %vm883 = vcmp.eq.f32.partialorder %v797, 0.0
        %v884 = vand.u32 %v797, 2147483648
        %v885 = vsel %vm883, %v884, %v882
        %v886 = vrsqrt.pop %v798
        %v887 = vmul.f32 %v798, %v886
        %vm888 = vcmp.eq.f32.partialorder %v798, inf
        %v889 = vsel %vm888, %v798, %v887
        %vm890 = vcmp.eq.f32.partialorder %v798, 0.0
        %v891 = vand.u32 %v798, 2147483648
        %v892 = vsel %vm890, %v891, %v889
        %v893 = vrsqrt.pop %v799
        %v894 = vmul.f32 %v799, %v893
        %vm895 = vcmp.eq.f32.partialorder %v799, inf
        %v896 = vsel %vm895, %v799, %v894
        %vm897 = vcmp.eq.f32.partialorder %v799, 0.0
        %v898 = vand.u32 %v799, 2147483648
        %v899 = vsel %vm897, %v898, %v896
        %v900 = vrsqrt.pop %v800
        %v901 = vmul.f32 %v800, %v900
        %vm902 = vcmp.eq.f32.partialorder %v800, inf
        %v903 = vsel %vm902, %v800, %v901
        %vm904 = vcmp.eq.f32.partialorder %v800, 0.0
        %v905 = vand.u32 %v800, 2147483648
        %v906 = vsel %vm904, %v905, %v903
        %v907 = vrsqrt.pop %v801
        %v908 = vmul.f32 %v801, %v907
        %vm909 = vcmp.eq.f32.partialorder %v801, inf
        %v910 = vsel %vm909, %v801, %v908
        %vm911 = vcmp.eq.f32.partialorder %v801, 0.0
        %v912 = vand.u32 %v801, 2147483648
        %v913 = vsel %vm911, %v912, %v910
        %v914 = vmul.f32 %v754, %v808
        %v915 = vmul.f32 %v755, %v815
        %v916 = vmul.f32 %v756, %v822
        %v917 = vmul.f32 %v757, %v829
        %v918 = vmul.f32 %v758, %v836
        %v919 = vmul.f32 %v759, %v843
        %v920 = vmul.f32 %v760, %v850
        %v921 = vmul.f32 %v761, %v857
        %v922 = vmul.f32 %v762, %v864
        %v923 = vmul.f32 %v763, %v871
        %v924 = vmul.f32 %v764, %v878
        %v925 = vmul.f32 %v765, %v885
        %v926 = vmul.f32 %v766, %v892
        %v927 = vmul.f32 %v767, %v899
        %v928 = vmul.f32 %v768, %v906
        %v929 = vmul.f32 %v769, %v913
        %930 = vst [vmem:[#allocation2] sm:$0xff] %v914
        %931 = vst [vmem:[#allocation2 + $0x8] sm:$0xff] %v915
        %932 = vst [vmem:[#allocation2 + $0x10] sm:$0xff] %v916
        %933 = vst [vmem:[#allocation2 + $0x18] sm:$0xff] %v917
        %934 = vst [vmem:[#allocation2 + $0x20] sm:$0xff] %v918
        %935 = vst [vmem:[#allocation2 + $0x28] sm:$0xff] %v919
        %936 = vst [vmem:[#allocation2 + $0x30] sm:$0xff] %v920
        %937 = vst [vmem:[#allocation2 + $0x38] sm:$0xff] %v921
        %938 = vst [vmem:[#allocation2 + $0x40] sm:$0xff] %v922
        %939 = vst [vmem:[#allocation2 + $0x48] sm:$0xff] %v923
        %940 = vst [vmem:[#allocation2 + $0x50] sm:$0xff] %v924
        %941 = vst [vmem:[#allocation2 + $0x58] sm:$0xff] %v925
        %942 = vst [vmem:[#allocation2 + $0x60] sm:$0xff] %v926
        %943 = vst [vmem:[#allocation2 + $0x68] sm:$0xff] %v927
        %944 = vst [vmem:[#allocation2 + $0x70] sm:$0xff] %v928
        %945 = vst [vmem:[#allocation2 + $0x78] sm:$0xff] %v929
        %v946 = vld [vmem:[%s286] sm:$0x1]
        %v947 = vld [vmem:[%s1] sm:$0xff]
        %v948 = vld [vmem:[%s1 + $0x8] sm:$0xff]
        %v949 = vld [vmem:[%s1 + $0x10] sm:$0xff]
        %v950 = vld [vmem:[%s1 + $0x18] sm:$0xff]
        %v951 = vld [vmem:[%s1 + $0x20] sm:$0xff]
        %v952 = vld [vmem:[%s1 + $0x28] sm:$0xff]
        %v953 = vld [vmem:[%s1 + $0x30] sm:$0xff]
        %v954 = vld [vmem:[%s1 + $0x38] sm:$0xff]
        %v955 = vld [vmem:[%s1 + $0x40] sm:$0xff]
        %v956 = vld [vmem:[%s1 + $0x48] sm:$0xff]
        %v957 = vld [vmem:[%s1 + $0x50] sm:$0xff]
        %v958 = vld [vmem:[%s1 + $0x58] sm:$0xff]
        %v959 = vld [vmem:[%s1 + $0x60] sm:$0xff]
        %v960 = vld [vmem:[%s1 + $0x68] sm:$0xff]
        %v961 = vld [vmem:[%s1 + $0x70] sm:$0xff]
        %v962 = vld [vmem:[%s1 + $0x78] sm:$0xff]
        %963 = vset.pattern.permute.xlu0 0
        %964 = vperm.xlu0 %963, %v947
        %v965 = vpop.permute.xlu0 %964
        %966 = vset.pattern.permute.xlu0 0
        %967 = vperm.xlu0 %966, %v948
        %v968 = vpop.permute.xlu0 %967
        %969 = vset.pattern.permute.xlu0 0
        %970 = vperm.xlu0 %969, %v949
        %v971 = vpop.permute.xlu0 %970
        %972 = vset.pattern.permute.xlu0 0
        %973 = vperm.xlu0 %972, %v950
        %v974 = vpop.permute.xlu0 %973
        %975 = vset.pattern.permute.xlu0 0
        %976 = vperm.xlu0 %975, %v951
        %v977 = vpop.permute.xlu0 %976
        %978 = vset.pattern.permute.xlu0 0
        %979 = vperm.xlu0 %978, %v952
        %v980 = vpop.permute.xlu0 %979
        %981 = vset.pattern.permute.xlu0 0
        %982 = vperm.xlu0 %981, %v953
        %v983 = vpop.permute.xlu0 %982
        %984 = vset.pattern.permute.xlu0 0
        %985 = vperm.xlu0 %984, %v954
        %v986 = vpop.permute.xlu0 %985
        %987 = vset.pattern.permute.xlu0 0
        %988 = vperm.xlu0 %987, %v955
        %v989 = vpop.permute.xlu0 %988
        %990 = vset.pattern.permute.xlu0 0
        %991 = vperm.xlu0 %990, %v956
        %v992 = vpop.permute.xlu0 %991
        %993 = vset.pattern.permute.xlu0 0
        %994 = vperm.xlu0 %993, %v957
        %v995 = vpop.permute.xlu0 %994
        %996 = vset.pattern.permute.xlu0 0
        %997 = vperm.xlu0 %996, %v958
        %v998 = vpop.permute.xlu0 %997
        %999 = vset.pattern.permute.xlu0 0
        %1000 = vperm.xlu0 %999, %v959
        %v1001 = vpop.permute.xlu0 %1000
        %1002 = vset.pattern.permute.xlu0 0
        %1003 = vperm.xlu0 %1002, %v960
        %v1004 = vpop.permute.xlu0 %1003
        %1005 = vset.pattern.permute.xlu0 0
        %1006 = vperm.xlu0 %1005, %v961
        %v1007 = vpop.permute.xlu0 %1006
        %1008 = vset.pattern.permute.xlu0 0
        %1009 = vperm.xlu0 %1008, %v962
        %v1010 = vpop.permute.xlu0 %1009
        %v1011 = vlaneseq
        %v1012 = vshrl.u32 %v1011, 7
        %v1013 = vsub.s32 0, %v1012
        %v1014 = vrot.slane %v946, %v1013
        %vm1015 = vcmp.ne.s32.totalorder %v965, %v1014
        %vm1016 = vcmp.ne.s32.totalorder %v968, %v1014
        %vm1017 = vcmp.ne.s32.totalorder %v971, %v1014
        %vm1018 = vcmp.ne.s32.totalorder %v974, %v1014
        %vm1019 = vcmp.ne.s32.totalorder %v977, %v1014
        %vm1020 = vcmp.ne.s32.totalorder %v980, %v1014
        %vm1021 = vcmp.ne.s32.totalorder %v983, %v1014
        %vm1022 = vcmp.ne.s32.totalorder %v986, %v1014
        %vm1023 = vcmp.ne.s32.totalorder %v989, %v1014
        %vm1024 = vcmp.ne.s32.totalorder %v992, %v1014
        %vm1025 = vcmp.ne.s32.totalorder %v995, %v1014
        %vm1026 = vcmp.ne.s32.totalorder %v998, %v1014
        %vm1027 = vcmp.ne.s32.totalorder %v1001, %v1014
        %vm1028 = vcmp.ne.s32.totalorder %v1004, %v1014
        %vm1029 = vcmp.ne.s32.totalorder %v1007, %v1014
        %vm1030 = vcmp.ne.s32.totalorder %v1010, %v1014
        %v1031 = vsel %vm312, 1, 0
        %v1032 = vsel %vm313, 1, 0
        %v1033 = vsel %vm314, 1, 0
        %v1034 = vsel %vm315, 1, 0
        %v1035 = vsel %vm316, 1, 0
        %v1036 = vsel %vm317, 1, 0
        %v1037 = vsel %vm318, 1, 0
        %v1038 = vsel %vm319, 1, 0
        %v1039 = vsel %vm320, 1, 0
        %v1040 = vsel %vm321, 1, 0
        %v1041 = vsel %vm322, 1, 0
        %v1042 = vsel %vm323, 1, 0
        %v1043 = vsel %vm324, 1, 0
        %v1044 = vsel %vm325, 1, 0
        %v1045 = vsel %vm326, 1, 0
        %v1046 = vsel %vm327, 1, 0
        %vm1047 = vcmp.eq.s32.totalorder %v1031, 1
        %vm1048 = vcmp.eq.s32.totalorder %v1032, 1
        %vm1049 = vcmp.eq.s32.totalorder %v1033, 1
        %vm1050 = vcmp.eq.s32.totalorder %v1034, 1
        %vm1051 = vcmp.eq.s32.totalorder %v1035, 1
        %vm1052 = vcmp.eq.s32.totalorder %v1036, 1
        %vm1053 = vcmp.eq.s32.totalorder %v1037, 1
        %vm1054 = vcmp.eq.s32.totalorder %v1038, 1
        %vm1055 = vcmp.eq.s32.totalorder %v1039, 1
        %vm1056 = vcmp.eq.s32.totalorder %v1040, 1
        %vm1057 = vcmp.eq.s32.totalorder %v1041, 1
        %vm1058 = vcmp.eq.s32.totalorder %v1042, 1
        %vm1059 = vcmp.eq.s32.totalorder %v1043, 1
        %vm1060 = vcmp.eq.s32.totalorder %v1044, 1
        %vm1061 = vcmp.eq.s32.totalorder %v1045, 1
        %vm1062 = vcmp.eq.s32.totalorder %v1046, 1
        %vm1063 = vmand %vm1015, %vm1047
        %vm1064 = vmand %vm1016, %vm1048
        %vm1065 = vmand %vm1017, %vm1049
        %vm1066 = vmand %vm1018, %vm1050
        %vm1067 = vmand %vm1019, %vm1051
        %vm1068 = vmand %vm1020, %vm1052
        %vm1069 = vmand %vm1021, %vm1053
        %vm1070 = vmand %vm1022, %vm1054
        %vm1071 = vmand %vm1023, %vm1055
        %vm1072 = vmand %vm1024, %vm1056
        %vm1073 = vmand %vm1025, %vm1057
        %vm1074 = vmand %vm1026, %vm1058
        %vm1075 = vmand %vm1027, %vm1059
        %vm1076 = vmand %vm1028, %vm1060
        %vm1077 = vmand %vm1029, %vm1061
        %vm1078 = vmand %vm1030, %vm1062
        %v1079 = vsel %vm1063, %v914, -inf
        %v1080 = vsel %vm1064, %v915, -inf
        %v1081 = vsel %vm1065, %v916, -inf
        %v1082 = vsel %vm1066, %v917, -inf
        %v1083 = vsel %vm1067, %v918, -inf
        %v1084 = vsel %vm1068, %v919, -inf
        %v1085 = vsel %vm1069, %v920, -inf
        %v1086 = vsel %vm1070, %v921, -inf
        %v1087 = vsel %vm1071, %v922, -inf
        %v1088 = vsel %vm1072, %v923, -inf
        %v1089 = vsel %vm1073, %v924, -inf
        %v1090 = vsel %vm1074, %v925, -inf
        %v1091 = vsel %vm1075, %v926, -inf
        %v1092 = vsel %vm1076, %v927, -inf
        %v1093 = vsel %vm1077, %v928, -inf
        %v1094 = vsel %vm1078, %v929, -inf
        %1095 = vst [vmem:[#allocation3] sm:$0xff] %v1079
        %1096 = vst [vmem:[#allocation3 + $0x8] sm:$0xff] %v1080
        %1097 = vst [vmem:[#allocation3 + $0x10] sm:$0xff] %v1081
        %1098 = vst [vmem:[#allocation3 + $0x18] sm:$0xff] %v1082
        %1099 = vst [vmem:[#allocation3 + $0x20] sm:$0xff] %v1083
        %1100 = vst [vmem:[#allocation3 + $0x28] sm:$0xff] %v1084
        %1101 = vst [vmem:[#allocation3 + $0x30] sm:$0xff] %v1085
        %1102 = vst [vmem:[#allocation3 + $0x38] sm:$0xff] %v1086
        %1103 = vst [vmem:[#allocation3 + $0x40] sm:$0xff] %v1087
        %1104 = vst [vmem:[#allocation3 + $0x48] sm:$0xff] %v1088
        %1105 = vst [vmem:[#allocation3 + $0x50] sm:$0xff] %v1089
        %1106 = vst [vmem:[#allocation3 + $0x58] sm:$0xff] %v1090
        %1107 = vst [vmem:[#allocation3 + $0x60] sm:$0xff] %v1091
        %1108 = vst [vmem:[#allocation3 + $0x68] sm:$0xff] %v1092
        %1109 = vst [vmem:[#allocation3 + $0x70] sm:$0xff] %v1093
        %1110 = vst [vmem:[#allocation3 + $0x78] sm:$0xff] %v1094
        %v1111 = vmax.f32 %v1079, %v1083
        %v1112 = vmax.f32 %v1080, %v1084
        %v1113 = vmax.f32 %v1081, %v1085
        %v1114 = vmax.f32 %v1082, %v1086
        %v1115 = vmax.f32 %v1111, %v1087
        %v1116 = vmax.f32 %v1112, %v1088
        %v1117 = vmax.f32 %v1113, %v1089
        %v1118 = vmax.f32 %v1114, %v1090
        %v1119 = vmax.f32 %v1115, %v1091
        %v1120 = vmax.f32 %v1116, %v1092
        %v1121 = vmax.f32 %v1117, %v1093
        %v1122 = vmax.f32 %v1118, %v1094
        %v1123 = vmax.f32 %v1119, %v1120
        %v1124 = vmax.f32 %v1121, %v1122
        %v1125 = vmax.f32 %v1123, %v1124
        %v1126 = vrot.slane %v1125, 4
        %v1127 = vmax.f32 %v1125, %v1126
        %v1128 = vrot.slane %v1127, 2
        %v1129 = vmax.f32 %v1127, %v1128
        %v1130 = vrot.slane %v1129, 1
        %v1131 = vmax.f32 %v1129, %v1130
        %v1132 = vmax.f32 %v1131, 0.0
        %s1133 = smul.u32 %s36, 4
        %s1134 = sld [smem:[#allocation5 + %s1133]]
        %v1135 = vstv %s1134
        %vm1136 = vcmp.eq.s32.totalorder %v946, %v1135
        %v1137 = vstv %s1133
        %vm1138 = vcmp.ne.s32.totalorder %v311, %v1137
        %vm1139 = vmand %vm1136, %vm1138
        %vm1140 = vmand %vm1139, %vm328
        %v1141 = vsel %vm1140, 1, 0
        %v1142 = vcvt.s32.f32 %v1141
        %p1143 = scmp.lt.s32.totalorder %s1133, 8
        %vm1144 = vcmask 1040384
        %v1145 = vsel %vm1144, %v1142, 0.0
        %1146 = vadd.xlane.f32.xlu0 %v1145
        %v1147 = vpop.xlane.xlu0 %1146
        %v1148 = vrot.slane %v1147, 4
        %v1149 = vadd.f32 %v1147, %v1148
        %v1150 = vrot.slane %v1149, 2
        %v1151 = vadd.f32 %v1149, %v1150
        %v1152 = vrot.slane %v1151, 1
        %v1153 = vadd.f32 %v1151, %v1152
        %s1154 = vtos %v1153
        %p1155 = scmp.gt.f32.partialorder %s1154, 0.0
        %p1156 = pnand %p1143, %p1155
        %p1157 = pneg %p1156
        // Predicated region
        $region41: #{tpu_custom_call.1} parent=39 // pred_check
          _
        $region42: #{tpu_custom_call.1} parent=39 // pred_check_branch
          %1159 = sbr.rel (%p1156) target = $region44
        $region43: #{tpu_custom_call.1} parent=39 // pred_region
          %s1160 = scalar_lea.vmem [#allocation2], %s1133
          %v1161 = vld [vmem:[%s1160] sm:$0x1]
          %v1162 = vld [vmem:[#allocation3] sm:$0xff]
          %v1163 = vld [vmem:[#allocation3 + $0x8] sm:$0xff]
          %v1164 = vld [vmem:[#allocation3 + $0x10] sm:$0xff]
          %v1165 = vld [vmem:[#allocation3 + $0x18] sm:$0xff]
          %v1166 = vld [vmem:[#allocation3 + $0x20] sm:$0xff]
          %v1167 = vld [vmem:[#allocation3 + $0x28] sm:$0xff]
          %v1168 = vld [vmem:[#allocation3 + $0x30] sm:$0xff]
          %v1169 = vld [vmem:[#allocation3 + $0x38] sm:$0xff]
          %v1170 = vld [vmem:[#allocation3 + $0x40] sm:$0xff]
          %v1171 = vld [vmem:[#allocation3 + $0x48] sm:$0xff]
          %v1172 = vld [vmem:[#allocation3 + $0x50] sm:$0xff]
          %v1173 = vld [vmem:[#allocation3 + $0x58] sm:$0xff]
          %v1174 = vld [vmem:[#allocation3 + $0x60] sm:$0xff]
          %v1175 = vld [vmem:[#allocation3 + $0x68] sm:$0xff]
          %v1176 = vld [vmem:[#allocation3 + $0x70] sm:$0xff]
          %v1177 = vld [vmem:[#allocation3 + $0x78] sm:$0xff]
          %v1178 = vlaneseq
          %v1179 = vshrl.u32 %v1178, 7
          %v1180 = vsub.s32 0, %v1179
          %v1181 = vrot.slane %v1161, %v1180
          %vm1182 = vcmp.gt.f32.partialorder %v1162, %v1181
          %vm1183 = vcmp.gt.f32.partialorder %v1163, %v1181
          %vm1184 = vcmp.gt.f32.partialorder %v1164, %v1181
          %vm1185 = vcmp.gt.f32.partialorder %v1165, %v1181
          %vm1186 = vcmp.gt.f32.partialorder %v1166, %v1181
          %vm1187 = vcmp.gt.f32.partialorder %v1167, %v1181
          %vm1188 = vcmp.gt.f32.partialorder %v1168, %v1181
          %vm1189 = vcmp.gt.f32.partialorder %v1169, %v1181
          %vm1190 = vcmp.gt.f32.partialorder %v1170, %v1181
          %vm1191 = vcmp.gt.f32.partialorder %v1171, %v1181
          %vm1192 = vcmp.gt.f32.partialorder %v1172, %v1181
          %vm1193 = vcmp.gt.f32.partialorder %v1173, %v1181
          %vm1194 = vcmp.gt.f32.partialorder %v1174, %v1181
          %vm1195 = vcmp.gt.f32.partialorder %v1175, %v1181
          %vm1196 = vcmp.gt.f32.partialorder %v1176, %v1181
          %vm1197 = vcmp.gt.f32.partialorder %v1177, %v1181
          %v1198 = vsel %vm1182, %v1162, inf
          %v1199 = vsel %vm1183, %v1163, inf
          %v1200 = vsel %vm1184, %v1164, inf
          %v1201 = vsel %vm1185, %v1165, inf
          %v1202 = vsel %vm1186, %v1166, inf
          %v1203 = vsel %vm1187, %v1167, inf
          %v1204 = vsel %vm1188, %v1168, inf
          %v1205 = vsel %vm1189, %v1169, inf
          %v1206 = vsel %vm1190, %v1170, inf
          %v1207 = vsel %vm1191, %v1171, inf
          %v1208 = vsel %vm1192, %v1172, inf
          %v1209 = vsel %vm1193, %v1173, inf
          %v1210 = vsel %vm1194, %v1174, inf
          %v1211 = vsel %vm1195, %v1175, inf
          %v1212 = vsel %vm1196, %v1176, inf
          %v1213 = vsel %vm1197, %v1177, inf
          %v1214 = vmin.f32 %v1198, %v1202
          %v1215 = vmin.f32 %v1199, %v1203
          %v1216 = vmin.f32 %v1200, %v1204
          %v1217 = vmin.f32 %v1201, %v1205
          %v1218 = vmin.f32 %v1214, %v1206
          %v1219 = vmin.f32 %v1215, %v1207
          %v1220 = vmin.f32 %v1216, %v1208
          %v1221 = vmin.f32 %v1217, %v1209
          %v1222 = vmin.f32 %v1218, %v1210
          %v1223 = vmin.f32 %v1219, %v1211
          %v1224 = vmin.f32 %v1220, %v1212
          %v1225 = vmin.f32 %v1221, %v1213
          %v1226 = vmin.f32 %v1222, %v1223
          %v1227 = vmin.f32 %v1224, %v1225
          %v1228 = vmin.f32 %v1226, %v1227
          %v1229 = vrot.slane %v1228, 4
          %v1230 = vmin.f32 %v1228, %v1229
          %v1231 = vrot.slane %v1230, 2
          %v1232 = vmin.f32 %v1230, %v1231
          %v1233 = vrot.slane %v1232, 1
          %v1234 = vmin.f32 %v1232, %v1233
          %vm1235 = vcmp.lt.f32.partialorder %v1234, inf
          %v1236 = vsel %vm1235, %v1234, %v1132
          %v1237 = vsub.f32 %v1161, %v1236
          %v1238 = vadd.f32 %v1237, 5.0
          %v1239 = vmul.f32 %v1238, %v1142
          %v1240 = vmax.f32 %v1239, 0.0
          %v1241 = vadd.f32 %v1240, 0.0
          %v1242 = vadd.f32 %v1142, 0.0
        $region44: #{tpu_custom_call.1} parent=39 // pred_fallthru
          %v1243 = vphi 0, %v1241
          %v1244 = vphi 0, %v1242
        // Predicated region
        $region45: #{tpu_custom_call.1} parent=39 // pred_check
          %p1245 = pneg %p1156
        $region46: #{tpu_custom_call.1} parent=39 // pred_check_branch
          %1247 = sbr.rel (%p1245) target = $region48
        $region47: #{tpu_custom_call.1} parent=39 // pred_region
          _
        $region48: #{tpu_custom_call.1} parent=39 // pred_fallthru
          %v1248 = vphi %v1243, 0.0
          %v1249 = vphi %v1244, 0.0
        %s1250 = sadd.s32 %s1133, 1
        %s1251 = sld [smem:[#allocation5 + %s1250]]
        %v1252 = vstv %s1251
        %vm1253 = vcmp.eq.s32.totalorder %v946, %v1252
        %v1254 = vstv %s1250
        %vm1255 = vcmp.ne.s32.totalorder %v311, %v1254
        %vm1256 = vmand %vm1253, %vm1255
        %vm1257 = vmand %vm1256, %vm328
        %v1258 = vsel %vm1257, 1, 0
        %v1259 = vcvt.s32.f32 %v1258
        %p1260 = scmp.lt.s32.totalorder %s1250, 8
        %v1261 = vsel %vm1144, %v1259, 0.0
        %1262 = vadd.xlane.f32.xlu0 %v1261
        %v1263 = vpop.xlane.xlu0 %1262
        %v1264 = vrot.slane %v1263, 4
        %v1265 = vadd.f32 %v1263, %v1264
        %v1266 = vrot.slane %v1265, 2
        %v1267 = vadd.f32 %v1265, %v1266
        %v1268 = vrot.slane %v1267, 1
        %v1269 = vadd.f32 %v1267, %v1268
        %s1270 = vtos %v1269
        %p1271 = scmp.gt.f32.partialorder %s1270, 0.0
        %p1272 = pnand %p1260, %p1271
        %p1273 = pneg %p1272
        // Predicated region
        $region49: #{tpu_custom_call.1} parent=39 // pred_check
          _
        $region50: #{tpu_custom_call.1} parent=39 // pred_check_branch
          %1275 = sbr.rel (%p1272) target = $region52
        $region51: #{tpu_custom_call.1} parent=39 // pred_region
          %s1276 = scalar_lea.vmem [#allocation2], %s1250
          %v1277 = vld [vmem:[%s1276] sm:$0x1]
          %v1278 = vld [vmem:[#allocation3] sm:$0xff]
          %v1279 = vld [vmem:[#allocation3 + $0x8] sm:$0xff]
          %v1280 = vld [vmem:[#allocation3 + $0x10] sm:$0xff]
          %v1281 = vld [vmem:[#allocation3 + $0x18] sm:$0xff]
          %v1282 = vld [vmem:[#allocation3 + $0x20] sm:$0xff]
          %v1283 = vld [vmem:[#allocation3 + $0x28] sm:$0xff]
          %v1284 = vld [vmem:[#allocation3 + $0x30] sm:$0xff]
          %v1285 = vld [vmem:[#allocation3 + $0x38] sm:$0xff]
          %v1286 = vld [vmem:[#allocation3 + $0x40] sm:$0xff]
          %v1287 = vld [vmem:[#allocation3 + $0x48] sm:$0xff]
          %v1288 = vld [vmem:[#allocation3 + $0x50] sm:$0xff]
          %v1289 = vld [vmem:[#allocation3 + $0x58] sm:$0xff]
          %v1290 = vld [vmem:[#allocation3 + $0x60] sm:$0xff]
          %v1291 = vld [vmem:[#allocation3 + $0x68] sm:$0xff]
          %v1292 = vld [vmem:[#allocation3 + $0x70] sm:$0xff]
          %v1293 = vld [vmem:[#allocation3 + $0x78] sm:$0xff]
          %v1294 = vlaneseq
          %v1295 = vshrl.u32 %v1294, 7
          %v1296 = vsub.s32 0, %v1295
          %v1297 = vrot.slane %v1277, %v1296
          %vm1298 = vcmp.gt.f32.partialorder %v1278, %v1297
          %vm1299 = vcmp.gt.f32.partialorder %v1279, %v1297
          %vm1300 = vcmp.gt.f32.partialorder %v1280, %v1297
          %vm1301 = vcmp.gt.f32.partialorder %v1281, %v1297
          %vm1302 = vcmp.gt.f32.partialorder %v1282, %v1297
          %vm1303 = vcmp.gt.f32.partialorder %v1283, %v1297
          %vm1304 = vcmp.gt.f32.partialorder %v1284, %v1297
          %vm1305 = vcmp.gt.f32.partialorder %v1285, %v1297
          %vm1306 = vcmp.gt.f32.partialorder %v1286, %v1297
          %vm1307 = vcmp.gt.f32.partialorder %v1287, %v1297
          %vm1308 = vcmp.gt.f32.partialorder %v1288, %v1297
          %vm1309 = vcmp.gt.f32.partialorder %v1289, %v1297
          %vm1310 = vcmp.gt.f32.partialorder %v1290, %v1297
          %vm1311 = vcmp.gt.f32.partialorder %v1291, %v1297
          %vm1312 = vcmp.gt.f32.partialorder %v1292, %v1297
          %vm1313 = vcmp.gt.f32.partialorder %v1293, %v1297
          %v1314 = vsel %vm1298, %v1278, inf
          %v1315 = vsel %vm1299, %v1279, inf
          %v1316 = vsel %vm1300, %v1280, inf
          %v1317 = vsel %vm1301, %v1281, inf
          %v1318 = vsel %vm1302, %v1282, inf
          %v1319 = vsel %vm1303, %v1283, inf
          %v1320 = vsel %vm1304, %v1284, inf
          %v1321 = vsel %vm1305, %v1285, inf
          %v1322 = vsel %vm1306, %v1286, inf
          %v1323 = vsel %vm1307, %v1287, inf
          %v1324 = vsel %vm1308, %v1288, inf
          %v1325 = vsel %vm1309, %v1289, inf
          %v1326 = vsel %vm1310, %v1290, inf
          %v1327 = vsel %vm1311, %v1291, inf
          %v1328 = vsel %vm1312, %v1292, inf
          %v1329 = vsel %vm1313, %v1293, inf
          %v1330 = vmin.f32 %v1314, %v1318
          %v1331 = vmin.f32 %v1315, %v1319
          %v1332 = vmin.f32 %v1316, %v1320
          %v1333 = vmin.f32 %v1317, %v1321
          %v1334 = vmin.f32 %v1330, %v1322
          %v1335 = vmin.f32 %v1331, %v1323
          %v1336 = vmin.f32 %v1332, %v1324
          %v1337 = vmin.f32 %v1333, %v1325
          %v1338 = vmin.f32 %v1334, %v1326
          %v1339 = vmin.f32 %v1335, %v1327
          %v1340 = vmin.f32 %v1336, %v1328
          %v1341 = vmin.f32 %v1337, %v1329
          %v1342 = vmin.f32 %v1338, %v1339
          %v1343 = vmin.f32 %v1340, %v1341
          %v1344 = vmin.f32 %v1342, %v1343
          %v1345 = vrot.slane %v1344, 4
          %v1346 = vmin.f32 %v1344, %v1345
          %v1347 = vrot.slane %v1346, 2
          %v1348 = vmin.f32 %v1346, %v1347
          %v1349 = vrot.slane %v1348, 1
          %v1350 = vmin.f32 %v1348, %v1349
          %vm1351 = vcmp.lt.f32.partialorder %v1350, inf
          %v1352 = vsel %vm1351, %v1350, %v1132
          %v1353 = vsub.f32 %v1277, %v1352
          %v1354 = vadd.f32 %v1353, 5.0
          %v1355 = vmul.f32 %v1354, %v1259
          %v1356 = vmax.f32 %v1355, 0.0
          %v1357 = vadd.f32 %v1248, %v1356
          %v1358 = vadd.f32 %v1249, %v1259
        $region52: #{tpu_custom_call.1} parent=39 // pred_fallthru
          %v1359 = vphi 0, %v1357
          %v1360 = vphi 0, %v1358
        // Predicated region
        $region53: #{tpu_custom_call.1} parent=39 // pred_check
          %p1361 = pneg %p1272
        $region54: #{tpu_custom_call.1} parent=39 // pred_check_branch
          %1363 = sbr.rel (%p1361) target = $region56
        $region55: #{tpu_custom_call.1} parent=39 // pred_region
          _
        $region56: #{tpu_custom_call.1} parent=39 // pred_fallthru
          %v1364 = vphi %v1359, %v1248
          %v1365 = vphi %v1360, %v1249
        %s1366 = sadd.s32 %s1133, 2
        %s1367 = sld [smem:[#allocation5 + %s1366]]
        %v1368 = vstv %s1367
        %vm1369 = vcmp.eq.s32.totalorder %v946, %v1368
        %v1370 = vstv %s1366
        %vm1371 = vcmp.ne.s32.totalorder %v311, %v1370
        %vm1372 = vmand %vm1369, %vm1371
        %vm1373 = vmand %vm1372, %vm328
        %v1374 = vsel %vm1373, 1, 0
        %v1375 = vcvt.s32.f32 %v1374
        %p1376 = scmp.lt.s32.totalorder %s1366, 8
        %v1377 = vsel %vm1144, %v1375, 0.0
        %1378 = vadd.xlane.f32.xlu0 %v1377
        %v1379 = vpop.xlane.xlu0 %1378
        %v1380 = vrot.slane %v1379, 4
        %v1381 = vadd.f32 %v1379, %v1380
        %v1382 = vrot.slane %v1381, 2
        %v1383 = vadd.f32 %v1381, %v1382
        %v1384 = vrot.slane %v1383, 1
        %v1385 = vadd.f32 %v1383, %v1384
        %s1386 = vtos %v1385
        %p1387 = scmp.gt.f32.partialorder %s1386, 0.0
        %p1388 = pnand %p1376, %p1387
        %p1389 = pneg %p1388
        // Predicated region
        $region57: #{tpu_custom_call.1} parent=39 // pred_check
          _
        $region58: #{tpu_custom_call.1} parent=39 // pred_check_branch
          %1391 = sbr.rel (%p1388) target = $region60
        $region59: #{tpu_custom_call.1} parent=39 // pred_region
          %s1392 = scalar_lea.vmem [#allocation2], %s1366
          %v1393 = vld [vmem:[%s1392] sm:$0x1]
          %v1394 = vld [vmem:[#allocation3] sm:$0xff]
          %v1395 = vld [vmem:[#allocation3 + $0x8] sm:$0xff]
          %v1396 = vld [vmem:[#allocation3 + $0x10] sm:$0xff]
          %v1397 = vld [vmem:[#allocation3 + $0x18] sm:$0xff]
          %v1398 = vld [vmem:[#allocation3 + $0x20] sm:$0xff]
          %v1399 = vld [vmem:[#allocation3 + $0x28] sm:$0xff]
          %v1400 = vld [vmem:[#allocation3 + $0x30] sm:$0xff]
          %v1401 = vld [vmem:[#allocation3 + $0x38] sm:$0xff]
          %v1402 = vld [vmem:[#allocation3 + $0x40] sm:$0xff]
          %v1403 = vld [vmem:[#allocation3 + $0x48] sm:$0xff]
          %v1404 = vld [vmem:[#allocation3 + $0x50] sm:$0xff]
          %v1405 = vld [vmem:[#allocation3 + $0x58] sm:$0xff]
          %v1406 = vld [vmem:[#allocation3 + $0x60] sm:$0xff]
          %v1407 = vld [vmem:[#allocation3 + $0x68] sm:$0xff]
          %v1408 = vld [vmem:[#allocation3 + $0x70] sm:$0xff]
          %v1409 = vld [vmem:[#allocation3 + $0x78] sm:$0xff]
          %v1410 = vlaneseq
          %v1411 = vshrl.u32 %v1410, 7
          %v1412 = vsub.s32 0, %v1411
          %v1413 = vrot.slane %v1393, %v1412
          %vm1414 = vcmp.gt.f32.partialorder %v1394, %v1413
          %vm1415 = vcmp.gt.f32.partialorder %v1395, %v1413
          %vm1416 = vcmp.gt.f32.partialorder %v1396, %v1413
          %vm1417 = vcmp.gt.f32.partialorder %v1397, %v1413
          %vm1418 = vcmp.gt.f32.partialorder %v1398, %v1413
          %vm1419 = vcmp.gt.f32.partialorder %v1399, %v1413
          %vm1420 = vcmp.gt.f32.partialorder %v1400, %v1413
          %vm1421 = vcmp.gt.f32.partialorder %v1401, %v1413
          %vm1422 = vcmp.gt.f32.partialorder %v1402, %v1413
          %vm1423 = vcmp.gt.f32.partialorder %v1403, %v1413
          %vm1424 = vcmp.gt.f32.partialorder %v1404, %v1413
          %vm1425 = vcmp.gt.f32.partialorder %v1405, %v1413
          %vm1426 = vcmp.gt.f32.partialorder %v1406, %v1413
          %vm1427 = vcmp.gt.f32.partialorder %v1407, %v1413
          %vm1428 = vcmp.gt.f32.partialorder %v1408, %v1413
          %vm1429 = vcmp.gt.f32.partialorder %v1409, %v1413
          %v1430 = vsel %vm1414, %v1394, inf
          %v1431 = vsel %vm1415, %v1395, inf
          %v1432 = vsel %vm1416, %v1396, inf
          %v1433 = vsel %vm1417, %v1397, inf
          %v1434 = vsel %vm1418, %v1398, inf
          %v1435 = vsel %vm1419, %v1399, inf
          %v1436 = vsel %vm1420, %v1400, inf
          %v1437 = vsel %vm1421, %v1401, inf
          %v1438 = vsel %vm1422, %v1402, inf
          %v1439 = vsel %vm1423, %v1403, inf
          %v1440 = vsel %vm1424, %v1404, inf
          %v1441 = vsel %vm1425, %v1405, inf
          %v1442 = vsel %vm1426, %v1406, inf
          %v1443 = vsel %vm1427, %v1407, inf
          %v1444 = vsel %vm1428, %v1408, inf
          %v1445 = vsel %vm1429, %v1409, inf
          %v1446 = vmin.f32 %v1430, %v1434
          %v1447 = vmin.f32 %v1431, %v1435
          %v1448 = vmin.f32 %v1432, %v1436
          %v1449 = vmin.f32 %v1433, %v1437
          %v1450 = vmin.f32 %v1446, %v1438
          %v1451 = vmin.f32 %v1447, %v1439
          %v1452 = vmin.f32 %v1448, %v1440
          %v1453 = vmin.f32 %v1449, %v1441
          %v1454 = vmin.f32 %v1450, %v1442
          %v1455 = vmin.f32 %v1451, %v1443
          %v1456 = vmin.f32 %v1452, %v1444
          %v1457 = vmin.f32 %v1453, %v1445
          %v1458 = vmin.f32 %v1454, %v1455
          %v1459 = vmin.f32 %v1456, %v1457
          %v1460 = vmin.f32 %v1458, %v1459
          %v1461 = vrot.slane %v1460, 4
          %v1462 = vmin.f32 %v1460, %v1461
          %v1463 = vrot.slane %v1462, 2
          %v1464 = vmin.f32 %v1462, %v1463
          %v1465 = vrot.slane %v1464, 1
          %v1466 = vmin.f32 %v1464, %v1465
          %vm1467 = vcmp.lt.f32.partialorder %v1466, inf
          %v1468 = vsel %vm1467, %v1466, %v1132
          %v1469 = vsub.f32 %v1393, %v1468
          %v1470 = vadd.f32 %v1469, 5.0
          %v1471 = vmul.f32 %v1470, %v1375
          %v1472 = vmax.f32 %v1471, 0.0
          %v1473 = vadd.f32 %v1364, %v1472
          %v1474 = vadd.f32 %v1365, %v1375
        $region60: #{tpu_custom_call.1} parent=39 // pred_fallthru
          %v1475 = vphi 0, %v1473
          %v1476 = vphi 0, %v1474
        // Predicated region
        $region61: #{tpu_custom_call.1} parent=39 // pred_check
          %p1477 = pneg %p1388
        $region62: #{tpu_custom_call.1} parent=39 // pred_check_branch
          %1479 = sbr.rel (%p1477) target = $region64
        $region63: #{tpu_custom_call.1} parent=39 // pred_region
          _
        $region64: #{tpu_custom_call.1} parent=39 // pred_fallthru
          %v1480 = vphi %v1475, %v1364
          %v1481 = vphi %v1476, %v1365
        %s1482 = sadd.s32 %s1133, 3
        %s1483 = sld [smem:[#allocation5 + %s1482]]
        %v1484 = vstv %s1483
        %vm1485 = vcmp.eq.s32.totalorder %v946, %v1484
        %v1486 = vstv %s1482
        %vm1487 = vcmp.ne.s32.totalorder %v311, %v1486
        %vm1488 = vmand %vm1485, %vm1487
        %vm1489 = vmand %vm1488, %vm328
        %v1490 = vsel %vm1489, 1, 0
        %v1491 = vcvt.s32.f32 %v1490
        %p1492 = scmp.lt.s32.totalorder %s1482, 8
        %v1493 = vsel %vm1144, %v1491, 0.0
        %1494 = vadd.xlane.f32.xlu0 %v1493
        %v1495 = vpop.xlane.xlu0 %1494
        %v1496 = vrot.slane %v1495, 4
        %v1497 = vadd.f32 %v1495, %v1496
        %v1498 = vrot.slane %v1497, 2
        %v1499 = vadd.f32 %v1497, %v1498
        %v1500 = vrot.slane %v1499, 1
        %v1501 = vadd.f32 %v1499, %v1500
        %s1502 = vtos %v1501
        %p1503 = scmp.gt.f32.partialorder %s1502, 0.0
        %p1504 = pnand %p1492, %p1503
        %p1505 = pneg %p1504
        // Predicated region
        $region65: #{tpu_custom_call.1} parent=39 // pred_check
          _
        $region66: #{tpu_custom_call.1} parent=39 // pred_check_branch
          %1507 = sbr.rel (%p1504) target = $region68
        $region67: #{tpu_custom_call.1} parent=39 // pred_region
          %s1508 = scalar_lea.vmem [#allocation2], %s1482
          %v1509 = vld [vmem:[%s1508] sm:$0x1]
          %v1510 = vld [vmem:[#allocation3] sm:$0xff]
          %v1511 = vld [vmem:[#allocation3 + $0x8] sm:$0xff]
          %v1512 = vld [vmem:[#allocation3 + $0x10] sm:$0xff]
          %v1513 = vld [vmem:[#allocation3 + $0x18] sm:$0xff]
          %v1514 = vld [vmem:[#allocation3 + $0x20] sm:$0xff]
          %v1515 = vld [vmem:[#allocation3 + $0x28] sm:$0xff]
          %v1516 = vld [vmem:[#allocation3 + $0x30] sm:$0xff]
          %v1517 = vld [vmem:[#allocation3 + $0x38] sm:$0xff]
          %v1518 = vld [vmem:[#allocation3 + $0x40] sm:$0xff]
          %v1519 = vld [vmem:[#allocation3 + $0x48] sm:$0xff]
          %v1520 = vld [vmem:[#allocation3 + $0x50] sm:$0xff]
          %v1521 = vld [vmem:[#allocation3 + $0x58] sm:$0xff]
          %v1522 = vld [vmem:[#allocation3 + $0x60] sm:$0xff]
          %v1523 = vld [vmem:[#allocation3 + $0x68] sm:$0xff]
          %v1524 = vld [vmem:[#allocation3 + $0x70] sm:$0xff]
          %v1525 = vld [vmem:[#allocation3 + $0x78] sm:$0xff]
          %v1526 = vlaneseq
          %v1527 = vshrl.u32 %v1526, 7
          %v1528 = vsub.s32 0, %v1527
          %v1529 = vrot.slane %v1509, %v1528
          %vm1530 = vcmp.gt.f32.partialorder %v1510, %v1529
          %vm1531 = vcmp.gt.f32.partialorder %v1511, %v1529
          %vm1532 = vcmp.gt.f32.partialorder %v1512, %v1529
          %vm1533 = vcmp.gt.f32.partialorder %v1513, %v1529
          %vm1534 = vcmp.gt.f32.partialorder %v1514, %v1529
          %vm1535 = vcmp.gt.f32.partialorder %v1515, %v1529
          %vm1536 = vcmp.gt.f32.partialorder %v1516, %v1529
          %vm1537 = vcmp.gt.f32.partialorder %v1517, %v1529
          %vm1538 = vcmp.gt.f32.partialorder %v1518, %v1529
          %vm1539 = vcmp.gt.f32.partialorder %v1519, %v1529
          %vm1540 = vcmp.gt.f32.partialorder %v1520, %v1529
          %vm1541 = vcmp.gt.f32.partialorder %v1521, %v1529
          %vm1542 = vcmp.gt.f32.partialorder %v1522, %v1529
          %vm1543 = vcmp.gt.f32.partialorder %v1523, %v1529
          %vm1544 = vcmp.gt.f32.partialorder %v1524, %v1529
          %vm1545 = vcmp.gt.f32.partialorder %v1525, %v1529
          %v1546 = vsel %vm1530, %v1510, inf
          %v1547 = vsel %vm1531, %v1511, inf
          %v1548 = vsel %vm1532, %v1512, inf
          %v1549 = vsel %vm1533, %v1513, inf
          %v1550 = vsel %vm1534, %v1514, inf
          %v1551 = vsel %vm1535, %v1515, inf
          %v1552 = vsel %vm1536, %v1516, inf
          %v1553 = vsel %vm1537, %v1517, inf
          %v1554 = vsel %vm1538, %v1518, inf
          %v1555 = vsel %vm1539, %v1519, inf
          %v1556 = vsel %vm1540, %v1520, inf
          %v1557 = vsel %vm1541, %v1521, inf
          %v1558 = vsel %vm1542, %v1522, inf
          %v1559 = vsel %vm1543, %v1523, inf
          %v1560 = vsel %vm1544, %v1524, inf
          %v1561 = vsel %vm1545, %v1525, inf
          %v1562 = vmin.f32 %v1546, %v1550
          %v1563 = vmin.f32 %v1547, %v1551
          %v1564 = vmin.f32 %v1548, %v1552
          %v1565 = vmin.f32 %v1549, %v1553
          %v1566 = vmin.f32 %v1562, %v1554
          %v1567 = vmin.f32 %v1563, %v1555
          %v1568 = vmin.f32 %v1564, %v1556
          %v1569 = vmin.f32 %v1565, %v1557
          %v1570 = vmin.f32 %v1566, %v1558
          %v1571 = vmin.f32 %v1567, %v1559
          %v1572 = vmin.f32 %v1568, %v1560
          %v1573 = vmin.f32 %v1569, %v1561
          %v1574 = vmin.f32 %v1570, %v1571
          %v1575 = vmin.f32 %v1572, %v1573
          %v1576 = vmin.f32 %v1574, %v1575
          %v1577 = vrot.slane %v1576, 4
          %v1578 = vmin.f32 %v1576, %v1577
          %v1579 = vrot.slane %v1578, 2
          %v1580 = vmin.f32 %v1578, %v1579
          %v1581 = vrot.slane %v1580, 1
          %v1582 = vmin.f32 %v1580, %v1581
          %vm1583 = vcmp.lt.f32.partialorder %v1582, inf
          %v1584 = vsel %vm1583, %v1582, %v1132
          %v1585 = vsub.f32 %v1509, %v1584
          %v1586 = vadd.f32 %v1585, 5.0
          %v1587 = vmul.f32 %v1586, %v1491
          %v1588 = vmax.f32 %v1587, 0.0
          %v1589 = vadd.f32 %v1480, %v1588
          %v1590 = vadd.f32 %v1481, %v1491
        $region68: #{tpu_custom_call.1} parent=39 // pred_fallthru
          %v1591 = vphi 0, %v1589
          %v1592 = vphi 0, %v1590
        // Predicated region
        $region69: #{tpu_custom_call.1} parent=39 // pred_check
          %p1593 = pneg %p1504
        $region70: #{tpu_custom_call.1} parent=39 // pred_check_branch
          %1595 = sbr.rel (%p1593) target = $region72
        $region71: #{tpu_custom_call.1} parent=39 // pred_region
          _
        $region72: #{tpu_custom_call.1} parent=39 // pred_fallthru
          %v1596 = vphi %v1591, %v1480
          %v1597 = vphi %v1592, %v1481
        %1598 = vst [vmem:[%s277] sm:$0x1] %v1596
        %1599 = vst [vmem:[%s283] sm:$0x1] %v1597
        %s1600 = sand.u32 %s168, 1
        %s1601 = scalar_lea.sflag [#allocation7], %s1600
        %s1602 = sand.u32 %s168, 1
        %s1603 = scalar_lea.vmem [#allocation6], %s1602
        %s1604 = sand.u32 %s196, 1
        %s1605 = scalar_lea.sflag [#allocation9], %s1604
        %s1606 = sand.u32 %s196, 1
        %s1607 = scalar_lea.vmem [#allocation8], %s1606
        // Predicated region
        $region73: #{tpu_custom_call.1} parent=39 // pred_check
          %p1608 = pneg %p178
        $region74: #{tpu_custom_call.1} parent=39 // pred_check_branch
          %1610 = sbr.rel (%p1608) target = $region76
        $region75: #{tpu_custom_call.1} parent=39 // pred_region
          %s1612 = ssub.s32 16, 16
          %1613 = vsyncadd %s1601, %s1612
          %s1614 = sadd.s32 %s35, %s36
          %s1615 = smul.addr %s1614, 16
          %s1616 = scalar_lea.hbm %s6, %s1615
          %s1618 = sshll.u32 %s1603, 4
          %s1619 = int_to_ptr.vmem [resolvable:$true] %s1618
          %1621 = dma.vmem_to_hbm [thread:$0]  %s1619, 16, %s1616, %s1601
        $region76: #{tpu_custom_call.1} parent=39 // pred_fallthru
          _
        // Predicated region
        $region77: #{tpu_custom_call.1} parent=39 // pred_check
          %p1622 = pneg %p206
        $region78: #{tpu_custom_call.1} parent=39 // pred_check_branch
          %1624 = sbr.rel (%p1622) target = $region80
        $region79: #{tpu_custom_call.1} parent=39 // pred_region
          %s1626 = ssub.s32 16, 16
          %1627 = vsyncadd %s1605, %s1626
          %s1628 = sadd.s32 %s35, %s36
          %s1629 = smul.addr %s1628, 16
          %s1630 = scalar_lea.hbm %s7, %s1629
          %s1632 = sshll.u32 %s1607, 4
          %s1633 = int_to_ptr.vmem [resolvable:$true] %s1632
          %1635 = dma.vmem_to_hbm [thread:$0]  %s1633, 16, %s1630, %s1605
        $region80: #{tpu_custom_call.1} parent=39 // pred_fallthru
          _
      $region40: #{tpu_custom_call.1} parent=5 // pred_fallthru
        _
      %p1636 = scmp.le.s32.totalorder 2, %s26
      // Predicated region
      $region81: #{tpu_custom_call.1} parent=5 // pred_check
        %p1637 = pneg %p1636
      $region82: #{tpu_custom_call.1} parent=5 // pred_check_branch
        %1639 = sbr.rel (%p1637) target = $region84
      $region83: #{tpu_custom_call.1} parent=5 // pred_region
        %s1640 = ssub.s32 %s26, 2
        // Predicated region
        $region85: #{tpu_custom_call.1} parent=83 // pred_check
          %p1641 = pneg %p184
        $region86: #{tpu_custom_call.1} parent=83 // pred_check_branch
          %1643 = sbr.rel (%p1641) target = $region88
        $region87: #{tpu_custom_call.1} parent=83 // pred_region
          %s1644 = sand.u32 %s169, 1
          %s1645 = scalar_lea.sflag [#allocation7], %s1644
          %s1646 = sand.u32 %s169, 1
          %s1647 = scalar_lea.vmem [#allocation6], %s1646
          %1648 = dma.done %s1645, 16
        $region88: #{tpu_custom_call.1} parent=83 // pred_fallthru
          _
        // Predicated region
        $region89: #{tpu_custom_call.1} parent=83 // pred_check
          %p1649 = pneg %p212
        $region90: #{tpu_custom_call.1} parent=83 // pred_check_branch
          %1651 = sbr.rel (%p1649) target = $region92
        $region91: #{tpu_custom_call.1} parent=83 // pred_region
          %s1652 = sand.u32 %s197, 1
          %s1653 = scalar_lea.sflag [#allocation9], %s1652
          %s1654 = sand.u32 %s197, 1
          %s1655 = scalar_lea.vmem [#allocation8], %s1654
          %1656 = dma.done %s1653, 16
        $region92: #{tpu_custom_call.1} parent=83 // pred_fallthru
          _
      $region84: #{tpu_custom_call.1} parent=5 // pred_fallthru
        _
    $region6: #{tpu_custom_call.1} parent=1 // loop_footer
      %s30 = sadd.s32 1, %s26
    $region7: #{tpu_custom_call.1} parent=1 // loop_footer_branch
      %25 = sbr.rel target = $region3
    $region8: #{tpu_custom_call.1} parent=1 // loop_exit
      _
    %1657 = vsyncpa [#allocation7], 1
    %s1658 = scalar_lea.sflag [#allocation7], 1
    %1659 = vsyncpa %s1658, 1
    %1660 = vsyncpa [#allocation9], 1
    %s1661 = scalar_lea.sflag [#allocation9], 1
    %1662 = vsyncpa %s1661, 1

</llo_original>
